<compile_context>
chip_gen: v7x
topology: tpu7x:2x2x1
jax: 0.10.0
libtpu: 0.0.40
codegen_flags: <defaults>
</compile_context>

<pallas_src>
import numpy as np

import jax
import jax.numpy as jnp
from jax.experimental import pallas as pl
from jax.experimental.pallas import tpu as pltpu

LANE = 128
KH = 3          # conv kernel height (= number of row taps)
D2 = 256        # coupling split size (latent = 512)


# -----------------------------------------------------------------------------
# Fused per-image kernel: encoder -> flow -> decoder (one grid step = one image)
# -----------------------------------------------------------------------------
def _ae_flow_kernel(x_ref, s_ref, m_ref, b_ref, fw1_ref, fw2_ref,
                    rec_ref, zhat_ref, jaz_ref):
    f32, bf16 = jnp.float32, jnp.bfloat16
    n_blocks = fw1_ref.shape[0]

    def conv(x, idx, oh):
        # out = sum_di S[idx,di] @ (x @ Mcat[idx])[:, di*128:(di+1)*128] + bias
        # (zero padding + nearest-2x upsample are folded into S / Mcat at init)
        h_in, k_in = x.shape
        mcat = m_ref[idx, :k_in, :]                                   # (k_in, 3*128) bf16
        y = jnp.dot(x.astype(bf16), mcat, preferred_element_type=f32)  # (h_in, 384) f32
        yb = y.astype(bf16)
        acc = jnp.zeros((oh, LANE), f32)
        for di in range(KH):
            s = s_ref[idx, di, :oh, :h_in]                             # (oh, h_in) bf16 0/1
            acc = acc + jnp.dot(s, yb[:, di * LANE:(di + 1) * LANE],
                                preferred_element_type=f32)
        return acc + b_ref[idx:idx + 1, :LANE]                         # bias row broadcast

    # ------------------------------- encoder --------------------------------
    x = x_ref[0]                                                       # (16, 64) f32
    h1 = jnp.maximum(conv(x, 0, 8), 0.0)                               # (8, 128)
    z2d = conv(h1, 1, 4)                                               # (4, 128) latent rows

    # latent image rows -> flat vector: a single relayout reshape
    z = z2d.reshape(1, 4 * LANE)                                       # (1, 512)
    z1, z2 = z[:, :D2], z[:, D2:]                                      # 128-aligned: free

    # --------------------------- normalizing flow ---------------------------
    jaz = jnp.zeros((1, 1), f32)
    for blk in range(n_blocks):
        h = jnp.dot(z1.astype(bf16), fw1_ref[blk], preferred_element_type=f32)
        h = jnp.maximum(h + b_ref[4 + blk:5 + blk, :LANE], 0.0)        # (1, 128)
        st = jnp.dot(h.astype(bf16), fw2_ref[blk], preferred_element_type=f32)
        st = st + b_ref[4 + n_blocks + blk:5 + n_blocks + blk, :]      # (1, 512)
        s = jnp.tanh(st[:, :D2])
        t = st[:, D2:]
        z2_new = z2 * jnp.exp(s) + t
        jaz = jaz + jnp.sum(s, axis=-1, keepdims=True)
        z1, z2 = z2_new, z1                                            # permutation = swap

    zc = jnp.concatenate([z1, z2], axis=1)                             # (1, 512), once
    zhat_ref[0] = zc
    jaz_ref[0] = jnp.broadcast_to(jaz, (1, LANE))

    # ------------------------------- decoder --------------------------------
    zimg = zc.reshape(4, LANE)                                         # (4, 128)
    d1 = jnp.maximum(conv(zimg, 2, 8), 0.0)                            # (8, 128)
    d2 = conv(d1, 3, 16)                                               # (16, 128); cols 64.. are 0
    rec_ref[0] = 0.5 * (jnp.tanh(0.5 * d2[:, :64]) + 1.0)              # exact sigmoid, (16, 64)


# -----------------------------------------------------------------------------
# Init-time construction of per-image folded conv / upsample matrices
# -----------------------------------------------------------------------------
def _conv_tap_mats(w, h_in, w_in, stride, pad):
    """w: (kh, kw, Cin, Cout). Per-tap S (0/1 row select) and banded M, per image."""
    kh, kw, cin, cout = w.shape
    oh = (h_in + 2 * pad - kh) // stride + 1
    ow = (w_in + 2 * pad - kw) // stride + 1
    S = np.zeros((kh, oh, h_in), np.float32)
    M = np.zeros((kh, w_in * cin, ow * cout), np.float32)
    for di in range(kh):
        for o in range(oh):
            ih = stride * o + di - pad
            if 0 <= ih < h_in:
                S[di, o, ih] = 1.0
        for o in range(ow):
            for dj in range(kw):
                iw = stride * o + dj - pad
                if 0 <= iw < w_in:
                    M[di, iw * cin:(iw + 1) * cin, o * cout:(o + 1) * cout] = w[di, dj]
    return S, M, oh, ow


def _upsample_mats(h_in, w_in, c):
    """Nearest-2x upsample as per-image (row, col) 0/1 matrices on (H, W*C) layout."""
    u_row = np.zeros((2 * h_in, h_in), np.float32)
    for hu in range(2 * h_in):
        u_row[hu, hu // 2] = 1.0
    u_col = np.zeros((w_in * c, 2 * w_in * c), np.float32)
    eye = np.eye(c, dtype=np.float32)
    for wu in range(2 * w_in):
        wi = wu // 2
        u_col[wi * c:(wi + 1) * c, wu * c:(wu + 1) * c] = eye
    return u_row, u_col


def init_params():
    key = jax.random.PRNGKey(42)
    ks = jax.random.split(key, 8)

    def w_init(k, shape, fan_in):
        return (np.asarray(jax.random.normal(k, shape, jnp.float32))
                / np.sqrt(fan_in) * 0.5).astype(np.float32)

    raw = {}
    raw["e1_w"] = w_init(ks[0], (3, 3, 4, 16), 3 * 3 * 4)
    raw["e1_b"] = np.zeros((16,), np.float32)
    raw["e2_w"] = w_init(ks[1], (3, 3, 16, 32), 3 * 3 * 16)
    raw["e2_b"] = np.zeros((32,), np.float32)
    raw["f_w1"] = np.stack([w_init(ks[2 + i], (D2, 128), D2) for i in range(2)])
    raw["f_b1"] = np.zeros((2, 128), np.float32)
    raw["f_w2"] = np.stack([w_init(ks[4 + i], (128, 2 * D2), 128) for i in range(2)])
    raw["f_b2"] = np.zeros((2, 2 * D2), np.float32)
    raw["d1_w"] = w_init(ks[6], (3, 3, 32, 16), 3 * 3 * 32)
    raw["d1_b"] = np.zeros((16,), np.float32)
    raw["d2_w"] = w_init(ks[7], (3, 3, 16, 4), 3 * 3 * 16)
    raw["d2_b"] = np.zeros((4,), np.float32)

    S_list, M_list, b_rows = [], [], []

    def add_conv(S, M, b, ow, cout):
        # Mcat: taps side by side, each padded to 128 cols; K padded to 128 rows.
        mcat = np.zeros((128, KH * LANE), np.float32)
        for di in range(KH):
            mcat[:M.shape[1], di * LANE:di * LANE + M.shape[2]] = M[di]
        M_list.append(mcat)
        s_pad = np.zeros((KH, 16, 16), np.float32)
        s_pad[:, :S.shape[1], :S.shape[2]] = S
        S_list.append(s_pad)
        brow = np.zeros((512,), np.float32)
        brow[:ow * cout] = np.tile(b, ow)
        b_rows.append(brow)

    # encoder conv1: 4->16, stride 2, pad 1, 16x16 -> 8x8
    S, M, _, ow = _conv_tap_mats(raw["e1_w"], 16, 16, 2, 1)
    add_conv(S, M, raw["e1_b"], ow, 16)
    # encoder conv2: 16->32, stride 2, pad 1, 8x8 -> 4x4
    S, M, _, ow = _conv_tap_mats(raw["e2_w"], 8, 8, 2, 1)
    add_conv(S, M, raw["e2_b"], ow, 32)
    # decoder conv1: nearest-2x (4->8) folded in, 32->16, stride 1, pad 1
    u_row, u_col = _upsample_mats(4, 4, 32)
    S, M, _, ow = _conv_tap_mats(raw["d1_w"], 8, 8, 1, 1)
    S = np.einsum("doh,hl->dol", S, u_row)        # (3, 8, 4)
    M = np.einsum("kw,dwn->dkn", u_col, M)        # (3, 128, 128)
    add_conv(S, M, raw["d1_b"], ow, 16)
    # decoder conv2: nearest-2x (8->16) folded in, 16->4, stride 1, pad 1
    u_row, u_col = _upsample_mats(8, 8, 16)
    S, M, _, ow = _conv_tap_mats(raw["d2_w"], 16, 16, 1, 1)
    S = np.einsum("doh,hl->dol", S, u_row)        # (3, 16, 8)
    M = np.einsum("kw,dwn->dkn", u_col, M)        # (3, 128, 64)
    add_conv(S, M, raw["d2_b"], ow, 4)

    # flow biases -> rows 4..7 of the bias slab
    for blk in range(2):
        brow = np.zeros((512,), np.float32)
        brow[:128] = raw["f_b1"][blk]
        b_rows.append(brow)
    for blk in range(2):
        b_rows.append(raw["f_b2"][blk].astype(np.float32))

    packed = {
        "s_slab": jnp.asarray(np.stack(S_list), jnp.bfloat16),   # (4, 3, 16, 16)
        "m_slab": jnp.asarray(np.stack(M_list), jnp.bfloat16),   # (4, 128, 384)
        "b_slab": jnp.asarray(np.stack(b_rows), jnp.float32),    # (8, 512)
        "f_w1": jnp.asarray(raw["f_w1"], jnp.bfloat16),          # (2, 256, 128)
        "f_w2": jnp.asarray(raw["f_w2"], jnp.bfloat16),          # (2, 128, 512)
    }
    raw = {k: jnp.asarray(v) for k, v in raw.items()}
    return packed, raw


# -----------------------------------------------------------------------------
# Forward wrapper: grid over batch, NCHW only at the module boundary
# -----------------------------------------------------------------------------
def ae_flow_forward(p, img):
    B, C, H, W = img.shape                      # (B, 4, 16, 16)
    assert (C, H, W) == (4, 16, 16), "params were built for 4x16x16 inputs"

    # single boundary transpose: NCHW -> per-image (H, W*C) slabs
    x3 = jnp.transpose(img, (0, 2, 3, 1)).reshape(B, H, W * C)      # (B, 16, 64)

    grid_spec = pltpu.PrefetchScalarGridSpec(
        num_scalar_prefetch=0,
        grid=(B,),
        in_specs=[
            pl.BlockSpec((1, 16, 64), lambda b: (b, 0, 0)),          # image
            pl.BlockSpec((4, KH, 16, 16), lambda b: (0, 0, 0, 0)),   # S slab (resident)
            pl.BlockSpec((4, 128, KH * LANE), lambda b: (0, 0, 0)),  # M slab (resident)
            pl.BlockSpec((8, 512), lambda b: (0, 0)),                # bias slab
            pl.BlockSpec((2, D2, 128), lambda b: (0, 0, 0)),         # flow w1
            pl.BlockSpec((2, 128, 2 * D2), lambda b: (0, 0, 0)),     # flow w2
        ],
        out_specs=(
            pl.BlockSpec((1, 16, 64), lambda b: (b, 0, 0)),          # reconstruction
            pl.BlockSpec((1, 1, 512), lambda b: (b, 0, 0)),          # z_hat (flat)
            pl.BlockSpec((1, 1, 128), lambda b: (b, 0, 0)),          # jaz (broadcast lanes)
        ),
    )

    rec3, zflat, jaz3 = pl.pallas_call(
        _ae_flow_kernel,
        grid_spec=grid_spec,
        out_shape=(
            jax.ShapeDtypeStruct((B, 16, 64), jnp.float32),
            jax.ShapeDtypeStruct((B, 1, 512), jnp.float32),
            jax.ShapeDtypeStruct((B, 1, 128), jnp.float32),
        ),
        compiler_params=pltpu.CompilerParams(
            dimension_semantics=("parallel",)),   # both TCs on v7x
    )(x3, p["s_slab"], p["m_slab"], p["b_slab"], p["f_w1"], p["f_w2"])

    rec_img = rec3.reshape(B, 16, 16, 4).transpose(0, 3, 1, 2)       # NCHW
    z_hat = zflat.reshape(B, 4, 4, 32).transpose(0, 3, 1, 2)         # NCHW
    jaz = jaz3[:, 0, 0]
    return rec_img, z_hat, jaz


# -----------------------------------------------------------------------------
# Plain-JAX reference (same bf16-rounded matmul operands, f32 accumulation)
# -----------------------------------------------------------------------------
def _ref_forward(raw, img):
    f32 = jnp.float32
    q = lambda a: a.astype(jnp.bfloat16).astype(f32)

    def conv(x, w, b, stride):
        y = jax.lax.conv_general_dilated(
            q(x), q(w), window_strides=(stride, stride),
            padding=((1, 1), (1, 1)),
            dimension_numbers=("NHWC", "HWIO", "NHWC"))
        return y + b

    def up2(x):
        return jnp.repeat(jnp.repeat(x, 2, axis=1), 2, axis=2)

    x = jnp.transpose(img, (0, 2, 3, 1))
    h1 = jnp.maximum(conv(x, raw["e1_w"], raw["e1_b"], 2), 0.0)
    z = conv(h1, raw["e2_w"], raw["e2_b"], 2)                        # (B,4,4,32)
    B = z.shape[0]
    zf = z.reshape(B, -1)
    z1, z2 = zf[:, :D2], zf[:, D2:]
    jaz = jnp.zeros((B,), f32)
    for blk in range(2):
        h = jnp.maximum(jnp.dot(q(z1), q(raw["f_w1"][blk])) + raw["f_b1"][blk], 0.0)
        st = jnp.dot(q(h), q(raw["f_w2"][blk])) + raw["f_b2"][blk]
        s, t = jnp.tanh(st[:, :D2]), st[:, D2:]
        z2n = z2 * jnp.exp(s) + t
        jaz = jaz + jnp.sum(s, axis=-1)
        z1, z2 = z2n, z1
    zhat_flat = jnp.concatenate([z1, z2], axis=1)
    zhat = zhat_flat.reshape(B, 4, 4, 32)
    d1 = jnp.maximum(conv(up2(zhat), raw["d1_w"], raw["d1_b"], 1), 0.0)
    d2 = conv(up2(d1), raw["d2_w"], raw["d2_b"], 1)
    rec = jax.nn.sigmoid(d2)
    return (jnp.transpose(rec, (0, 3, 1, 2)),
            jnp.transpose(zhat, (0, 3, 1, 2)), jaz)


if __name__ == "__main__":
    packed, raw = init_params()

    key = jax.random.PRNGKey(0)
    img = jax.random.normal(key, (2, 4, 16, 16), jnp.float32)        # NCHW

    fwd = jax.jit(ae_flow_forward)
    rec_img, z_hat, jaz = fwd(packed, img)
    jax.block_until_ready((rec_img, z_hat, jaz))

    assert rec_img.shape == (2, 4, 16, 16)
    assert z_hat.shape == (2, 32, 4, 4)
    assert jaz.shape == (2,)
    assert bool(jnp.all(jnp.isfinite(rec_img)))
    assert bool(jnp.all(jnp.isfinite(z_hat)))
    assert bool(jnp.all(jnp.isfinite(jaz)))
    assert bool(jnp.all(rec_img >= 0.0)) and bool(jnp.all(rec_img <= 1.0))

    # loose numerical check vs. a plain-JAX reference with the same bf16 operands
    rec_r, zhat_r, jaz_r = _ref_forward(raw, img)
    assert float(jnp.max(jnp.abs(rec_img - rec_r))) < 3e-2
    assert float(jnp.max(jnp.abs(z_hat - zhat_r))) < 5e-2
    assert float(jnp.max(jnp.abs(jaz - jaz_r))) < 3e-1

    print("KERNEL_OK")
</pallas_src>

<mosaic_0001>
module attributes {stable_mosaic.version = 11 : i64} {
  func.func @_ae_flow_kernel(%arg0: i32, %arg1: memref<1x16x64xf32, #tpu.memory_space<vmem>>, %arg2: memref<4x3x16x16xbf16, #tpu.memory_space<vmem>>, %arg3: memref<4x128x384xbf16, #tpu.memory_space<vmem>>, %arg4: memref<8x512xf32, #tpu.memory_space<vmem>>, %arg5: memref<2x256x128xbf16, #tpu.memory_space<vmem>>, %arg6: memref<2x128x512xbf16, #tpu.memory_space<vmem>>, %arg7: memref<1x16x64xf32, #tpu.memory_space<vmem>>, %arg8: memref<1x1x512xf32, #tpu.memory_space<vmem>>, %arg9: memref<1x1x128xf32, #tpu.memory_space<vmem>>) attributes {dimension_semantics = [#tpu.dimension_semantics<parallel>], iteration_bounds = array<i64: 2>, scalar_prefetch = 0 : i64, scratch_operands = 0 : i64, tpu.core_type = #tpu.core_type<tc>, window_params = [{transform_indices = @transform_0, window_bounds = array<i64: 1, 16, 64>}, {pipeline_mode = #tpu.pipeline_mode<synchronous>, transform_indices = @transform_1, window_bounds = array<i64: 4, 3, 16, 16>}, {pipeline_mode = #tpu.pipeline_mode<synchronous>, transform_indices = @transform_2, window_bounds = array<i64: 4, 128, 384>}, {pipeline_mode = #tpu.pipeline_mode<synchronous>, transform_indices = @transform_3, window_bounds = array<i64: 8, 512>}, {pipeline_mode = #tpu.pipeline_mode<synchronous>, transform_indices = @transform_4, window_bounds = array<i64: 2, 256, 128>}, {pipeline_mode = #tpu.pipeline_mode<synchronous>, transform_indices = @transform_5, window_bounds = array<i64: 2, 128, 512>}, {transform_indices = @transform_6, window_bounds = array<i64: 1, 16, 64>}, {transform_indices = @transform_7, window_bounds = array<i64: 1, 1, 512>}, {transform_indices = @transform_8, window_bounds = array<i64: 1, 1, 128>}]} {
    %c0 = arith.constant 0 : index
    %c0_0 = arith.constant 0 : index
    %c0_1 = arith.constant 0 : index
    %0 = vector.load %arg1[%c0, %c0_0, %c0_1] : memref<1x16x64xf32, #tpu.memory_space<vmem>>, vector<1x16x64xf32>
    %1 = vector.shape_cast %0 : vector<1x16x64xf32> to vector<16x64xf32>
    %c0_2 = arith.constant 0 : index
    %c0_3 = arith.constant 0 : index
    %c0_4 = arith.constant 0 : index
    %2 = vector.load %arg3[%c0_2, %c0_3, %c0_4] : memref<4x128x384xbf16, #tpu.memory_space<vmem>>, vector<1x64x384xbf16>
    %3 = vector.shape_cast %2 : vector<1x64x384xbf16> to vector<64x384xbf16>
    %4 = arith.truncf %1 : vector<16x64xf32> to vector<16x64xbf16>
    %cst = arith.constant dense<0.000000e+00> : vector<16x384xf32>
    %5 = tpu.matmul %4, %3, %cst {dimension_numbers = #tpu.dot_dimension_numbers<[1], [0], [0], [1], [0, 0, 1, 1], [], []>} : vector<16x64xbf16>, vector<64x384xbf16>, vector<16x384xf32> -> vector<16x384xf32>
    %6 = arith.truncf %5 : vector<16x384xf32> to vector<16x384xbf16>
    %cst_5 = arith.constant 0.000000e+00 : f32
    %7 = vector.broadcast %cst_5 : f32 to vector<8x128xf32>
    %c0_6 = arith.constant 0 : index
    %c0_7 = arith.constant 0 : index
    %c0_8 = arith.constant 0 : index
    %c0_9 = arith.constant 0 : index
    %8 = vector.load %arg2[%c0_6, %c0_7, %c0_8, %c0_9] : memref<4x3x16x16xbf16, #tpu.memory_space<vmem>>, vector<1x1x8x16xbf16>
    %9 = vector.shape_cast %8 : vector<1x1x8x16xbf16> to vector<8x16xbf16>
    %10 = vector.extract_strided_slice %6 {offsets = [0, 0], sizes = [16, 128], strides = [1, 1]} : vector<16x384xbf16> to vector<16x128xbf16>
    %cst_10 = arith.constant dense<0.000000e+00> : vector<8x128xf32>
    %11 = tpu.matmul %9, %10, %cst_10 {dimension_numbers = #tpu.dot_dimension_numbers<[1], [0], [0], [1], [0, 0, 1, 1], [], []>} : vector<8x16xbf16>, vector<16x128xbf16>, vector<8x128xf32> -> vector<8x128xf32>
    %12 = arith.addf %7, %11 : vector<8x128xf32>
    %c0_11 = arith.constant 0 : index
    %c1 = arith.constant 1 : index
    %c0_12 = arith.constant 0 : index
    %c0_13 = arith.constant 0 : index
    %13 = vector.load %arg2[%c0_11, %c1, %c0_12, %c0_13] : memref<4x3x16x16xbf16, #tpu.memory_space<vmem>>, vector<1x1x8x16xbf16>
    %14 = vector.shape_cast %13 : vector<1x1x8x16xbf16> to vector<8x16xbf16>
    %15 = vector.extract_strided_slice %6 {offsets = [0, 128], sizes = [16, 128], strides = [1, 1]} : vector<16x384xbf16> to vector<16x128xbf16>
    %cst_14 = arith.constant dense<0.000000e+00> : vector<8x128xf32>
    %16 = tpu.matmul %14, %15, %cst_14 {dimension_numbers = #tpu.dot_dimension_numbers<[1], [0], [0], [1], [0, 0, 1, 1], [], []>} : vector<8x16xbf16>, vector<16x128xbf16>, vector<8x128xf32> -> vector<8x128xf32>
    %17 = arith.addf %12, %16 : vector<8x128xf32>
    %c0_15 = arith.constant 0 : index
    %c2 = arith.constant 2 : index
    %c0_16 = arith.constant 0 : index
    %c0_17 = arith.constant 0 : index
    %18 = vector.load %arg2[%c0_15, %c2, %c0_16, %c0_17] : memref<4x3x16x16xbf16, #tpu.memory_space<vmem>>, vector<1x1x8x16xbf16>
    %19 = vector.shape_cast %18 : vector<1x1x8x16xbf16> to vector<8x16xbf16>
    %20 = vector.extract_strided_slice %6 {offsets = [0, 256], sizes = [16, 128], strides = [1, 1]} : vector<16x384xbf16> to vector<16x128xbf16>
    %cst_18 = arith.constant dense<0.000000e+00> : vector<8x128xf32>
    %21 = tpu.matmul %19, %20, %cst_18 {dimension_numbers = #tpu.dot_dimension_numbers<[1], [0], [0], [1], [0, 0, 1, 1], [], []>} : vector<8x16xbf16>, vector<16x128xbf16>, vector<8x128xf32> -> vector<8x128xf32>
    %22 = arith.addf %17, %21 : vector<8x128xf32>
    %c0_19 = arith.constant 0 : index
    %c0_20 = arith.constant 0 : index
    %23 = vector.load %arg4[%c0_19, %c0_20] : memref<8x512xf32, #tpu.memory_space<vmem>>, vector<1x128xf32>
    %24 = vector.broadcast %23 : vector<1x128xf32> to vector<8x128xf32>
    %25 = arith.addf %22, %24 : vector<8x128xf32>
    %cst_21 = arith.constant 0.000000e+00 : f32
    %26 = vector.broadcast %cst_21 : f32 to vector<8x128xf32>
    %27 = arith.maximumf %25, %26 : vector<8x128xf32>
    %c1_22 = arith.constant 1 : index
    %c0_23 = arith.constant 0 : index
    %c0_24 = arith.constant 0 : index
    %28 = vector.load %arg3[%c1_22, %c0_23, %c0_24] : memref<4x128x384xbf16, #tpu.memory_space<vmem>>, vector<1x128x384xbf16>
    %29 = vector.shape_cast %28 : vector<1x128x384xbf16> to vector<128x384xbf16>
    %30 = arith.truncf %27 : vector<8x128xf32> to vector<8x128xbf16>
    %cst_25 = arith.constant dense<0.000000e+00> : vector<8x384xf32>
    %31 = tpu.matmul %30, %29, %cst_25 {dimension_numbers = #tpu.dot_dimension_numbers<[1], [0], [0], [1], [0, 0, 1, 1], [], []>} : vector<8x128xbf16>, vector<128x384xbf16>, vector<8x384xf32> -> vector<8x384xf32>
    %32 = arith.truncf %31 : vector<8x384xf32> to vector<8x384xbf16>
    %cst_26 = arith.constant 0.000000e+00 : f32
    %33 = vector.broadcast %cst_26 : f32 to vector<4x128xf32>
    %c1_27 = arith.constant 1 : index
    %c0_28 = arith.constant 0 : index
    %c0_29 = arith.constant 0 : index
    %c0_30 = arith.constant 0 : index
    %34 = vector.load %arg2[%c1_27, %c0_28, %c0_29, %c0_30] : memref<4x3x16x16xbf16, #tpu.memory_space<vmem>>, vector<1x1x4x8xbf16>
    %35 = vector.shape_cast %34 : vector<1x1x4x8xbf16> to vector<4x8xbf16>
    %36 = vector.extract_strided_slice %32 {offsets = [0, 0], sizes = [8, 128], strides = [1, 1]} : vector<8x384xbf16> to vector<8x128xbf16>
    %cst_31 = arith.constant dense<0.000000e+00> : vector<4x128xf32>
    %37 = tpu.matmul %35, %36, %cst_31 {dimension_numbers = #tpu.dot_dimension_numbers<[1], [0], [0], [1], [0, 0, 1, 1], [], []>} : vector<4x8xbf16>, vector<8x128xbf16>, vector<4x128xf32> -> vector<4x128xf32>
    %38 = arith.addf %33, %37 : vector<4x128xf32>
    %c1_32 = arith.constant 1 : index
    %c1_33 = arith.constant 1 : index
    %c0_34 = arith.constant 0 : index
    %c0_35 = arith.constant 0 : index
    %39 = vector.load %arg2[%c1_32, %c1_33, %c0_34, %c0_35] : memref<4x3x16x16xbf16, #tpu.memory_space<vmem>>, vector<1x1x4x8xbf16>
    %40 = vector.shape_cast %39 : vector<1x1x4x8xbf16> to vector<4x8xbf16>
    %41 = vector.extract_strided_slice %32 {offsets = [0, 128], sizes = [8, 128], strides = [1, 1]} : vector<8x384xbf16> to vector<8x128xbf16>
    %cst_36 = arith.constant dense<0.000000e+00> : vector<4x128xf32>
    %42 = tpu.matmul %40, %41, %cst_36 {dimension_numbers = #tpu.dot_dimension_numbers<[1], [0], [0], [1], [0, 0, 1, 1], [], []>} : vector<4x8xbf16>, vector<8x128xbf16>, vector<4x128xf32> -> vector<4x128xf32>
    %43 = arith.addf %38, %42 : vector<4x128xf32>
    %c1_37 = arith.constant 1 : index
    %c2_38 = arith.constant 2 : index
    %c0_39 = arith.constant 0 : index
    %c0_40 = arith.constant 0 : index
    %44 = vector.load %arg2[%c1_37, %c2_38, %c0_39, %c0_40] : memref<4x3x16x16xbf16, #tpu.memory_space<vmem>>, vector<1x1x4x8xbf16>
    %45 = vector.shape_cast %44 : vector<1x1x4x8xbf16> to vector<4x8xbf16>
    %46 = vector.extract_strided_slice %32 {offsets = [0, 256], sizes = [8, 128], strides = [1, 1]} : vector<8x384xbf16> to vector<8x128xbf16>
    %cst_41 = arith.constant dense<0.000000e+00> : vector<4x128xf32>
    %47 = tpu.matmul %45, %46, %cst_41 {dimension_numbers = #tpu.dot_dimension_numbers<[1], [0], [0], [1], [0, 0, 1, 1], [], []>} : vector<4x8xbf16>, vector<8x128xbf16>, vector<4x128xf32> -> vector<4x128xf32>
    %48 = arith.addf %43, %47 : vector<4x128xf32>
    %c1_42 = arith.constant 1 : index
    %c0_43 = arith.constant 0 : index
    %49 = vector.load %arg4[%c1_42, %c0_43] : memref<8x512xf32, #tpu.memory_space<vmem>>, vector<1x128xf32>
    %50 = vector.broadcast %49 : vector<1x128xf32> to vector<4x128xf32>
    %51 = arith.addf %48, %50 : vector<4x128xf32>
    %52 = vector.shape_cast %51 : vector<4x128xf32> to vector<1x512xf32>
    %53 = vector.extract_strided_slice %52 {offsets = [0, 0], sizes = [1, 256], strides = [1, 1]} : vector<1x512xf32> to vector<1x256xf32>
    %54 = vector.extract_strided_slice %52 {offsets = [0, 256], sizes = [1, 256], strides = [1, 1]} : vector<1x512xf32> to vector<1x256xf32>
    %cst_44 = arith.constant 0.000000e+00 : f32
    %55 = vector.broadcast %cst_44 : f32 to vector<1x1xf32>
    %56 = arith.truncf %53 : vector<1x256xf32> to vector<1x256xbf16>
    %c0_45 = arith.constant 0 : index
    %c0_46 = arith.constant 0 : index
    %c0_47 = arith.constant 0 : index
    %57 = vector.load %arg5[%c0_45, %c0_46, %c0_47] : memref<2x256x128xbf16, #tpu.memory_space<vmem>>, vector<1x256x128xbf16>
    %58 = vector.shape_cast %57 : vector<1x256x128xbf16> to vector<256x128xbf16>
    %cst_48 = arith.constant dense<0.000000e+00> : vector<1x128xf32>
    %59 = tpu.matmul %56, %58, %cst_48 {dimension_numbers = #tpu.dot_dimension_numbers<[1], [0], [0], [1], [0, 0, 1, 1], [], []>} : vector<1x256xbf16>, vector<256x128xbf16>, vector<1x128xf32> -> vector<1x128xf32>
    %c4 = arith.constant 4 : index
    %c0_49 = arith.constant 0 : index
    %60 = vector.load %arg4[%c4, %c0_49] : memref<8x512xf32, #tpu.memory_space<vmem>>, vector<1x128xf32>
    %61 = arith.addf %59, %60 : vector<1x128xf32>
    %cst_50 = arith.constant 0.000000e+00 : f32
    %62 = vector.broadcast %cst_50 : f32 to vector<1x128xf32>
    %63 = arith.maximumf %61, %62 : vector<1x128xf32>
    %64 = arith.truncf %63 : vector<1x128xf32> to vector<1x128xbf16>
    %c0_51 = arith.constant 0 : index
    %c0_52 = arith.constant 0 : index
    %c0_53 = arith.constant 0 : index
    %65 = vector.load %arg6[%c0_51, %c0_52, %c0_53] : memref<2x128x512xbf16, #tpu.memory_space<vmem>>, vector<1x128x512xbf16>
    %66 = vector.shape_cast %65 : vector<1x128x512xbf16> to vector<128x512xbf16>
    %cst_54 = arith.constant dense<0.000000e+00> : vector<1x512xf32>
    %67 = tpu.matmul %64, %66, %cst_54 {dimension_numbers = #tpu.dot_dimension_numbers<[1], [0], [0], [1], [0, 0, 1, 1], [], []>} : vector<1x128xbf16>, vector<128x512xbf16>, vector<1x512xf32> -> vector<1x512xf32>
    %c6 = arith.constant 6 : index
    %c0_55 = arith.constant 0 : index
    %68 = vector.load %arg4[%c6, %c0_55] : memref<8x512xf32, #tpu.memory_space<vmem>>, vector<1x512xf32>
    %69 = arith.addf %67, %68 : vector<1x512xf32>
    %70 = vector.extract_strided_slice %69 {offsets = [0, 0], sizes = [1, 256], strides = [1, 1]} : vector<1x512xf32> to vector<1x256xf32>
    %71 = math.tanh %70 : vector<1x256xf32>
    %72 = vector.extract_strided_slice %69 {offsets = [0, 256], sizes = [1, 256], strides = [1, 1]} : vector<1x512xf32> to vector<1x256xf32>
    %73 = math.exp %71 : vector<1x256xf32>
    %74 = arith.mulf %54, %73 : vector<1x256xf32>
    %75 = arith.addf %74, %72 : vector<1x256xf32>
    %cst_56 = arith.constant dense<0.000000e+00> : vector<1xf32>
    %76 = vector.multi_reduction <add>, %71, %cst_56 [1] : vector<1x256xf32> to vector<1xf32>
    %77 = vector.shape_cast %76 : vector<1xf32> to vector<1x1xf32>
    %78 = arith.addf %55, %77 : vector<1x1xf32>
    %79 = arith.truncf %75 : vector<1x256xf32> to vector<1x256xbf16>
    %c1_57 = arith.constant 1 : index
    %c0_58 = arith.constant 0 : index
    %c0_59 = arith.constant 0 : index
    %80 = vector.load %arg5[%c1_57, %c0_58, %c0_59] : memref<2x256x128xbf16, #tpu.memory_space<vmem>>, vector<1x256x128xbf16>
    %81 = vector.shape_cast %80 : vector<1x256x128xbf16> to vector<256x128xbf16>
    %cst_60 = arith.constant dense<0.000000e+00> : vector<1x128xf32>
    %82 = tpu.matmul %79, %81, %cst_60 {dimension_numbers = #tpu.dot_dimension_numbers<[1], [0], [0], [1], [0, 0, 1, 1], [], []>} : vector<1x256xbf16>, vector<256x128xbf16>, vector<1x128xf32> -> vector<1x128xf32>
    %c5 = arith.constant 5 : index
    %c0_61 = arith.constant 0 : index
    %83 = vector.load %arg4[%c5, %c0_61] : memref<8x512xf32, #tpu.memory_space<vmem>>, vector<1x128xf32>
    %84 = arith.addf %82, %83 : vector<1x128xf32>
    %cst_62 = arith.constant 0.000000e+00 : f32
    %85 = vector.broadcast %cst_62 : f32 to vector<1x128xf32>
    %86 = arith.maximumf %84, %85 : vector<1x128xf32>
    %87 = arith.truncf %86 : vector<1x128xf32> to vector<1x128xbf16>
    %c1_63 = arith.constant 1 : index
    %c0_64 = arith.constant 0 : index
    %c0_65 = arith.constant 0 : index
    %88 = vector.load %arg6[%c1_63, %c0_64, %c0_65] : memref<2x128x512xbf16, #tpu.memory_space<vmem>>, vector<1x128x512xbf16>
    %89 = vector.shape_cast %88 : vector<1x128x512xbf16> to vector<128x512xbf16>
    %cst_66 = arith.constant dense<0.000000e+00> : vector<1x512xf32>
    %90 = tpu.matmul %87, %89, %cst_66 {dimension_numbers = #tpu.dot_dimension_numbers<[1], [0], [0], [1], [0, 0, 1, 1], [], []>} : vector<1x128xbf16>, vector<128x512xbf16>, vector<1x512xf32> -> vector<1x512xf32>
    %c7 = arith.constant 7 : index
    %c0_67 = arith.constant 0 : index
    %91 = vector.load %arg4[%c7, %c0_67] : memref<8x512xf32, #tpu.memory_space<vmem>>, vector<1x512xf32>
    %92 = arith.addf %90, %91 : vector<1x512xf32>
    %93 = vector.extract_strided_slice %92 {offsets = [0, 0], sizes = [1, 256], strides = [1, 1]} : vector<1x512xf32> to vector<1x256xf32>
    %94 = math.tanh %93 : vector<1x256xf32>
    %95 = vector.extract_strided_slice %92 {offsets = [0, 256], sizes = [1, 256], strides = [1, 1]} : vector<1x512xf32> to vector<1x256xf32>
    %96 = math.exp %94 : vector<1x256xf32>
    %97 = arith.mulf %53, %96 : vector<1x256xf32>
    %98 = arith.addf %97, %95 : vector<1x256xf32>
    %cst_68 = arith.constant dense<0.000000e+00> : vector<1xf32>
    %99 = vector.multi_reduction <add>, %94, %cst_68 [1] : vector<1x256xf32> to vector<1xf32>
    %100 = vector.shape_cast %99 : vector<1xf32> to vector<1x1xf32>
    %101 = arith.addf %78, %100 : vector<1x1xf32>
    %102 = tpu.concatenate %98, %75 in 1 : vector<1x256xf32>, vector<1x256xf32> -> vector<1x512xf32>
    %c0_69 = arith.constant 0 : index
    %c0_70 = arith.constant 0 : index
    %c0_71 = arith.constant 0 : index
    %103 = vector.load %arg8[%c0_69, %c0_70, %c0_71] : memref<1x1x512xf32, #tpu.memory_space<vmem>>, vector<1x1x512xf32>
    %104 = vector.shape_cast %103 : vector<1x1x512xf32> to vector<1x512xf32>
    %105 = vector.shape_cast %102 : vector<1x512xf32> to vector<1x1x512xf32>
    tpu.vector_store %arg8[%c0_69, %c0_70, %c0_71], %105 {strides = array<i32>} : memref<1x1x512xf32, #tpu.memory_space<vmem>>, vector<1x1x512xf32>,
    %106 = vector.shape_cast %101 : vector<1x1xf32> to vector<1x1xf32>
    %107 = vector.broadcast %106 : vector<1x1xf32> to vector<1x128xf32>
    %c0_72 = arith.constant 0 : index
    %c0_73 = arith.constant 0 : index
    %c0_74 = arith.constant 0 : index
    %108 = vector.load %arg9[%c0_72, %c0_73, %c0_74] : memref<1x1x128xf32, #tpu.memory_space<vmem>>, vector<1x1x128xf32>
    %109 = vector.shape_cast %108 : vector<1x1x128xf32> to vector<1x128xf32>
    %110 = vector.shape_cast %107 : vector<1x128xf32> to vector<1x1x128xf32>
    tpu.vector_store %arg9[%c0_72, %c0_73, %c0_74], %110 {strides = array<i32>} : memref<1x1x128xf32, #tpu.memory_space<vmem>>, vector<1x1x128xf32>,
    %111 = vector.shape_cast %102 : vector<1x512xf32> to vector<4x128xf32>
    %c2_75 = arith.constant 2 : index
    %c0_76 = arith.constant 0 : index
    %c0_77 = arith.constant 0 : index
    %112 = vector.load %arg3[%c2_75, %c0_76, %c0_77] : memref<4x128x384xbf16, #tpu.memory_space<vmem>>, vector<1x128x384xbf16>
    %113 = vector.shape_cast %112 : vector<1x128x384xbf16> to vector<128x384xbf16>
    %114 = arith.truncf %111 : vector<4x128xf32> to vector<4x128xbf16>
    %cst_78 = arith.constant dense<0.000000e+00> : vector<4x384xf32>
    %115 = tpu.matmul %114, %113, %cst_78 {dimension_numbers = #tpu.dot_dimension_numbers<[1], [0], [0], [1], [0, 0, 1, 1], [], []>} : vector<4x128xbf16>, vector<128x384xbf16>, vector<4x384xf32> -> vector<4x384xf32>
    %116 = arith.truncf %115 : vector<4x384xf32> to vector<4x384xbf16>
    %cst_79 = arith.constant 0.000000e+00 : f32
    %117 = vector.broadcast %cst_79 : f32 to vector<8x128xf32>
    %c2_80 = arith.constant 2 : index
    %c0_81 = arith.constant 0 : index
    %c0_82 = arith.constant 0 : index
    %c0_83 = arith.constant 0 : index
    %118 = vector.load %arg2[%c2_80, %c0_81, %c0_82, %c0_83] : memref<4x3x16x16xbf16, #tpu.memory_space<vmem>>, vector<1x1x8x4xbf16>
    %119 = vector.shape_cast %118 : vector<1x1x8x4xbf16> to vector<8x4xbf16>
    %120 = vector.extract_strided_slice %116 {offsets = [0, 0], sizes = [4, 128], strides = [1, 1]} : vector<4x384xbf16> to vector<4x128xbf16>
    %cst_84 = arith.constant dense<0.000000e+00> : vector<8x128xf32>
    %121 = tpu.matmul %119, %120, %cst_84 {dimension_numbers = #tpu.dot_dimension_numbers<[1], [0], [0], [1], [0, 0, 1, 1], [], []>} : vector<8x4xbf16>, vector<4x128xbf16>, vector<8x128xf32> -> vector<8x128xf32>
    %122 = arith.addf %117, %121 : vector<8x128xf32>
    %c2_85 = arith.constant 2 : index
    %c1_86 = arith.constant 1 : index
    %c0_87 = arith.constant 0 : index
    %c0_88 = arith.constant 0 : index
    %123 = vector.load %arg2[%c2_85, %c1_86, %c0_87, %c0_88] : memref<4x3x16x16xbf16, #tpu.memory_space<vmem>>, vector<1x1x8x4xbf16>
    %124 = vector.shape_cast %123 : vector<1x1x8x4xbf16> to vector<8x4xbf16>
    %125 = vector.extract_strided_slice %116 {offsets = [0, 128], sizes = [4, 128], strides = [1, 1]} : vector<4x384xbf16> to vector<4x128xbf16>
    %cst_89 = arith.constant dense<0.000000e+00> : vector<8x128xf32>
    %126 = tpu.matmul %124, %125, %cst_89 {dimension_numbers = #tpu.dot_dimension_numbers<[1], [0], [0], [1], [0, 0, 1, 1], [], []>} : vector<8x4xbf16>, vector<4x128xbf16>, vector<8x128xf32> -> vector<8x128xf32>
    %127 = arith.addf %122, %126 : vector<8x128xf32>
    %c2_90 = arith.constant 2 : index
    %c2_91 = arith.constant 2 : index
    %c0_92 = arith.constant 0 : index
    %c0_93 = arith.constant 0 : index
    %128 = vector.load %arg2[%c2_90, %c2_91, %c0_92, %c0_93] : memref<4x3x16x16xbf16, #tpu.memory_space<vmem>>, vector<1x1x8x4xbf16>
    %129 = vector.shape_cast %128 : vector<1x1x8x4xbf16> to vector<8x4xbf16>
    %130 = vector.extract_strided_slice %116 {offsets = [0, 256], sizes = [4, 128], strides = [1, 1]} : vector<4x384xbf16> to vector<4x128xbf16>
    %cst_94 = arith.constant dense<0.000000e+00> : vector<8x128xf32>
    %131 = tpu.matmul %129, %130, %cst_94 {dimension_numbers = #tpu.dot_dimension_numbers<[1], [0], [0], [1], [0, 0, 1, 1], [], []>} : vector<8x4xbf16>, vector<4x128xbf16>, vector<8x128xf32> -> vector<8x128xf32>
    %132 = arith.addf %127, %131 : vector<8x128xf32>
    %c2_95 = arith.constant 2 : index
    %c0_96 = arith.constant 0 : index
    %133 = vector.load %arg4[%c2_95, %c0_96] : memref<8x512xf32, #tpu.memory_space<vmem>>, vector<1x128xf32>
    %134 = vector.broadcast %133 : vector<1x128xf32> to vector<8x128xf32>
    %135 = arith.addf %132, %134 : vector<8x128xf32>
    %cst_97 = arith.constant 0.000000e+00 : f32
    %136 = vector.broadcast %cst_97 : f32 to vector<8x128xf32>
    %137 = arith.maximumf %135, %136 : vector<8x128xf32>
    %c3 = arith.constant 3 : index
    %c0_98 = arith.constant 0 : index
    %c0_99 = arith.constant 0 : index
    %138 = vector.load %arg3[%c3, %c0_98, %c0_99] : memref<4x128x384xbf16, #tpu.memory_space<vmem>>, vector<1x128x384xbf16>
    %139 = vector.shape_cast %138 : vector<1x128x384xbf16> to vector<128x384xbf16>
    %140 = arith.truncf %137 : vector<8x128xf32> to vector<8x128xbf16>
    %cst_100 = arith.constant dense<0.000000e+00> : vector<8x384xf32>
    %141 = tpu.matmul %140, %139, %cst_100 {dimension_numbers = #tpu.dot_dimension_numbers<[1], [0], [0], [1], [0, 0, 1, 1], [], []>} : vector<8x128xbf16>, vector<128x384xbf16>, vector<8x384xf32> -> vector<8x384xf32>
    %142 = arith.truncf %141 : vector<8x384xf32> to vector<8x384xbf16>
    %cst_101 = arith.constant 0.000000e+00 : f32
    %143 = vector.broadcast %cst_101 : f32 to vector<16x128xf32>
    %c3_102 = arith.constant 3 : index
    %c0_103 = arith.constant 0 : index
    %c0_104 = arith.constant 0 : index
    %c0_105 = arith.constant 0 : index
    %144 = vector.load %arg2[%c3_102, %c0_103, %c0_104, %c0_105] : memref<4x3x16x16xbf16, #tpu.memory_space<vmem>>, vector<1x1x16x8xbf16>
    %145 = vector.shape_cast %144 : vector<1x1x16x8xbf16> to vector<16x8xbf16>
    %146 = vector.extract_strided_slice %142 {offsets = [0, 0], sizes = [8, 128], strides = [1, 1]} : vector<8x384xbf16> to vector<8x128xbf16>
    %cst_106 = arith.constant dense<0.000000e+00> : vector<16x128xf32>
    %147 = tpu.matmul %145, %146, %cst_106 {dimension_numbers = #tpu.dot_dimension_numbers<[1], [0], [0], [1], [0, 0, 1, 1], [], []>} : vector<16x8xbf16>, vector<8x128xbf16>, vector<16x128xf32> -> vector<16x128xf32>
    %148 = arith.addf %143, %147 : vector<16x128xf32>
    %c3_107 = arith.constant 3 : index
    %c1_108 = arith.constant 1 : index
    %c0_109 = arith.constant 0 : index
    %c0_110 = arith.constant 0 : index
    %149 = vector.load %arg2[%c3_107, %c1_108, %c0_109, %c0_110] : memref<4x3x16x16xbf16, #tpu.memory_space<vmem>>, vector<1x1x16x8xbf16>
    %150 = vector.shape_cast %149 : vector<1x1x16x8xbf16> to vector<16x8xbf16>
    %151 = vector.extract_strided_slice %142 {offsets = [0, 128], sizes = [8, 128], strides = [1, 1]} : vector<8x384xbf16> to vector<8x128xbf16>
    %cst_111 = arith.constant dense<0.000000e+00> : vector<16x128xf32>
    %152 = tpu.matmul %150, %151, %cst_111 {dimension_numbers = #tpu.dot_dimension_numbers<[1], [0], [0], [1], [0, 0, 1, 1], [], []>} : vector<16x8xbf16>, vector<8x128xbf16>, vector<16x128xf32> -> vector<16x128xf32>
    %153 = arith.addf %148, %152 : vector<16x128xf32>
    %c3_112 = arith.constant 3 : index
    %c2_113 = arith.constant 2 : index
    %c0_114 = arith.constant 0 : index
    %c0_115 = arith.constant 0 : index
    %154 = vector.load %arg2[%c3_112, %c2_113, %c0_114, %c0_115] : memref<4x3x16x16xbf16, #tpu.memory_space<vmem>>, vector<1x1x16x8xbf16>
    %155 = vector.shape_cast %154 : vector<1x1x16x8xbf16> to vector<16x8xbf16>
    %156 = vector.extract_strided_slice %142 {offsets = [0, 256], sizes = [8, 128], strides = [1, 1]} : vector<8x384xbf16> to vector<8x128xbf16>
    %cst_116 = arith.constant dense<0.000000e+00> : vector<16x128xf32>
    %157 = tpu.matmul %155, %156, %cst_116 {dimension_numbers = #tpu.dot_dimension_numbers<[1], [0], [0], [1], [0, 0, 1, 1], [], []>} : vector<16x8xbf16>, vector<8x128xbf16>, vector<16x128xf32> -> vector<16x128xf32>
    %158 = arith.addf %153, %157 : vector<16x128xf32>
    %c3_117 = arith.constant 3 : index
    %c0_118 = arith.constant 0 : index
    %159 = vector.load %arg4[%c3_117, %c0_118] : memref<8x512xf32, #tpu.memory_space<vmem>>, vector<1x128xf32>
    %160 = vector.broadcast %159 : vector<1x128xf32> to vector<16x128xf32>
    %161 = arith.addf %158, %160 : vector<16x128xf32>
    %162 = vector.extract_strided_slice %161 {offsets = [0, 0], sizes = [16, 64], strides = [1, 1]} : vector<16x128xf32> to vector<16x64xf32>
    %cst_119 = arith.constant 5.000000e-01 : f32
    %163 = vector.broadcast %cst_119 : f32 to vector<16x64xf32>
    %164 = arith.mulf %163, %162 : vector<16x64xf32>
    %165 = math.tanh %164 : vector<16x64xf32>
    %cst_120 = arith.constant 1.000000e+00 : f32
    %166 = vector.broadcast %cst_120 : f32 to vector<16x64xf32>
    %167 = arith.addf %165, %166 : vector<16x64xf32>
    %cst_121 = arith.constant 5.000000e-01 : f32
    %168 = vector.broadcast %cst_121 : f32 to vector<16x64xf32>
    %169 = arith.mulf %168, %167 : vector<16x64xf32>
    %c0_122 = arith.constant 0 : index
    %c0_123 = arith.constant 0 : index
    %c0_124 = arith.constant 0 : index
    %170 = vector.load %arg7[%c0_122, %c0_123, %c0_124] : memref<1x16x64xf32, #tpu.memory_space<vmem>>, vector<1x16x64xf32>
    %171 = vector.shape_cast %170 : vector<1x16x64xf32> to vector<16x64xf32>
    %172 = vector.shape_cast %169 : vector<16x64xf32> to vector<1x16x64xf32>
    tpu.vector_store %arg7[%c0_122, %c0_123, %c0_124], %172 {strides = array<i32>} : memref<1x16x64xf32, #tpu.memory_space<vmem>>, vector<1x16x64xf32>,
    return
  }
  func.func @transform_0(%arg0: i32) -> (i32, i32, i32) {
    %c0_i32 = arith.constant 0 : i32
    %c0_i32_0 = arith.constant 0 : i32
    %c0_i32_1 = arith.constant 0 : i32
    return %arg0, %c0_i32, %c0_i32_0 : i32, i32, i32
  }
  func.func @transform_1(%arg0: i32) -> (i32, i32, i32, i32) {
    %c0_i32 = arith.constant 0 : i32
    %c0_i32_0 = arith.constant 0 : i32
    %c0_i32_1 = arith.constant 0 : i32
    %c0_i32_2 = arith.constant 0 : i32
    %c0_i32_3 = arith.constant 0 : i32
    return %c0_i32, %c0_i32_0, %c0_i32_1, %c0_i32_2 : i32, i32, i32, i32
  }
  func.func @transform_2(%arg0: i32) -> (i32, i32, i32) {
    %c0_i32 = arith.constant 0 : i32
    %c0_i32_0 = arith.constant 0 : i32
    %c0_i32_1 = arith.constant 0 : i32
    %c0_i32_2 = arith.constant 0 : i32
    return %c0_i32, %c0_i32_0, %c0_i32_1 : i32, i32, i32
  }
  func.func @transform_3(%arg0: i32) -> (i32, i32) {
    %c0_i32 = arith.constant 0 : i32
    %c0_i32_0 = arith.constant 0 : i32
    %c0_i32_1 = arith.constant 0 : i32
    return %c0_i32, %c0_i32_0 : i32, i32
  }
  func.func @transform_4(%arg0: i32) -> (i32, i32, i32) {
    %c0_i32 = arith.constant 0 : i32
    %c0_i32_0 = arith.constant 0 : i32
    %c0_i32_1 = arith.constant 0 : i32
    %c0_i32_2 = arith.constant 0 : i32
    return %c0_i32, %c0_i32_0, %c0_i32_1 : i32, i32, i32
  }
  func.func @transform_5(%arg0: i32) -> (i32, i32, i32) {
    %c0_i32 = arith.constant 0 : i32
    %c0_i32_0 = arith.constant 0 : i32
    %c0_i32_1 = arith.constant 0 : i32
    %c0_i32_2 = arith.constant 0 : i32
    return %c0_i32, %c0_i32_0, %c0_i32_1 : i32, i32, i32
  }
  func.func @transform_6(%arg0: i32) -> (i32, i32, i32) {
    %c0_i32 = arith.constant 0 : i32
    %c0_i32_0 = arith.constant 0 : i32
    %c0_i32_1 = arith.constant 0 : i32
    return %arg0, %c0_i32, %c0_i32_0 : i32, i32, i32
  }
  func.func @transform_7(%arg0: i32) -> (i32, i32, i32) {
    %c0_i32 = arith.constant 0 : i32
    %c0_i32_0 = arith.constant 0 : i32
    %c0_i32_1 = arith.constant 0 : i32
    return %arg0, %c0_i32, %c0_i32_0 : i32, i32, i32
  }
  func.func @transform_8(%arg0: i32) -> (i32, i32, i32) {
    %c0_i32 = arith.constant 0 : i32
    %c0_i32_0 = arith.constant 0 : i32
    %c0_i32_1 = arith.constant 0 : i32
    return %arg0, %c0_i32, %c0_i32_0 : i32, i32, i32
  }
}

</mosaic_0001>

<llo_original>
// kernel: ae_flow_forward.1
$region0: #{ae_flow_forward.1}
  #allocation0 [shape = 'u32[]', space=smem, size = 0x4, offset = 0x4, fixed_abs, tag = 'smem constant byte address 0x4 - core index']
  #allocation1 [shape = 'u32[144,128]{1,0:T(1,128)}', space=vmem, size = 0x12000, scoped, tag = 'internal scratch']
  %s0 = inlined_call_operand.vmem [shape: f32[2,16,64], index: 0, kind: input, shape index: {}]
  %s1 = inlined_call_operand.vmem [shape: bf16[4,3,16,16], index: 1, kind: input, shape index: {}]
  %s2 = inlined_call_operand.hbm [shape: bf16[4,128,384], index: 2, kind: input, shape index: {}]
  %s3 = inlined_call_operand.vmem [shape: f32[8,512], index: 3, kind: input, shape index: {}]
  %s4 = inlined_call_operand.vmem [shape: bf16[2,256,128], index: 4, kind: input, shape index: {}]
  %s5 = inlined_call_operand.hbm [shape: bf16[2,128,512], index: 5, kind: input, shape index: {}]
  %s6 = inlined_call_operand.vmem [shape: f32[2,16,64], index: 6, kind: output, shape index: {0}]
  %s7 = inlined_call_operand.vmem [shape: f32[2,1,512], index: 7, kind: output, shape index: {1}]
  %s8 = inlined_call_operand.vmem [shape: f32[2,1,128], index: 8, kind: output, shape index: {2}]
  %9 = xla_tuple %s6, %s7, %s8
  %s10 = sld [smem:[#allocation0]]
  $region81: #{ae_flow_forward.1} parent=0
    _
  %s12 = ssub.s32 1, %s10
  %s13 = scalar_select 0, %s12, %s10
  $region1: #{ae_flow_forward.1} parent=0
    #allocation2 [shape = 'u8[393216]{0}', space=vmem, size = 0x60000, scoped, tag = 'input window, operand 2, single buffered']
    #allocation3 [shape = 's32[2]{0}', space=sflag, size = 0x8, scoped, tag = 'scoped memory for ae_flow_forward.1']
    #allocation4 [shape = 'u8[262144]{0}', space=vmem, size = 0x40000, scoped, tag = 'input window, operand 5, single buffered']
    #allocation5 [shape = 's32[1]{0}', space=sflag, size = 0x4, scoped, tag = 'scoped memory for ae_flow_forward.1']
    %14 = vsyncpa [#allocation3], 0
    %15 = vsyncpa [#allocation5], 0
    loop: start=0, step=1, limit=4
    $region2: #{ae_flow_forward.1} parent=1 // loop_pre_header
      _
    $region3: #{ae_flow_forward.1} parent=1 // loop_header
      %s17 = sphi 0, %s21
      %p18 = scmp.ge.s32.totalorder %s17, 4
      %s27 = sphi 0, %s29
      %s30 = sphi 0, %s27
      %s31 = sphi 0, %s30
      %s47 = sphi 0, %s31
      %s51 = sphi 0, %s51
      %s53 = sphi 0, %s51
      %s54 = sphi 0, %s53
      %s68 = sphi 0, %s54
      %s72 = sphi 0, %s72
      %s74 = sphi 0, %s72
      %s75 = sphi 0, %s74
      %s89 = sphi 0, %s75
      %s93 = sphi 0, %s93
      %s95 = sphi 0, %s93
      %s96 = sphi 0, %s95
      %s110 = sphi 0, %s96
      %s114 = sphi 0, %s114
      %s116 = sphi 0, %s114
      %s117 = sphi 0, %s116
      %s131 = sphi 0, %s117
      %s135 = sphi 0, %s135
      %s137 = sphi 0, %s135
      %s138 = sphi 0, %s137
      %s152 = sphi 0, %s138
      %s158 = sphi 0, %s160
      %s161 = sphi 0, %s158
      %s162 = sphi 0, %s161
      %s178 = sphi 0, %s162
      %s184 = sphi 0, %s186
      %s187 = sphi 0, %s184
      %s188 = sphi 0, %s187
      %s204 = sphi 0, %s188
      %s210 = sphi 0, %s212
      %s213 = sphi 0, %s210
      %s214 = sphi 0, %s213
      %s230 = sphi 0, %s214
    $region4: #{ae_flow_forward.1} parent=1 // loop_header_branch
      %20 = sbr.rel (%p18) target = $region8
    $region5: #{ae_flow_forward.1} parent=1 // loop_body
      %s22 = ssub.s32 %s17, 1
      %s23 = ssub.s32 %s17, 2
      %s24 = sadd.s32 %s17, 1
      %s25 = ssub.s32 %s17, %s24
      %p26 = scmp.eq.s32.totalorder %s25, 0
      %s28 = sadd.s32 %s27, 1
      %s29 = scalar_select %p26, %s27, %s28
      %p32 = pneg %p26
      %p33 = scmp.eq.s32.totalorder %s17, 1
      %p34 = por %p32, %p33
      %p35 = scmp.ne.s32.totalorder %s27, %s30
      %p36 = scmp.eq.s32.totalorder %s17, 0
      %p37 = por %p35, %p36
      %p38 = scmp.ne.s32.totalorder %s27, %s30
      %p39 = scmp.eq.s32.totalorder %s22, 1
      %p40 = por %p38, %p39
      %p41 = scmp.ne.s32.totalorder %s30, %s31
      %p42 = scmp.eq.s32.totalorder %s22, 0
      %p43 = por %p41, %p42
      %p44 = scmp.ne.s32.totalorder %s30, %s31
      %p45 = scmp.eq.s32.totalorder %s23, 1
      %p46 = por %p44, %p45
      %p48 = scmp.ne.s32.totalorder %s31, %s47
      %p49 = scmp.eq.s32.totalorder %s23, 0
      %p50 = por %p48, %p49
      %s52 = sadd.s32 %s51, 1
      %p55 = scmp.eq.s32.totalorder %s17, 1
      %p56 = scmp.ne.s32.totalorder %s51, %s53
      %p57 = scmp.eq.s32.totalorder %s17, 0
      %p58 = por %p56, %p57
      %p59 = scmp.ne.s32.totalorder %s51, %s53
      %p60 = scmp.eq.s32.totalorder %s22, 1
      %p61 = por %p59, %p60
      %p62 = scmp.ne.s32.totalorder %s53, %s54
      %p63 = scmp.eq.s32.totalorder %s22, 0
      %p64 = por %p62, %p63
      %p65 = scmp.ne.s32.totalorder %s53, %s54
      %p66 = scmp.eq.s32.totalorder %s23, 1
      %p67 = por %p65, %p66
      %p69 = scmp.ne.s32.totalorder %s54, %s68
      %p70 = scmp.eq.s32.totalorder %s23, 0
      %p71 = por %p69, %p70
      %s73 = sadd.s32 %s72, 1
      %p76 = scmp.eq.s32.totalorder %s17, 1
      %p77 = scmp.ne.s32.totalorder %s72, %s74
      %p78 = scmp.eq.s32.totalorder %s17, 0
      %p79 = por %p77, %p78
      %p80 = scmp.ne.s32.totalorder %s72, %s74
      %p81 = scmp.eq.s32.totalorder %s22, 1
      %p82 = por %p80, %p81
      %p83 = scmp.ne.s32.totalorder %s74, %s75
      %p84 = scmp.eq.s32.totalorder %s22, 0
      %p85 = por %p83, %p84
      %p86 = scmp.ne.s32.totalorder %s74, %s75
      %p87 = scmp.eq.s32.totalorder %s23, 1
      %p88 = por %p86, %p87
      %p90 = scmp.ne.s32.totalorder %s75, %s89
      %p91 = scmp.eq.s32.totalorder %s23, 0
      %p92 = por %p90, %p91
      %s94 = sadd.s32 %s93, 1
      %p97 = scmp.eq.s32.totalorder %s17, 1
      %p98 = scmp.ne.s32.totalorder %s93, %s95
      %p99 = scmp.eq.s32.totalorder %s17, 0
      %p100 = por %p98, %p99
      %p101 = scmp.ne.s32.totalorder %s93, %s95
      %p102 = scmp.eq.s32.totalorder %s22, 1
      %p103 = por %p101, %p102
      %p104 = scmp.ne.s32.totalorder %s95, %s96
      %p105 = scmp.eq.s32.totalorder %s22, 0
      %p106 = por %p104, %p105
      %p107 = scmp.ne.s32.totalorder %s95, %s96
      %p108 = scmp.eq.s32.totalorder %s23, 1
      %p109 = por %p107, %p108
      %p111 = scmp.ne.s32.totalorder %s96, %s110
      %p112 = scmp.eq.s32.totalorder %s23, 0
      %p113 = por %p111, %p112
      %s115 = sadd.s32 %s114, 1
      %p118 = scmp.eq.s32.totalorder %s17, 1
      %p119 = scmp.ne.s32.totalorder %s114, %s116
      %p120 = scmp.eq.s32.totalorder %s17, 0
      %p121 = por %p119, %p120
      %p122 = scmp.ne.s32.totalorder %s114, %s116
      %p123 = scmp.eq.s32.totalorder %s22, 1
      %p124 = por %p122, %p123
      %p125 = scmp.ne.s32.totalorder %s116, %s117
      %p126 = scmp.eq.s32.totalorder %s22, 0
      %p127 = por %p125, %p126
      %p128 = scmp.ne.s32.totalorder %s116, %s117
      %p129 = scmp.eq.s32.totalorder %s23, 1
      %p130 = por %p128, %p129
      %p132 = scmp.ne.s32.totalorder %s117, %s131
      %p133 = scmp.eq.s32.totalorder %s23, 0
      %p134 = por %p132, %p133
      %s136 = sadd.s32 %s135, 1
      %p139 = scmp.eq.s32.totalorder %s17, 1
      %p140 = scmp.ne.s32.totalorder %s135, %s137
      %p141 = scmp.eq.s32.totalorder %s17, 0
      %p142 = por %p140, %p141
      %p143 = scmp.ne.s32.totalorder %s135, %s137
      %p144 = scmp.eq.s32.totalorder %s22, 1
      %p145 = por %p143, %p144
      %p146 = scmp.ne.s32.totalorder %s137, %s138
      %p147 = scmp.eq.s32.totalorder %s22, 0
      %p148 = por %p146, %p147
      %p149 = scmp.ne.s32.totalorder %s137, %s138
      %p150 = scmp.eq.s32.totalorder %s23, 1
      %p151 = por %p149, %p150
      %p153 = scmp.ne.s32.totalorder %s138, %s152
      %p154 = scmp.eq.s32.totalorder %s23, 0
      %p155 = por %p153, %p154
      %s156 = ssub.s32 %s17, %s24
      %p157 = scmp.eq.s32.totalorder %s156, 0
      %s159 = sadd.s32 %s158, 1
      %s160 = scalar_select %p157, %s158, %s159
      %p163 = pneg %p157
      %p164 = scmp.eq.s32.totalorder %s17, 1
      %p165 = por %p163, %p164
      %p166 = scmp.ne.s32.totalorder %s158, %s161
      %p167 = scmp.eq.s32.totalorder %s17, 0
      %p168 = por %p166, %p167
      %p169 = scmp.ne.s32.totalorder %s158, %s161
      %p170 = scmp.eq.s32.totalorder %s22, 1
      %p171 = por %p169, %p170
      %p172 = scmp.ne.s32.totalorder %s161, %s162
      %p173 = scmp.eq.s32.totalorder %s22, 0
      %p174 = por %p172, %p173
      %p175 = scmp.ne.s32.totalorder %s161, %s162
      %p176 = scmp.eq.s32.totalorder %s23, 1
      %p177 = por %p175, %p176
      %p179 = scmp.ne.s32.totalorder %s162, %s178
      %p180 = scmp.eq.s32.totalorder %s23, 0
      %p181 = por %p179, %p180
      %s182 = ssub.s32 %s17, %s24
      %p183 = scmp.eq.s32.totalorder %s182, 0
      %s185 = sadd.s32 %s184, 1
      %s186 = scalar_select %p183, %s184, %s185
      %p189 = pneg %p183
      %p190 = scmp.eq.s32.totalorder %s17, 1
      %p191 = por %p189, %p190
      %p192 = scmp.ne.s32.totalorder %s184, %s187
      %p193 = scmp.eq.s32.totalorder %s17, 0
      %p194 = por %p192, %p193
      %p195 = scmp.ne.s32.totalorder %s184, %s187
      %p196 = scmp.eq.s32.totalorder %s22, 1
      %p197 = por %p195, %p196
      %p198 = scmp.ne.s32.totalorder %s187, %s188
      %p199 = scmp.eq.s32.totalorder %s22, 0
      %p200 = por %p198, %p199
      %p201 = scmp.ne.s32.totalorder %s187, %s188
      %p202 = scmp.eq.s32.totalorder %s23, 1
      %p203 = por %p201, %p202
      %p205 = scmp.ne.s32.totalorder %s188, %s204
      %p206 = scmp.eq.s32.totalorder %s23, 0
      %p207 = por %p205, %p206
      %s208 = ssub.s32 %s17, %s24
      %p209 = scmp.eq.s32.totalorder %s208, 0
      %s211 = sadd.s32 %s210, 1
      %s212 = scalar_select %p209, %s210, %s211
      %p215 = pneg %p209
      %p216 = scmp.eq.s32.totalorder %s17, 1
      %p217 = por %p215, %p216
      %p218 = scmp.ne.s32.totalorder %s210, %s213
      %p219 = scmp.eq.s32.totalorder %s17, 0
      %p220 = por %p218, %p219
      %p221 = scmp.ne.s32.totalorder %s210, %s213
      %p222 = scmp.eq.s32.totalorder %s22, 1
      %p223 = por %p221, %p222
      %p224 = scmp.ne.s32.totalorder %s213, %s214
      %p225 = scmp.eq.s32.totalorder %s22, 0
      %p226 = por %p224, %p225
      %p227 = scmp.ne.s32.totalorder %s213, %s214
      %p228 = scmp.eq.s32.totalorder %s23, 1
      %p229 = por %p227, %p228
      %p231 = scmp.ne.s32.totalorder %s214, %s230
      %p232 = scmp.eq.s32.totalorder %s23, 0
      %p233 = por %p231, %p232
      %p234 = scmp.le.s32.totalorder 1, %s17
      %p235 = scmp.lt.s32.totalorder %s17, 3
      %p236 = pnand %p234, %p235
      %p237 = pneg %p236
      // Predicated region
      $region9: #{ae_flow_forward.1} parent=5 // pred_check
        _
      $region10: #{ae_flow_forward.1} parent=5 // pred_check_branch
        %239 = sbr.rel (%p236) target = $region12
      $region11: #{ae_flow_forward.1} parent=5 // pred_region
        %s240 = ssub.s32 %s17, 1
        // Predicated region
        $region13: #{ae_flow_forward.1} parent=11 // pred_check
          %p241 = pneg %p64
        $region14: #{ae_flow_forward.1} parent=11 // pred_check_branch
          %243 = sbr.rel (%p241) target = $region16
        $region15: #{ae_flow_forward.1} parent=11 // pred_region
          _
        $region16: #{ae_flow_forward.1} parent=11 // pred_fallthru
          _
        // Predicated region
        $region17: #{ae_flow_forward.1} parent=11 // pred_check
          %p244 = pneg %p85
        $region18: #{ae_flow_forward.1} parent=11 // pred_check_branch
          %246 = sbr.rel (%p244) target = $region20
        $region19: #{ae_flow_forward.1} parent=11 // pred_region
          %s248 = ssub.s32 12288, 12288
          %249 = vsyncadd [#allocation3], %s248
          %s250 = sshll.u32 [#allocation2], 4
          %s251 = int_to_ptr.vmem [resolvable:$true] %s250
          %256 = dma.hbm_to_vmem [thread:$0]  %s2, 12288, %s251, [#allocation3], 192, 192, 12
        $region20: #{ae_flow_forward.1} parent=11 // pred_fallthru
          _
        // Predicated region
        $region21: #{ae_flow_forward.1} parent=11 // pred_check
          %p257 = pneg %p106
        $region22: #{ae_flow_forward.1} parent=11 // pred_check_branch
          %259 = sbr.rel (%p257) target = $region24
        $region23: #{ae_flow_forward.1} parent=11 // pred_region
          _
        $region24: #{ae_flow_forward.1} parent=11 // pred_fallthru
          _
        // Predicated region
        $region25: #{ae_flow_forward.1} parent=11 // pred_check
          %p260 = pneg %p127
        $region26: #{ae_flow_forward.1} parent=11 // pred_check_branch
          %262 = sbr.rel (%p260) target = $region28
        $region27: #{ae_flow_forward.1} parent=11 // pred_region
          _
        $region28: #{ae_flow_forward.1} parent=11 // pred_fallthru
          _
        // Predicated region
        $region29: #{ae_flow_forward.1} parent=11 // pred_check
          %p263 = pneg %p148
        $region30: #{ae_flow_forward.1} parent=11 // pred_check_branch
          %265 = sbr.rel (%p263) target = $region32
        $region31: #{ae_flow_forward.1} parent=11 // pred_region
          %s267 = ssub.s32 8192, 8192
          %268 = vsyncadd [#allocation5], %s267
          %s269 = sshll.u32 [#allocation4], 4
          %s270 = int_to_ptr.vmem [resolvable:$true] %s269
          %275 = dma.hbm_to_vmem [thread:$0]  %s5, 8192, %s270, [#allocation5], 256, 256, 16
        $region32: #{ae_flow_forward.1} parent=11 // pred_fallthru
          _
      $region12: #{ae_flow_forward.1} parent=5 // pred_fallthru
        _
      %p276 = scmp.lt.s32.totalorder %s17, 2
      // Predicated region
      $region33: #{ae_flow_forward.1} parent=5 // pred_check
        %p277 = pneg %p276
      $region34: #{ae_flow_forward.1} parent=5 // pred_check_branch
        %279 = sbr.rel (%p277) target = $region36
      $region35: #{ae_flow_forward.1} parent=5 // pred_region
        // Predicated region
        $region37: #{ae_flow_forward.1} parent=35 // pred_check
          %p280 = pneg %p37
        $region38: #{ae_flow_forward.1} parent=35 // pred_check_branch
          %282 = sbr.rel (%p280) target = $region40
        $region39: #{ae_flow_forward.1} parent=35 // pred_region
          %p283 = scmp.lt.s32.totalorder %s17, 1
          %s284 = scalar_select %p283, %s17, 1
          %s285 = smul.addr %s284, 2
          %s286 = smul.addr %s285, 8
          %s287 = scalar_lea.vmem %s0, %s286
        $region40: #{ae_flow_forward.1} parent=35 // pred_fallthru
          _
      $region36: #{ae_flow_forward.1} parent=5 // pred_fallthru
        _
      %p288 = scmp.le.s32.totalorder 1, %s17
      %p289 = scmp.lt.s32.totalorder %s17, 3
      %p290 = pnand %p288, %p289
      %p291 = pneg %p290
      // Predicated region
      $region41: #{ae_flow_forward.1} parent=5 // pred_check
        _
      $region42: #{ae_flow_forward.1} parent=5 // pred_check_branch
        %293 = sbr.rel (%p290) target = $region44
      $region43: #{ae_flow_forward.1} parent=5 // pred_region
        %s294 = ssub.s32 %s17, 1
        // Predicated region
        $region45: #{ae_flow_forward.1} parent=43 // pred_check
          %p295 = pneg %p85
        $region46: #{ae_flow_forward.1} parent=43 // pred_check_branch
          %297 = sbr.rel (%p295) target = $region48
        $region47: #{ae_flow_forward.1} parent=43 // pred_region
          %298 = dma.done [#allocation3], 12288
        $region48: #{ae_flow_forward.1} parent=43 // pred_fallthru
          _
        // Predicated region
        $region49: #{ae_flow_forward.1} parent=43 // pred_check
          %p299 = pneg %p148
        $region50: #{ae_flow_forward.1} parent=43 // pred_check_branch
          %301 = sbr.rel (%p299) target = $region52
        $region51: #{ae_flow_forward.1} parent=43 // pred_region
          %302 = dma.done [#allocation5], 8192
        $region52: #{ae_flow_forward.1} parent=43 // pred_fallthru
          _
        %p303 = scmp.lt.s32.totalorder %s22, 1
        %s304 = scalar_select %p303, %s22, 1
        %s305 = smul.addr %s304, 2
        %s306 = smul.addr %s305, 8
        %s307 = scalar_lea.vmem %s0, %s306
        %p308 = pneg %p43
        %p309 = pneg %p40
        %p310 = pneg %p64
        %p311 = pneg %p61
        %p312 = pneg %p85
        %p313 = pneg %p82
        %p314 = pneg %p106
        %p315 = pneg %p103
        %p316 = pneg %p127
        %p317 = pneg %p124
        %p318 = pneg %p148
        %p319 = pneg %p145
        %p320 = pneg %p174
        %p321 = pneg %p171
        %p322 = scmp.lt.s32.totalorder %s22, 1
        %s323 = scalar_select %p322, %s22, 1
        %s324 = smul.addr %s323, 2
        %s325 = smul.addr %s324, 8
        %s326 = scalar_lea.vmem %s6, %s325
        %p327 = pneg %p200
        %p328 = pneg %p197
        %p329 = scmp.lt.s32.totalorder %s22, 1
        %s330 = scalar_select %p329, %s22, 1
        %s331 = smul.addr %s330, 4
        %s332 = scalar_lea.vmem %s7, %s331
        %p333 = pneg %p226
        %p334 = pneg %p223
        %p335 = scmp.lt.s32.totalorder %s22, 1
        %s336 = scalar_select %p335, %s22, 1
        %s337 = scalar_lea.vmem %s8, %s336
        %p338 = scmp.lt.s32.totalorder %s22, 1
        %s339 = scalar_select %p338, %s22, 1
        %s340 = smul.addr %s339, 2
        %s341 = smul.addr %s340, 8
        %s342 = scalar_lea.vmem %s0, %s341
        %p343 = scmp.lt.s32.totalorder %s22, 1
        %s344 = scalar_select %p343, %s22, 1
        %s345 = smul.addr %s344, 2
        %s346 = smul.addr %s345, 8
        %s347 = scalar_lea.vmem %s6, %s346
        %p348 = scmp.lt.s32.totalorder %s22, 1
        %s349 = scalar_select %p348, %s22, 1
        %s350 = smul.addr %s349, 4
        %s351 = scalar_lea.vmem %s7, %s350
        %p352 = scmp.lt.s32.totalorder %s22, 1
        %s353 = scalar_select %p352, %s22, 1
        %s354 = scalar_lea.vmem %s8, %s353
        %v356 = vld [vmem:[%s342] sm:$0xff]
        %v357 = vld [vmem:[%s342 + $0x8] sm:$0xff]
        %v358 = vld [vmem:[#allocation2] sm:$0xff]
        %v359 = vld [vmem:[#allocation2 + $0x8] sm:$0xf]
        %v360 = vld [vmem:[#allocation2 + $0xc] sm:$0xff]
        %v361 = vld [vmem:[#allocation2 + $0x14] sm:$0xf]
        %v362 = vld [vmem:[#allocation2 + $0x18] sm:$0xff]
        %v363 = vld [vmem:[#allocation2 + $0x20] sm:$0xf]
        %v364 = vld [vmem:[#allocation2 + $0x24] sm:$0xff]
        %v365 = vld [vmem:[#allocation2 + $0x2c] sm:$0xf]
        %v366 = vld [vmem:[#allocation2 + $0x30] sm:$0xff]
        %v367 = vld [vmem:[#allocation2 + $0x38] sm:$0xf]
        %v368 = vld [vmem:[#allocation2 + $0x3c] sm:$0xff]
        %v369 = vld [vmem:[#allocation2 + $0x44] sm:$0xf]
        %v370 = vld [vmem:[#allocation2 + $0x48] sm:$0xff]
        %v371 = vld [vmem:[#allocation2 + $0x50] sm:$0xf]
        %v372 = vld [vmem:[#allocation2 + $0x54] sm:$0xff]
        %v373 = vld [vmem:[#allocation2 + $0x5c] sm:$0xf]
        %v374 = vpack.c.bf16 %v357, %v356
        %v391 = vunpack.c.l.b16 %v358
        %v392 = vunpack.c.h.b16 %v358
        %v393 = vunpack.c.l.b16 %v359
        %v394 = vunpack.c.l.b16 %v360
        %v395 = vunpack.c.h.b16 %v360
        %v396 = vunpack.c.l.b16 %v361
        %v397 = vunpack.c.l.b16 %v362
        %v398 = vunpack.c.h.b16 %v362
        %v399 = vunpack.c.l.b16 %v363
        %v400 = vunpack.c.l.b16 %v364
        %v401 = vunpack.c.h.b16 %v364
        %v402 = vunpack.c.l.b16 %v365
        %v403 = vunpack.c.l.b16 %v366
        %v404 = vunpack.c.h.b16 %v366
        %v405 = vunpack.c.l.b16 %v367
        %v406 = vunpack.c.l.b16 %v368
        %v407 = vunpack.c.h.b16 %v368
        %v408 = vunpack.c.l.b16 %v369
        %v409 = vunpack.c.l.b16 %v370
        %v410 = vunpack.c.h.b16 %v370
        %v411 = vunpack.c.l.b16 %v371
        %v412 = vunpack.c.l.b16 %v372
        %v413 = vunpack.c.h.b16 %v372
        %v414 = vunpack.c.l.b16 %v373
        %v415 = vpack.c.b16 %v394, %v391
        %v416 = vpack.c.b16 %v395, %v392
        %v417 = vpack.c.b16 %v396, %v393
        %v418 = vpack.c.b16 %v400, %v397
        %v419 = vpack.c.b16 %v401, %v398
        %v420 = vpack.c.b16 %v402, %v399
        %v421 = vpack.c.b16 %v406, %v403
        %v422 = vpack.c.b16 %v407, %v404
        %v423 = vpack.c.b16 %v408, %v405
        %v424 = vpack.c.b16 %v412, %v409
        %v425 = vpack.c.b16 %v413, %v410
        %v426 = vpack.c.b16 %v414, %v411
        %vm439 = vcmask 523264
        %v441 = vsel %vm439, %v374, 0
        %443 = vmatprep.subr.bf16.mxu0 %v416
        %444 = vmatpush1.bf16.msra.mxu0 %v415
        %445 = vmatprep.subr.bf16.mxu0 %v419
        %446 = vmatpush1.bf16.msra.mxu0 %v418
        %447 = vmatprep.subr.bf16.mxu0 %v422
        %448 = vmatpush1.bf16.msra.mxu0 %v421
        %449 = vmatprep.subr.bf16.mxu0 %v425
        %450 = vmatpush1.bf16.msra.mxu0 %v424
        %451 = vmatprep.subr.bf16.mxu0 0
        %452 = vmatpush1.bf16.msra.mxu0 0
        %453 = vmatprep.subr.bf16.mxu0 0
        %454 = vmatpush1.bf16.msra.mxu0 0
        %455 = vmatprep.subr.bf16.mxu0 0
        %456 = vmatpush1.bf16.msra.mxu0 0
        %457 = vmatprep.subr.bf16.mxu0 0
        %458 = vmatpush1.bf16.msra.mxu0 0
        %459 = vmatprep.subr.bf16.mxu0 0
        %460 = vmatpush1.bf16.msra.mxu0 0
        %461 = vmatprep.subr.bf16.mxu0 0
        %462 = vmatpush1.bf16.msra.mxu0 0
        %463 = vmatprep.subr.bf16.mxu0 0
        %464 = vmatpush1.bf16.msra.mxu0 0
        %465 = vmatprep.subr.bf16.mxu0 0
        %466 = vmatpush1.bf16.msra.mxu0 0
        %467 = vmatprep.subr.bf16.mxu0 0
        %468 = vmatpush1.bf16.msra.mxu0 0
        %469 = vmatprep.subr.bf16.mxu0 0
        %470 = vmatpush1.bf16.msra.mxu0 0
        %471 = vmatprep.subr.bf16.mxu0 0
        %472 = vmatpush1.bf16.msra.mxu0 0
        %473 = vmatprep.subr.bf16.mxu0 0
        %474 = vmatpush1.bf16.msra.mxu0 0
        %475 = vmatprep.mubr.bf16.mxu0 0
        %476 = vmatmul.mubr.bf16.gmra.mrb[0].mxu0 %v441
        %v477 = vpop.f32.mrb[0].mxu0
        %v478 = vadd.f32 0.0, %v477
        %v479 = vpop.f32.mrb[0].mxu0
        %v480 = vadd.f32 0.0, %v479
        %v481 = vpop.f32.mrb[0].mxu0
        %v482 = vadd.f32 0.0, %v481
        %v483 = vpop.f32.mrb[0].mxu0
        %v484 = vadd.f32 0.0, %v483
        %485 = vdwg.mxu0
        %486 = vmatprep.subr.bf16.mxu0 0
        %487 = vmatpush1.bf16.msra.mxu0 %v417
        %488 = vmatprep.subr.bf16.mxu0 0
        %489 = vmatpush1.bf16.msra.mxu0 %v420
        %490 = vmatprep.subr.bf16.mxu0 0
        %491 = vmatpush1.bf16.msra.mxu0 %v423
        %492 = vmatprep.subr.bf16.mxu0 0
        %493 = vmatpush1.bf16.msra.mxu0 %v426
        %494 = vmatprep.subr.bf16.mxu0 0
        %495 = vmatpush1.bf16.msra.mxu0 0
        %496 = vmatprep.subr.bf16.mxu0 0
        %497 = vmatpush1.bf16.msra.mxu0 0
        %498 = vmatprep.subr.bf16.mxu0 0
        %499 = vmatpush1.bf16.msra.mxu0 0
        %500 = vmatprep.subr.bf16.mxu0 0
        %501 = vmatpush1.bf16.msra.mxu0 0
        %502 = vmatprep.subr.bf16.mxu0 0
        %503 = vmatpush1.bf16.msra.mxu0 0
        %504 = vmatprep.subr.bf16.mxu0 0
        %505 = vmatpush1.bf16.msra.mxu0 0
        %506 = vmatprep.subr.bf16.mxu0 0
        %507 = vmatpush1.bf16.msra.mxu0 0
        %508 = vmatprep.subr.bf16.mxu0 0
        %509 = vmatpush1.bf16.msra.mxu0 0
        %510 = vmatprep.subr.bf16.mxu0 0
        %511 = vmatpush1.bf16.msra.mxu0 0
        %512 = vmatprep.subr.bf16.mxu0 0
        %513 = vmatpush1.bf16.msra.mxu0 0
        %514 = vmatprep.subr.bf16.mxu0 0
        %515 = vmatpush1.bf16.msra.mxu0 0
        %516 = vmatprep.subr.bf16.mxu0 0
        %517 = vmatpush1.bf16.msra.mxu0 0
        %518 = vmatprep.mubr.bf16.mxu0 0
        %519 = vmatmul.mubr.bf16.gmra.mrb[0].mxu0 %v441
        %v520 = vpop.f32.mrb[0].mxu0
        %v521 = vadd.f32 0.0, %v520
        %v522 = vpop.f32.mrb[0].mxu0
        %v523 = vpop.f32.mrb[0].mxu0
        %v524 = vadd.f32 0.0, %v523
        %v525 = vpop.f32.mrb[0].mxu0
        %526 = vdwg.mxu0
        %v527 = vpack.c.bf16 %v482, %v478
        %v528 = vpack.c.bf16 %v484, %v480
        %v529 = vpack.c.bf16 %v524, %v521
        %v530 = vld [vmem:[%s1] sm:$0xf]
        %s531 = scalar_lea.vmem %s1, 8
        %v532 = vld [vmem:[%s531] sm:$0xf]
        %vm533 = vcmask 130048
        %v535 = vsel %vm533, %v532, 0
        %537 = vmatprep.subr.bf16.mxu0 0
        %538 = vmatpush1.bf16.msra.mxu0 %v528
        %539 = vmatprep.subr.bf16.mxu0 0
        %540 = vmatpush1.bf16.msra.mxu0 0
        %541 = vmatprep.subr.bf16.mxu0 0
        %542 = vmatpush1.bf16.msra.mxu0 0
        %543 = vmatprep.subr.bf16.mxu0 0
        %544 = vmatpush1.bf16.msra.mxu0 0
        %545 = vmatprep.subr.bf16.mxu0 0
        %546 = vmatpush1.bf16.msra.mxu0 0
        %547 = vmatprep.subr.bf16.mxu0 0
        %548 = vmatpush1.bf16.msra.mxu0 0
        %549 = vmatprep.subr.bf16.mxu0 0
        %550 = vmatpush1.bf16.msra.mxu0 0
        %551 = vmatprep.subr.bf16.mxu0 0
        %552 = vmatpush1.bf16.msra.mxu0 0
        %553 = vmatprep.subr.bf16.mxu0 0
        %554 = vmatpush1.bf16.msra.mxu0 0
        %555 = vmatprep.subr.bf16.mxu0 0
        %556 = vmatpush1.bf16.msra.mxu0 0
        %557 = vmatprep.subr.bf16.mxu0 0
        %558 = vmatpush1.bf16.msra.mxu0 0
        %559 = vmatprep.subr.bf16.mxu0 0
        %560 = vmatpush1.bf16.msra.mxu0 0
        %561 = vmatprep.subr.bf16.mxu0 0
        %562 = vmatpush1.bf16.msra.mxu0 0
        %563 = vmatprep.subr.bf16.mxu0 0
        %564 = vmatpush1.bf16.msra.mxu0 0
        %565 = vmatprep.subr.bf16.mxu0 0
        %566 = vmatpush1.bf16.msra.mxu0 0
        %567 = vmatprep.subr.bf16.mxu0 0
        %568 = vmatpush1.bf16.msra.mxu0 0
        %569 = vmatprep.mubr.bf16.mxu0 0
        %570 = vmatmul.mubr.bf16.gmra.mrb[0].mxu0 %v535
        %v571 = vpop.f32.mrb[0].mxu0
        %v572 = vadd.f32 0.0, %v571
        %v573 = vpop.f32.mrb[0].mxu0
        %v574 = vpop.f32.mrb[0].mxu0
        %v575 = vpop.f32.mrb[0].mxu0
        %576 = vdwg.mxu0
        %v578 = vsel %vm533, %v530, 0
        %580 = vmatprep.subr.bf16.mxu0 0
        %581 = vmatpush1.bf16.msra.mxu0 %v527
        %582 = vmatprep.subr.bf16.mxu0 0
        %583 = vmatpush1.bf16.msra.mxu0 0
        %584 = vmatprep.subr.bf16.mxu0 0
        %585 = vmatpush1.bf16.msra.mxu0 0
        %586 = vmatprep.subr.bf16.mxu0 0
        %587 = vmatpush1.bf16.msra.mxu0 0
        %588 = vmatprep.subr.bf16.mxu0 0
        %589 = vmatpush1.bf16.msra.mxu0 0
        %590 = vmatprep.subr.bf16.mxu0 0
        %591 = vmatpush1.bf16.msra.mxu0 0
        %592 = vmatprep.subr.bf16.mxu0 0
        %593 = vmatpush1.bf16.msra.mxu0 0
        %594 = vmatprep.subr.bf16.mxu0 0
        %595 = vmatpush1.bf16.msra.mxu0 0
        %596 = vmatprep.subr.bf16.mxu0 0
        %597 = vmatpush1.bf16.msra.mxu0 0
        %598 = vmatprep.subr.bf16.mxu0 0
        %599 = vmatpush1.bf16.msra.mxu0 0
        %600 = vmatprep.subr.bf16.mxu0 0
        %601 = vmatpush1.bf16.msra.mxu0 0
        %602 = vmatprep.subr.bf16.mxu0 0
        %603 = vmatpush1.bf16.msra.mxu0 0
        %604 = vmatprep.subr.bf16.mxu0 0
        %605 = vmatpush1.bf16.msra.mxu0 0
        %606 = vmatprep.subr.bf16.mxu0 0
        %607 = vmatpush1.bf16.msra.mxu0 0
        %608 = vmatprep.subr.bf16.mxu0 0
        %609 = vmatpush1.bf16.msra.mxu0 0
        %610 = vmatprep.subr.bf16.mxu0 0
        %611 = vmatpush1.bf16.msra.mxu0 0
        %612 = vmatprep.mubr.bf16.mxu0 0
        %613 = vmatmul.mubr.bf16.gmra.mrb[0].mxu0 %v578
        %v614 = vpop.f32.mrb[0].mxu0
        %v615 = vadd.f32 %v572, %v614
        %v616 = vpop.f32.mrb[0].mxu0
        %v617 = vpop.f32.mrb[0].mxu0
        %v618 = vpop.f32.mrb[0].mxu0
        %619 = vdwg.mxu0
        %s620 = scalar_lea.vmem %s1, 16
        %v621 = vld [vmem:[%s620] sm:$0xf]
        %v623 = vsel %vm533, %v621, 0
        %625 = vmatprep.subr.bf16.mxu0 0
        %626 = vmatpush1.bf16.msra.mxu0 %v529
        %627 = vmatprep.subr.bf16.mxu0 0
        %628 = vmatpush1.bf16.msra.mxu0 0
        %629 = vmatprep.subr.bf16.mxu0 0
        %630 = vmatpush1.bf16.msra.mxu0 0
        %631 = vmatprep.subr.bf16.mxu0 0
        %632 = vmatpush1.bf16.msra.mxu0 0
        %633 = vmatprep.subr.bf16.mxu0 0
        %634 = vmatpush1.bf16.msra.mxu0 0
        %635 = vmatprep.subr.bf16.mxu0 0
        %636 = vmatpush1.bf16.msra.mxu0 0
        %637 = vmatprep.subr.bf16.mxu0 0
        %638 = vmatpush1.bf16.msra.mxu0 0
        %639 = vmatprep.subr.bf16.mxu0 0
        %640 = vmatpush1.bf16.msra.mxu0 0
        %641 = vmatprep.subr.bf16.mxu0 0
        %642 = vmatpush1.bf16.msra.mxu0 0
        %643 = vmatprep.subr.bf16.mxu0 0
        %644 = vmatpush1.bf16.msra.mxu0 0
        %645 = vmatprep.subr.bf16.mxu0 0
        %646 = vmatpush1.bf16.msra.mxu0 0
        %647 = vmatprep.subr.bf16.mxu0 0
        %648 = vmatpush1.bf16.msra.mxu0 0
        %649 = vmatprep.subr.bf16.mxu0 0
        %650 = vmatpush1.bf16.msra.mxu0 0
        %651 = vmatprep.subr.bf16.mxu0 0
        %652 = vmatpush1.bf16.msra.mxu0 0
        %653 = vmatprep.subr.bf16.mxu0 0
        %654 = vmatpush1.bf16.msra.mxu0 0
        %655 = vmatprep.subr.bf16.mxu0 0
        %656 = vmatpush1.bf16.msra.mxu0 0
        %657 = vmatprep.mubr.bf16.mxu0 0
        %658 = vmatmul.mubr.bf16.gmra.mrb[0].mxu0 %v623
        %v659 = vpop.f32.mrb[0].mxu0
        %v660 = vadd.f32 0.0, %v659
        %v661 = vpop.f32.mrb[0].mxu0
        %v662 = vpop.f32.mrb[0].mxu0
        %v663 = vpop.f32.mrb[0].mxu0
        %664 = vdwg.mxu0
        %v665 = vadd.f32 %v615, %v660
        %v666 = vld [vmem:[%s3] ss:$0 sm:$0xff]
        %v667 = vadd.f32 %v665, %v666
        %v668 = vmax.f32 %v667, 0.0
        %s669 = scalar_lea.vmem [#allocation2], 192
        %v670 = vld [vmem:[%s669] sm:$0xff]
        %v671 = vld [vmem:[%s669 + $0x8] sm:$0xf]
        %v672 = vld [vmem:[%s669 + $0xc] sm:$0xff]
        %v673 = vld [vmem:[%s669 + $0x14] sm:$0xf]
        %v674 = vld [vmem:[%s669 + $0x18] sm:$0xff]
        %v675 = vld [vmem:[%s669 + $0x20] sm:$0xf]
        %v676 = vld [vmem:[%s669 + $0x24] sm:$0xff]
        %v677 = vld [vmem:[%s669 + $0x2c] sm:$0xf]
        %v678 = vld [vmem:[%s669 + $0x30] sm:$0xff]
        %v679 = vld [vmem:[%s669 + $0x38] sm:$0xf]
        %v680 = vld [vmem:[%s669 + $0x3c] sm:$0xff]
        %v681 = vld [vmem:[%s669 + $0x44] sm:$0xf]
        %v682 = vld [vmem:[%s669 + $0x48] sm:$0xff]
        %v683 = vld [vmem:[%s669 + $0x50] sm:$0xf]
        %v684 = vld [vmem:[%s669 + $0x54] sm:$0xff]
        %v685 = vld [vmem:[%s669 + $0x5c] sm:$0xf]
        %v686 = vld [vmem:[%s669 + $0x60] sm:$0xff]
        %v687 = vld [vmem:[%s669 + $0x68] sm:$0xf]
        %v688 = vld [vmem:[%s669 + $0x6c] sm:$0xff]
        %v689 = vld [vmem:[%s669 + $0x74] sm:$0xf]
        %v690 = vld [vmem:[%s669 + $0x78] sm:$0xff]
        %v691 = vld [vmem:[%s669 + $0x80] sm:$0xf]
        %v692 = vld [vmem:[%s669 + $0x84] sm:$0xff]
        %v693 = vld [vmem:[%s669 + $0x8c] sm:$0xf]
        %v694 = vld [vmem:[%s669 + $0x90] sm:$0xff]
        %v695 = vld [vmem:[%s669 + $0x98] sm:$0xf]
        %v696 = vld [vmem:[%s669 + $0x9c] sm:$0xff]
        %v697 = vld [vmem:[%s669 + $0xa4] sm:$0xf]
        %v698 = vld [vmem:[%s669 + $0xa8] sm:$0xff]
        %v699 = vld [vmem:[%s669 + $0xb0] sm:$0xf]
        %v700 = vld [vmem:[%s669 + $0xb4] sm:$0xff]
        %v701 = vld [vmem:[%s669 + $0xbc] sm:$0xf]
        %v702 = vpack.c.bf16 %v668, %v668
        %v735 = vunpack.c.l.b16 %v670
        %v736 = vunpack.c.h.b16 %v670
        %v737 = vunpack.c.l.b16 %v671
        %v738 = vunpack.c.l.b16 %v672
        %v739 = vunpack.c.h.b16 %v672
        %v740 = vunpack.c.l.b16 %v673
        %v741 = vunpack.c.l.b16 %v674
        %v742 = vunpack.c.h.b16 %v674
        %v743 = vunpack.c.l.b16 %v675
        %v744 = vunpack.c.l.b16 %v676
        %v745 = vunpack.c.h.b16 %v676
        %v746 = vunpack.c.l.b16 %v677
        %v747 = vunpack.c.l.b16 %v678
        %v748 = vunpack.c.h.b16 %v678
        %v749 = vunpack.c.l.b16 %v679
        %v750 = vunpack.c.l.b16 %v680
        %v751 = vunpack.c.h.b16 %v680
        %v752 = vunpack.c.l.b16 %v681
        %v753 = vunpack.c.l.b16 %v682
        %v754 = vunpack.c.h.b16 %v682
        %v755 = vunpack.c.l.b16 %v683
        %v756 = vunpack.c.l.b16 %v684
        %v757 = vunpack.c.h.b16 %v684
        %v758 = vunpack.c.l.b16 %v685
        %v759 = vunpack.c.l.b16 %v686
        %v760 = vunpack.c.h.b16 %v686
        %v761 = vunpack.c.l.b16 %v687
        %v762 = vunpack.c.l.b16 %v688
        %v763 = vunpack.c.h.b16 %v688
        %v764 = vunpack.c.l.b16 %v689
        %v765 = vunpack.c.l.b16 %v690
        %v766 = vunpack.c.h.b16 %v690
        %v767 = vunpack.c.l.b16 %v691
        %v768 = vunpack.c.l.b16 %v692
        %v769 = vunpack.c.h.b16 %v692
        %v770 = vunpack.c.l.b16 %v693
        %v771 = vunpack.c.l.b16 %v694
        %v772 = vunpack.c.h.b16 %v694
        %v773 = vunpack.c.l.b16 %v695
        %v774 = vunpack.c.l.b16 %v696
        %v775 = vunpack.c.h.b16 %v696
        %v776 = vunpack.c.l.b16 %v697
        %v777 = vunpack.c.l.b16 %v698
        %v778 = vunpack.c.h.b16 %v698
        %v779 = vunpack.c.l.b16 %v699
        %v780 = vunpack.c.l.b16 %v700
        %v781 = vunpack.c.h.b16 %v700
        %v782 = vunpack.c.l.b16 %v701
        %v783 = vpack.c.b16 %v738, %v735
        %v784 = vpack.c.b16 %v739, %v736
        %v785 = vpack.c.b16 %v740, %v737
        %v786 = vpack.c.b16 %v744, %v741
        %v787 = vpack.c.b16 %v745, %v742
        %v788 = vpack.c.b16 %v746, %v743
        %v789 = vpack.c.b16 %v750, %v747
        %v790 = vpack.c.b16 %v751, %v748
        %v791 = vpack.c.b16 %v752, %v749
        %v792 = vpack.c.b16 %v756, %v753
        %v793 = vpack.c.b16 %v757, %v754
        %v794 = vpack.c.b16 %v758, %v755
        %v795 = vpack.c.b16 %v762, %v759
        %v796 = vpack.c.b16 %v763, %v760
        %v797 = vpack.c.b16 %v764, %v761
        %v798 = vpack.c.b16 %v768, %v765
        %v799 = vpack.c.b16 %v769, %v766
        %v800 = vpack.c.b16 %v770, %v767
        %v801 = vpack.c.b16 %v774, %v771
        %v802 = vpack.c.b16 %v775, %v772
        %v803 = vpack.c.b16 %v776, %v773
        %v804 = vpack.c.b16 %v780, %v777
        %v805 = vpack.c.b16 %v781, %v778
        %v806 = vpack.c.b16 %v782, %v779
        %831 = vmatprep.subr.bf16.mxu0 %v784
        %832 = vmatpush1.bf16.msra.mxu0 %v783
        %833 = vmatprep.subr.bf16.mxu0 %v787
        %834 = vmatpush1.bf16.msra.mxu0 %v786
        %835 = vmatprep.subr.bf16.mxu0 %v790
        %836 = vmatpush1.bf16.msra.mxu0 %v789
        %837 = vmatprep.subr.bf16.mxu0 %v793
        %838 = vmatpush1.bf16.msra.mxu0 %v792
        %839 = vmatprep.subr.bf16.mxu0 %v796
        %840 = vmatpush1.bf16.msra.mxu0 %v795
        %841 = vmatprep.subr.bf16.mxu0 %v799
        %842 = vmatpush1.bf16.msra.mxu0 %v798
        %843 = vmatprep.subr.bf16.mxu0 %v802
        %844 = vmatpush1.bf16.msra.mxu0 %v801
        %845 = vmatprep.subr.bf16.mxu0 %v805
        %846 = vmatpush1.bf16.msra.mxu0 %v804
        %847 = vmatprep.subr.bf16.mxu0 0
        %848 = vmatpush1.bf16.msra.mxu0 0
        %849 = vmatprep.subr.bf16.mxu0 0
        %850 = vmatpush1.bf16.msra.mxu0 0
        %851 = vmatprep.subr.bf16.mxu0 0
        %852 = vmatpush1.bf16.msra.mxu0 0
        %853 = vmatprep.subr.bf16.mxu0 0
        %854 = vmatpush1.bf16.msra.mxu0 0
        %855 = vmatprep.subr.bf16.mxu0 0
        %856 = vmatpush1.bf16.msra.mxu0 0
        %857 = vmatprep.subr.bf16.mxu0 0
        %858 = vmatpush1.bf16.msra.mxu0 0
        %859 = vmatprep.subr.bf16.mxu0 0
        %860 = vmatpush1.bf16.msra.mxu0 0
        %861 = vmatprep.subr.bf16.mxu0 0
        %862 = vmatpush1.bf16.msra.mxu0 0
        %863 = vmatprep.mubr.bf16.mxu0 0
        %864 = vmatmul.mubr.bf16.gmra.mrb[0].mxu0 %v702
        %v865 = vpop.f32.mrb[0].mxu0
        %v866 = vadd.f32 0.0, %v865
        %v867 = vpop.f32.mrb[0].mxu0
        %v868 = vadd.f32 0.0, %v867
        %v869 = vpop.f32.mrb[0].mxu0
        %v870 = vpop.f32.mrb[0].mxu0
        %871 = vdwg.mxu0
        %872 = vmatprep.subr.bf16.mxu0 0
        %873 = vmatpush1.bf16.msra.mxu0 %v785
        %874 = vmatprep.subr.bf16.mxu0 0
        %875 = vmatpush1.bf16.msra.mxu0 %v788
        %876 = vmatprep.subr.bf16.mxu0 0
        %877 = vmatpush1.bf16.msra.mxu0 %v791
        %878 = vmatprep.subr.bf16.mxu0 0
        %879 = vmatpush1.bf16.msra.mxu0 %v794
        %880 = vmatprep.subr.bf16.mxu0 0
        %881 = vmatpush1.bf16.msra.mxu0 %v797
        %882 = vmatprep.subr.bf16.mxu0 0
        %883 = vmatpush1.bf16.msra.mxu0 %v800
        %884 = vmatprep.subr.bf16.mxu0 0
        %885 = vmatpush1.bf16.msra.mxu0 %v803
        %886 = vmatprep.subr.bf16.mxu0 0
        %887 = vmatpush1.bf16.msra.mxu0 %v806
        %888 = vmatprep.subr.bf16.mxu0 0
        %889 = vmatpush1.bf16.msra.mxu0 0
        %890 = vmatprep.subr.bf16.mxu0 0
        %891 = vmatpush1.bf16.msra.mxu0 0
        %892 = vmatprep.subr.bf16.mxu0 0
        %893 = vmatpush1.bf16.msra.mxu0 0
        %894 = vmatprep.subr.bf16.mxu0 0
        %895 = vmatpush1.bf16.msra.mxu0 0
        %896 = vmatprep.subr.bf16.mxu0 0
        %897 = vmatpush1.bf16.msra.mxu0 0
        %898 = vmatprep.subr.bf16.mxu0 0
        %899 = vmatpush1.bf16.msra.mxu0 0
        %900 = vmatprep.subr.bf16.mxu0 0
        %901 = vmatpush1.bf16.msra.mxu0 0
        %902 = vmatprep.subr.bf16.mxu0 0
        %903 = vmatpush1.bf16.msra.mxu0 0
        %904 = vmatprep.mubr.bf16.mxu0 0
        %905 = vmatmul.mubr.bf16.gmra.mrb[0].mxu0 %v702
        %v906 = vpop.f32.mrb[0].mxu0
        %v907 = vadd.f32 0.0, %v906
        %v908 = vpop.f32.mrb[0].mxu0
        %v909 = vpop.f32.mrb[0].mxu0
        %v910 = vpop.f32.mrb[0].mxu0
        %911 = vdwg.mxu0
        %v912 = vpack.c.bf16 %v866, %v866
        %v913 = vpack.c.bf16 %v868, %v868
        %v914 = vpack.c.bf16 %v907, %v907
        %s915 = scalar_lea.vmem %s1, 24
        %v916 = vld [vmem:[%s915] sm:$0x3]
        %s917 = scalar_lea.vmem %s1, 32
        %v918 = vld [vmem:[%s917] sm:$0x3]
        %vm919 = vcmask 64512
        %v921 = vsel %vm919, %v918, 0
        %vm923 = vcmask 1043456
        %v925 = vsel %vm923, %v913, 0
        %927 = vmatprep.subr.bf16.mxu0 0
        %928 = vmatpush1.bf16.msra.mxu0 %v925
        %929 = vmatprep.subr.bf16.mxu0 0
        %930 = vmatpush1.bf16.msra.mxu0 0
        %931 = vmatprep.subr.bf16.mxu0 0
        %932 = vmatpush1.bf16.msra.mxu0 0
        %933 = vmatprep.subr.bf16.mxu0 0
        %934 = vmatpush1.bf16.msra.mxu0 0
        %935 = vmatprep.subr.bf16.mxu0 0
        %936 = vmatpush1.bf16.msra.mxu0 0
        %937 = vmatprep.subr.bf16.mxu0 0
        %938 = vmatpush1.bf16.msra.mxu0 0
        %939 = vmatprep.subr.bf16.mxu0 0
        %940 = vmatpush1.bf16.msra.mxu0 0
        %941 = vmatprep.subr.bf16.mxu0 0
        %942 = vmatpush1.bf16.msra.mxu0 0
        %943 = vmatprep.subr.bf16.mxu0 0
        %944 = vmatpush1.bf16.msra.mxu0 0
        %945 = vmatprep.subr.bf16.mxu0 0
        %946 = vmatpush1.bf16.msra.mxu0 0
        %947 = vmatprep.subr.bf16.mxu0 0
        %948 = vmatpush1.bf16.msra.mxu0 0
        %949 = vmatprep.subr.bf16.mxu0 0
        %950 = vmatpush1.bf16.msra.mxu0 0
        %951 = vmatprep.subr.bf16.mxu0 0
        %952 = vmatpush1.bf16.msra.mxu0 0
        %953 = vmatprep.subr.bf16.mxu0 0
        %954 = vmatpush1.bf16.msra.mxu0 0
        %955 = vmatprep.subr.bf16.mxu0 0
        %956 = vmatpush1.bf16.msra.mxu0 0
        %957 = vmatprep.subr.bf16.mxu0 0
        %958 = vmatpush1.bf16.msra.mxu0 0
        %959 = vmatprep.mubr.bf16.mxu0 0
        %960 = vmatmul.mubr.bf16.gmra.mrb[0].mxu0 %v921
        %v961 = vpop.f32.mrb[0].mxu0
        %v962 = vadd.f32 0.0, %v961
        %v963 = vpop.f32.mrb[0].mxu0
        %v964 = vpop.f32.mrb[0].mxu0
        %v965 = vpop.f32.mrb[0].mxu0
        %966 = vdwg.mxu0
        %v968 = vsel %vm919, %v916, 0
        %v971 = vsel %vm923, %v912, 0
        %973 = vmatprep.subr.bf16.mxu0 0
        %974 = vmatpush1.bf16.msra.mxu0 %v971
        %975 = vmatprep.subr.bf16.mxu0 0
        %976 = vmatpush1.bf16.msra.mxu0 0
        %977 = vmatprep.subr.bf16.mxu0 0
        %978 = vmatpush1.bf16.msra.mxu0 0
        %979 = vmatprep.subr.bf16.mxu0 0
        %980 = vmatpush1.bf16.msra.mxu0 0
        %981 = vmatprep.subr.bf16.mxu0 0
        %982 = vmatpush1.bf16.msra.mxu0 0
        %983 = vmatprep.subr.bf16.mxu0 0
        %984 = vmatpush1.bf16.msra.mxu0 0
        %985 = vmatprep.subr.bf16.mxu0 0
        %986 = vmatpush1.bf16.msra.mxu0 0
        %987 = vmatprep.subr.bf16.mxu0 0
        %988 = vmatpush1.bf16.msra.mxu0 0
        %989 = vmatprep.subr.bf16.mxu0 0
        %990 = vmatpush1.bf16.msra.mxu0 0
        %991 = vmatprep.subr.bf16.mxu0 0
        %992 = vmatpush1.bf16.msra.mxu0 0
        %993 = vmatprep.subr.bf16.mxu0 0
        %994 = vmatpush1.bf16.msra.mxu0 0
        %995 = vmatprep.subr.bf16.mxu0 0
        %996 = vmatpush1.bf16.msra.mxu0 0
        %997 = vmatprep.subr.bf16.mxu0 0
        %998 = vmatpush1.bf16.msra.mxu0 0
        %999 = vmatprep.subr.bf16.mxu0 0
        %1000 = vmatpush1.bf16.msra.mxu0 0
        %1001 = vmatprep.subr.bf16.mxu0 0
        %1002 = vmatpush1.bf16.msra.mxu0 0
        %1003 = vmatprep.subr.bf16.mxu0 0
        %1004 = vmatpush1.bf16.msra.mxu0 0
        %1005 = vmatprep.mubr.bf16.mxu0 0
        %1006 = vmatmul.mubr.bf16.gmra.mrb[0].mxu0 %v968
        %v1007 = vpop.f32.mrb[0].mxu0
        %v1008 = vadd.f32 %v962, %v1007
        %v1009 = vpop.f32.mrb[0].mxu0
        %v1010 = vpop.f32.mrb[0].mxu0
        %v1011 = vpop.f32.mrb[0].mxu0
        %1012 = vdwg.mxu0
        %s1013 = scalar_lea.vmem %s1, 40
        %v1014 = vld [vmem:[%s1013] sm:$0x3]
        %v1016 = vsel %vm919, %v1014, 0
        %v1019 = vsel %vm923, %v914, 0
        %1021 = vmatprep.subr.bf16.mxu0 0
        %1022 = vmatpush1.bf16.msra.mxu0 %v1019
        %1023 = vmatprep.subr.bf16.mxu0 0
        %1024 = vmatpush1.bf16.msra.mxu0 0
        %1025 = vmatprep.subr.bf16.mxu0 0
        %1026 = vmatpush1.bf16.msra.mxu0 0
        %1027 = vmatprep.subr.bf16.mxu0 0
        %1028 = vmatpush1.bf16.msra.mxu0 0
        %1029 = vmatprep.subr.bf16.mxu0 0
        %1030 = vmatpush1.bf16.msra.mxu0 0
        %1031 = vmatprep.subr.bf16.mxu0 0
        %1032 = vmatpush1.bf16.msra.mxu0 0
        %1033 = vmatprep.subr.bf16.mxu0 0
        %1034 = vmatpush1.bf16.msra.mxu0 0
        %1035 = vmatprep.subr.bf16.mxu0 0
        %1036 = vmatpush1.bf16.msra.mxu0 0
        %1037 = vmatprep.subr.bf16.mxu0 0
        %1038 = vmatpush1.bf16.msra.mxu0 0
        %1039 = vmatprep.subr.bf16.mxu0 0
        %1040 = vmatpush1.bf16.msra.mxu0 0
        %1041 = vmatprep.subr.bf16.mxu0 0
        %1042 = vmatpush1.bf16.msra.mxu0 0
        %1043 = vmatprep.subr.bf16.mxu0 0
        %1044 = vmatpush1.bf16.msra.mxu0 0
        %1045 = vmatprep.subr.bf16.mxu0 0
        %1046 = vmatpush1.bf16.msra.mxu0 0
        %1047 = vmatprep.subr.bf16.mxu0 0
        %1048 = vmatpush1.bf16.msra.mxu0 0
        %1049 = vmatprep.subr.bf16.mxu0 0
        %1050 = vmatpush1.bf16.msra.mxu0 0
        %1051 = vmatprep.subr.bf16.mxu0 0
        %1052 = vmatpush1.bf16.msra.mxu0 0
        %1053 = vmatprep.mubr.bf16.mxu0 0
        %1054 = vmatmul.mubr.bf16.gmra.mrb[0].mxu0 %v1016
        %v1055 = vpop.f32.mrb[0].mxu0
        %v1056 = vadd.f32 0.0, %v1055
        %v1057 = vpop.f32.mrb[0].mxu0
        %v1058 = vpop.f32.mrb[0].mxu0
        %v1059 = vpop.f32.mrb[0].mxu0
        %1060 = vdwg.mxu0
        %v1061 = vadd.f32 %v1008, %v1056
        %v1062 = vld [vmem:[%s3 + $0x1] ss:$0 sm:$0xff]
        %v1063 = vadd.f32 %v1061, %v1062
        %v1065 = vunpack.c.l.s4 1935823168
        %v1066 = vunpack.c.0.s8 %v1065
        %v1067 = vlaneseq
        %v1068 = vshrl.u32 %v1067, 7
        %v1069 = vsub.s32 %v1066, %v1068
        %v1070 = vrot.slane %v1063, %v1069
        %v1072 = vlaneseq
        %v1073 = vshrl.u32 %v1072, 7
        %v1074 = vsub.s32 0, %v1073
        %v1075 = vrot.slane %v1070, %v1074
        %v1076 = vlaneseq
        %v1077 = vshrl.u32 %v1076, 7
        %v1078 = vsub.s32 2, %v1077
        %v1079 = vrot.slane %v1070, %v1078
        %v1082 = vpack.c.bf16 %v1075, %v1075
        %v1083 = vpack.c.bf16 %v1079, %v1079
        %v1084 = vld [vmem:[%s4] sm:$0xf]
        %v1085 = vld [vmem:[%s4 + $0x4] sm:$0xf]
        %v1086 = vld [vmem:[%s4 + $0x8] sm:$0xf]
        %v1087 = vld [vmem:[%s4 + $0xc] sm:$0xf]
        %v1088 = vld [vmem:[%s4 + $0x10] sm:$0xf]
        %v1089 = vld [vmem:[%s4 + $0x14] sm:$0xf]
        %v1090 = vld [vmem:[%s4 + $0x18] sm:$0xf]
        %v1091 = vld [vmem:[%s4 + $0x1c] sm:$0xf]
        %v1092 = vld [vmem:[%s4 + $0x20] sm:$0xf]
        %v1093 = vld [vmem:[%s4 + $0x24] sm:$0xf]
        %v1094 = vld [vmem:[%s4 + $0x28] sm:$0xf]
        %v1095 = vld [vmem:[%s4 + $0x2c] sm:$0xf]
        %v1096 = vld [vmem:[%s4 + $0x30] sm:$0xf]
        %v1097 = vld [vmem:[%s4 + $0x34] sm:$0xf]
        %v1098 = vld [vmem:[%s4 + $0x38] sm:$0xf]
        %v1099 = vld [vmem:[%s4 + $0x3c] sm:$0xf]
        %v1100 = vld [vmem:[%s4 + $0x40] sm:$0xf]
        %v1101 = vld [vmem:[%s4 + $0x44] sm:$0xf]
        %v1102 = vld [vmem:[%s4 + $0x48] sm:$0xf]
        %v1103 = vld [vmem:[%s4 + $0x4c] sm:$0xf]
        %v1104 = vld [vmem:[%s4 + $0x50] sm:$0xf]
        %v1105 = vld [vmem:[%s4 + $0x54] sm:$0xf]
        %v1106 = vld [vmem:[%s4 + $0x58] sm:$0xf]
        %v1107 = vld [vmem:[%s4 + $0x5c] sm:$0xf]
        %v1108 = vld [vmem:[%s4 + $0x60] sm:$0xf]
        %v1109 = vld [vmem:[%s4 + $0x64] sm:$0xf]
        %v1110 = vld [vmem:[%s4 + $0x68] sm:$0xf]
        %v1111 = vld [vmem:[%s4 + $0x6c] sm:$0xf]
        %v1112 = vld [vmem:[%s4 + $0x70] sm:$0xf]
        %v1113 = vld [vmem:[%s4 + $0x74] sm:$0xf]
        %v1114 = vld [vmem:[%s4 + $0x78] sm:$0xf]
        %v1115 = vld [vmem:[%s4 + $0x7c] sm:$0xf]
        %v1116 = vld [vmem:[%s3 + $0x4] ss:$0 sm:$0xff]
        %v1149 = vunpack.c.l.b16 %v1084
        %v1150 = vunpack.c.l.b16 %v1085
        %v1151 = vunpack.c.l.b16 %v1086
        %v1152 = vunpack.c.l.b16 %v1087
        %v1153 = vunpack.c.l.b16 %v1088
        %v1154 = vunpack.c.l.b16 %v1089
        %v1155 = vunpack.c.l.b16 %v1090
        %v1156 = vunpack.c.l.b16 %v1091
        %v1157 = vunpack.c.l.b16 %v1092
        %v1158 = vunpack.c.l.b16 %v1093
        %v1159 = vunpack.c.l.b16 %v1094
        %v1160 = vunpack.c.l.b16 %v1095
        %v1161 = vunpack.c.l.b16 %v1096
        %v1162 = vunpack.c.l.b16 %v1097
        %v1163 = vunpack.c.l.b16 %v1098
        %v1164 = vunpack.c.l.b16 %v1099
        %v1165 = vunpack.c.l.b16 %v1100
        %v1166 = vunpack.c.l.b16 %v1101
        %v1167 = vunpack.c.l.b16 %v1102
        %v1168 = vunpack.c.l.b16 %v1103
        %v1169 = vunpack.c.l.b16 %v1104
        %v1170 = vunpack.c.l.b16 %v1105
        %v1171 = vunpack.c.l.b16 %v1106
        %v1172 = vunpack.c.l.b16 %v1107
        %v1173 = vunpack.c.l.b16 %v1108
        %v1174 = vunpack.c.l.b16 %v1109
        %v1175 = vunpack.c.l.b16 %v1110
        %v1176 = vunpack.c.l.b16 %v1111
        %v1177 = vunpack.c.l.b16 %v1112
        %v1178 = vunpack.c.l.b16 %v1113
        %v1179 = vunpack.c.l.b16 %v1114
        %v1180 = vunpack.c.l.b16 %v1115
        %v1181 = vpack.c.b16 %v1150, %v1149
        %v1182 = vpack.c.b16 %v1152, %v1151
        %v1183 = vpack.c.b16 %v1154, %v1153
        %v1184 = vpack.c.b16 %v1156, %v1155
        %v1185 = vpack.c.b16 %v1158, %v1157
        %v1186 = vpack.c.b16 %v1160, %v1159
        %v1187 = vpack.c.b16 %v1162, %v1161
        %v1188 = vpack.c.b16 %v1164, %v1163
        %v1189 = vpack.c.b16 %v1166, %v1165
        %v1190 = vpack.c.b16 %v1168, %v1167
        %v1191 = vpack.c.b16 %v1170, %v1169
        %v1192 = vpack.c.b16 %v1172, %v1171
        %v1193 = vpack.c.b16 %v1174, %v1173
        %v1194 = vpack.c.b16 %v1176, %v1175
        %v1195 = vpack.c.b16 %v1178, %v1177
        %v1196 = vpack.c.b16 %v1180, %v1179
        %1213 = vmatprep.subr.bf16.mxu0 0
        %1214 = vmatpush1.bf16.msra.mxu0 %v1181
        %1215 = vmatprep.subr.bf16.mxu0 0
        %1216 = vmatpush1.bf16.msra.mxu0 %v1182
        %1217 = vmatprep.subr.bf16.mxu0 0
        %1218 = vmatpush1.bf16.msra.mxu0 %v1183
        %1219 = vmatprep.subr.bf16.mxu0 0
        %1220 = vmatpush1.bf16.msra.mxu0 %v1184
        %1221 = vmatprep.subr.bf16.mxu0 0
        %1222 = vmatpush1.bf16.msra.mxu0 %v1185
        %1223 = vmatprep.subr.bf16.mxu0 0
        %1224 = vmatpush1.bf16.msra.mxu0 %v1186
        %1225 = vmatprep.subr.bf16.mxu0 0
        %1226 = vmatpush1.bf16.msra.mxu0 %v1187
        %1227 = vmatprep.subr.bf16.mxu0 0
        %1228 = vmatpush1.bf16.msra.mxu0 %v1188
        %1229 = vmatprep.subr.bf16.mxu0 0
        %1230 = vmatpush1.bf16.msra.mxu0 %v1189
        %1231 = vmatprep.subr.bf16.mxu0 0
        %1232 = vmatpush1.bf16.msra.mxu0 %v1190
        %1233 = vmatprep.subr.bf16.mxu0 0
        %1234 = vmatpush1.bf16.msra.mxu0 %v1191
        %1235 = vmatprep.subr.bf16.mxu0 0
        %1236 = vmatpush1.bf16.msra.mxu0 %v1192
        %1237 = vmatprep.subr.bf16.mxu0 0
        %1238 = vmatpush1.bf16.msra.mxu0 %v1193
        %1239 = vmatprep.subr.bf16.mxu0 0
        %1240 = vmatpush1.bf16.msra.mxu0 %v1194
        %1241 = vmatprep.subr.bf16.mxu0 0
        %1242 = vmatpush1.bf16.msra.mxu0 %v1195
        %1243 = vmatprep.subr.bf16.mxu0 0
        %1244 = vmatpush1.bf16.msra.mxu0 %v1196
        %1245 = vmatprep.mubr.bf16.mxu0 %v1083
        %1246 = vmatmul.mubr.bf16.gmra.mrb[0].mxu0 %v1082
        %v1247 = vpop.f32.mrb[0].mxu0
        %v1248 = vadd.f32 %v1116, %v1247
        %v1249 = vpop.f32.mrb[0].mxu0
        %v1250 = vpop.f32.mrb[0].mxu0
        %v1251 = vpop.f32.mrb[0].mxu0
        %1252 = vdwg.mxu0
        %v1253 = vmax.f32 %v1248, 0.0
        %v1254 = vpack.c.bf16 %v1253, %v1253
        %v1255 = vld [vmem:[#allocation4] sm:$0xff]
        %v1256 = vld [vmem:[#allocation4 + $0x8] sm:$0xff]
        %v1257 = vld [vmem:[#allocation4 + $0x10] sm:$0xff]
        %v1258 = vld [vmem:[#allocation4 + $0x18] sm:$0xff]
        %v1259 = vld [vmem:[#allocation4 + $0x20] sm:$0xff]
        %v1260 = vld [vmem:[#allocation4 + $0x28] sm:$0xff]
        %v1261 = vld [vmem:[#allocation4 + $0x30] sm:$0xff]
        %v1262 = vld [vmem:[#allocation4 + $0x38] sm:$0xff]
        %v1263 = vld [vmem:[#allocation4 + $0x40] sm:$0xff]
        %v1264 = vld [vmem:[#allocation4 + $0x48] sm:$0xff]
        %v1265 = vld [vmem:[#allocation4 + $0x50] sm:$0xff]
        %v1266 = vld [vmem:[#allocation4 + $0x58] sm:$0xff]
        %v1267 = vld [vmem:[#allocation4 + $0x60] sm:$0xff]
        %v1268 = vld [vmem:[#allocation4 + $0x68] sm:$0xff]
        %v1269 = vld [vmem:[#allocation4 + $0x70] sm:$0xff]
        %v1270 = vld [vmem:[#allocation4 + $0x78] sm:$0xff]
        %v1271 = vld [vmem:[#allocation4 + $0x80] sm:$0xff]
        %v1272 = vld [vmem:[#allocation4 + $0x88] sm:$0xff]
        %v1273 = vld [vmem:[#allocation4 + $0x90] sm:$0xff]
        %v1274 = vld [vmem:[#allocation4 + $0x98] sm:$0xff]
        %v1275 = vld [vmem:[#allocation4 + $0xa0] sm:$0xff]
        %v1276 = vld [vmem:[#allocation4 + $0xa8] sm:$0xff]
        %v1277 = vld [vmem:[#allocation4 + $0xb0] sm:$0xff]
        %v1278 = vld [vmem:[#allocation4 + $0xb8] sm:$0xff]
        %v1279 = vld [vmem:[#allocation4 + $0xc0] sm:$0xff]
        %v1280 = vld [vmem:[#allocation4 + $0xc8] sm:$0xff]
        %v1281 = vld [vmem:[#allocation4 + $0xd0] sm:$0xff]
        %v1282 = vld [vmem:[#allocation4 + $0xd8] sm:$0xff]
        %v1283 = vld [vmem:[#allocation4 + $0xe0] sm:$0xff]
        %v1284 = vld [vmem:[#allocation4 + $0xe8] sm:$0xff]
        %v1285 = vld [vmem:[#allocation4 + $0xf0] sm:$0xff]
        %v1286 = vld [vmem:[#allocation4 + $0xf8] sm:$0xff]
        %s1287 = scalar_lea.vmem %s3, 6
        %v1288 = vld [vmem:[%s1287] ss:$8 sm:$0xf]
        %v1321 = vunpack.c.l.b16 %v1255
        %v1322 = vunpack.c.h.b16 %v1255
        %v1323 = vunpack.c.l.b16 %v1256
        %v1324 = vunpack.c.h.b16 %v1256
        %v1325 = vunpack.c.l.b16 %v1257
        %v1326 = vunpack.c.h.b16 %v1257
        %v1327 = vunpack.c.l.b16 %v1258
        %v1328 = vunpack.c.h.b16 %v1258
        %v1329 = vunpack.c.l.b16 %v1259
        %v1330 = vunpack.c.h.b16 %v1259
        %v1331 = vunpack.c.l.b16 %v1260
        %v1332 = vunpack.c.h.b16 %v1260
        %v1333 = vunpack.c.l.b16 %v1261
        %v1334 = vunpack.c.h.b16 %v1261
        %v1335 = vunpack.c.l.b16 %v1262
        %v1336 = vunpack.c.h.b16 %v1262
        %v1337 = vunpack.c.l.b16 %v1263
        %v1338 = vunpack.c.h.b16 %v1263
        %v1339 = vunpack.c.l.b16 %v1264
        %v1340 = vunpack.c.h.b16 %v1264
        %v1341 = vunpack.c.l.b16 %v1265
        %v1342 = vunpack.c.h.b16 %v1265
        %v1343 = vunpack.c.l.b16 %v1266
        %v1344 = vunpack.c.h.b16 %v1266
        %v1345 = vunpack.c.l.b16 %v1267
        %v1346 = vunpack.c.h.b16 %v1267
        %v1347 = vunpack.c.l.b16 %v1268
        %v1348 = vunpack.c.h.b16 %v1268
        %v1349 = vunpack.c.l.b16 %v1269
        %v1350 = vunpack.c.h.b16 %v1269
        %v1351 = vunpack.c.l.b16 %v1270
        %v1352 = vunpack.c.h.b16 %v1270
        %v1353 = vunpack.c.l.b16 %v1271
        %v1354 = vunpack.c.h.b16 %v1271
        %v1355 = vunpack.c.l.b16 %v1272
        %v1356 = vunpack.c.h.b16 %v1272
        %v1357 = vunpack.c.l.b16 %v1273
        %v1358 = vunpack.c.h.b16 %v1273
        %v1359 = vunpack.c.l.b16 %v1274
        %v1360 = vunpack.c.h.b16 %v1274
        %v1361 = vunpack.c.l.b16 %v1275
        %v1362 = vunpack.c.h.b16 %v1275
        %v1363 = vunpack.c.l.b16 %v1276
        %v1364 = vunpack.c.h.b16 %v1276
        %v1365 = vunpack.c.l.b16 %v1277
        %v1366 = vunpack.c.h.b16 %v1277
        %v1367 = vunpack.c.l.b16 %v1278
        %v1368 = vunpack.c.h.b16 %v1278
        %v1369 = vunpack.c.l.b16 %v1279
        %v1370 = vunpack.c.h.b16 %v1279
        %v1371 = vunpack.c.l.b16 %v1280
        %v1372 = vunpack.c.h.b16 %v1280
        %v1373 = vunpack.c.l.b16 %v1281
        %v1374 = vunpack.c.h.b16 %v1281
        %v1375 = vunpack.c.l.b16 %v1282
        %v1376 = vunpack.c.h.b16 %v1282
        %v1377 = vunpack.c.l.b16 %v1283
        %v1378 = vunpack.c.h.b16 %v1283
        %v1379 = vunpack.c.l.b16 %v1284
        %v1380 = vunpack.c.h.b16 %v1284
        %v1381 = vunpack.c.l.b16 %v1285
        %v1382 = vunpack.c.h.b16 %v1285
        %v1383 = vunpack.c.l.b16 %v1286
        %v1384 = vunpack.c.h.b16 %v1286
        %v1385 = vpack.c.b16 %v1325, %v1321
        %v1386 = vpack.c.b16 %v1326, %v1322
        %v1387 = vpack.c.b16 %v1327, %v1323
        %v1388 = vpack.c.b16 %v1328, %v1324
        %v1389 = vpack.c.b16 %v1333, %v1329
        %v1390 = vpack.c.b16 %v1334, %v1330
        %v1391 = vpack.c.b16 %v1335, %v1331
        %v1392 = vpack.c.b16 %v1336, %v1332
        %v1393 = vpack.c.b16 %v1341, %v1337
        %v1394 = vpack.c.b16 %v1342, %v1338
        %v1395 = vpack.c.b16 %v1343, %v1339
        %v1396 = vpack.c.b16 %v1344, %v1340
        %v1397 = vpack.c.b16 %v1349, %v1345
        %v1398 = vpack.c.b16 %v1350, %v1346
        %v1399 = vpack.c.b16 %v1351, %v1347
        %v1400 = vpack.c.b16 %v1352, %v1348
        %v1401 = vpack.c.b16 %v1357, %v1353
        %v1402 = vpack.c.b16 %v1358, %v1354
        %v1403 = vpack.c.b16 %v1359, %v1355
        %v1404 = vpack.c.b16 %v1360, %v1356
        %v1405 = vpack.c.b16 %v1365, %v1361
        %v1406 = vpack.c.b16 %v1366, %v1362
        %v1407 = vpack.c.b16 %v1367, %v1363
        %v1408 = vpack.c.b16 %v1368, %v1364
        %v1409 = vpack.c.b16 %v1373, %v1369
        %v1410 = vpack.c.b16 %v1374, %v1370
        %v1411 = vpack.c.b16 %v1375, %v1371
        %v1412 = vpack.c.b16 %v1376, %v1372
        %v1413 = vpack.c.b16 %v1381, %v1377
        %v1414 = vpack.c.b16 %v1382, %v1378
        %v1415 = vpack.c.b16 %v1383, %v1379
        %v1416 = vpack.c.b16 %v1384, %v1380
        %v1450 = vlaneseq
        %v1451 = vshrl.u32 %v1450, 7
        %v1452 = vsub.s32 0, %v1451
        %v1453 = vrot.slane %v1288, %v1452
        %v1454 = vlaneseq
        %v1455 = vshrl.u32 %v1454, 7
        %v1456 = vsub.s32 1, %v1455
        %v1457 = vrot.slane %v1288, %v1456
        %v1458 = vlaneseq
        %v1459 = vshrl.u32 %v1458, 7
        %v1460 = vsub.s32 2, %v1459
        %v1461 = vrot.slane %v1288, %v1460
        %v1462 = vlaneseq
        %v1463 = vshrl.u32 %v1462, 7
        %v1464 = vsub.s32 3, %v1463
        %v1465 = vrot.slane %v1288, %v1464
        %1470 = vmatprep.subr.bf16.mxu0 %v1386
        %1471 = vmatpush1.bf16.msra.mxu0 %v1385
        %1472 = vmatprep.subr.bf16.mxu0 %v1390
        %1473 = vmatpush1.bf16.msra.mxu0 %v1389
        %1474 = vmatprep.subr.bf16.mxu0 %v1394
        %1475 = vmatpush1.bf16.msra.mxu0 %v1393
        %1476 = vmatprep.subr.bf16.mxu0 %v1398
        %1477 = vmatpush1.bf16.msra.mxu0 %v1397
        %1478 = vmatprep.subr.bf16.mxu0 %v1402
        %1479 = vmatpush1.bf16.msra.mxu0 %v1401
        %1480 = vmatprep.subr.bf16.mxu0 %v1406
        %1481 = vmatpush1.bf16.msra.mxu0 %v1405
        %1482 = vmatprep.subr.bf16.mxu0 %v1410
        %1483 = vmatpush1.bf16.msra.mxu0 %v1409
        %1484 = vmatprep.subr.bf16.mxu0 %v1414
        %1485 = vmatpush1.bf16.msra.mxu0 %v1413
        %1486 = vmatprep.subr.bf16.mxu0 0
        %1487 = vmatpush1.bf16.msra.mxu0 0
        %1488 = vmatprep.subr.bf16.mxu0 0
        %1489 = vmatpush1.bf16.msra.mxu0 0
        %1490 = vmatprep.subr.bf16.mxu0 0
        %1491 = vmatpush1.bf16.msra.mxu0 0
        %1492 = vmatprep.subr.bf16.mxu0 0
        %1493 = vmatpush1.bf16.msra.mxu0 0
        %1494 = vmatprep.subr.bf16.mxu0 0
        %1495 = vmatpush1.bf16.msra.mxu0 0
        %1496 = vmatprep.subr.bf16.mxu0 0
        %1497 = vmatpush1.bf16.msra.mxu0 0
        %1498 = vmatprep.subr.bf16.mxu0 0
        %1499 = vmatpush1.bf16.msra.mxu0 0
        %1500 = vmatprep.subr.bf16.mxu0 0
        %1501 = vmatpush1.bf16.msra.mxu0 0
        %1502 = vmatprep.mubr.bf16.mxu0 0
        %1503 = vmatmul.mubr.bf16.gmra.mrb[0].mxu0 %v1254
        %v1504 = vpop.f32.mrb[0].mxu0
        %v1505 = vadd.f32 %v1453, %v1504
        %v1506 = vpop.f32.mrb[0].mxu0
        %v1507 = vadd.f32 %v1457, %v1506
        %v1508 = vpop.f32.mrb[0].mxu0
        %v1509 = vpop.f32.mrb[0].mxu0
        %1510 = vdwg.mxu0
        %1511 = vmatprep.subr.bf16.mxu0 %v1388
        %1512 = vmatpush1.bf16.msra.mxu0 %v1387
        %1513 = vmatprep.subr.bf16.mxu0 %v1392
        %1514 = vmatpush1.bf16.msra.mxu0 %v1391
        %1515 = vmatprep.subr.bf16.mxu0 %v1396
        %1516 = vmatpush1.bf16.msra.mxu0 %v1395
        %1517 = vmatprep.subr.bf16.mxu0 %v1400
        %1518 = vmatpush1.bf16.msra.mxu0 %v1399
        %1519 = vmatprep.subr.bf16.mxu0 %v1404
        %1520 = vmatpush1.bf16.msra.mxu0 %v1403
        %1521 = vmatprep.subr.bf16.mxu0 %v1408
        %1522 = vmatpush1.bf16.msra.mxu0 %v1407
        %1523 = vmatprep.subr.bf16.mxu0 %v1412
        %1524 = vmatpush1.bf16.msra.mxu0 %v1411
        %1525 = vmatprep.subr.bf16.mxu0 %v1416
        %1526 = vmatpush1.bf16.msra.mxu0 %v1415
        %1527 = vmatprep.subr.bf16.mxu0 0
        %1528 = vmatpush1.bf16.msra.mxu0 0
        %1529 = vmatprep.subr.bf16.mxu0 0
        %1530 = vmatpush1.bf16.msra.mxu0 0
        %1531 = vmatprep.subr.bf16.mxu0 0
        %1532 = vmatpush1.bf16.msra.mxu0 0
        %1533 = vmatprep.subr.bf16.mxu0 0
        %1534 = vmatpush1.bf16.msra.mxu0 0
        %1535 = vmatprep.subr.bf16.mxu0 0
        %1536 = vmatpush1.bf16.msra.mxu0 0
        %1537 = vmatprep.subr.bf16.mxu0 0
        %1538 = vmatpush1.bf16.msra.mxu0 0
        %1539 = vmatprep.subr.bf16.mxu0 0
        %1540 = vmatpush1.bf16.msra.mxu0 0
        %1541 = vmatprep.subr.bf16.mxu0 0
        %1542 = vmatpush1.bf16.msra.mxu0 0
        %1543 = vmatprep.mubr.bf16.mxu0 0
        %1544 = vmatmul.mubr.bf16.gmra.mrb[0].mxu0 %v1254
        %v1545 = vpop.f32.mrb[0].mxu0
        %v1546 = vadd.f32 %v1461, %v1545
        %v1547 = vpop.f32.mrb[0].mxu0
        %v1548 = vadd.f32 %v1465, %v1547
        %v1549 = vpop.f32.mrb[0].mxu0
        %v1550 = vpop.f32.mrb[0].mxu0
        %1551 = vdwg.mxu0
        %v1552 = vtanh.pop %v1505
        %v1553 = vtanh.pop %v1507
        %v1554 = vmul.f32 %v1552, 1.442695
        %v1555 = vpow.pop %v1554
        %v1556 = vmul.f32 %v1553, 1.442695
        %v1557 = vpow.pop %v1556
        %v1558 = vrot.slane %v1070, 4
        %v1562 = vcombine.low %v1555, %v1557
        %v1564 = vunpack.c.l.s4 1983009808
        %v1565 = vunpack.c.0.s8 %v1564
        %v1566 = vlaneseq
        %v1567 = vshrl.u32 %v1566, 7
        %v1568 = vsub.s32 %v1565, %v1567
        %v1569 = vrot.slane %v1562, %v1568
        %v1571 = vmul.f32 %v1558, %v1569
        %v1574 = vcombine.low %v1546, %v1548
        %v1576 = vunpack.c.l.s4 1983009808
        %v1577 = vunpack.c.0.s8 %v1576
        %v1578 = vlaneseq
        %v1579 = vshrl.u32 %v1578, 7
        %v1580 = vsub.s32 %v1577, %v1579
        %v1581 = vrot.slane %v1574, %v1580
        %v1583 = vadd.f32 %v1571, %v1581
        %vm1584 = vcmask 1040384
        %v1585 = vsel %vm1584, %v1552, 0.0
        %v1586 = vsel %vm1584, %v1553, 0.0
        %v1587 = vadd.f32 %v1585, %v1586
        %1588 = vadd.xlane.f32.xlu0 %v1587
        %v1589 = vpop.xlane.xlu0 %1588
        %v1590 = vadd.f32 %v1589, 0.0
        %v1592 = vlaneseq
        %v1593 = vshrl.u32 %v1592, 7
        %v1594 = vsub.s32 0, %v1593
        %v1595 = vrot.slane %v1583, %v1594
        %v1596 = vlaneseq
        %v1597 = vshrl.u32 %v1596, 7
        %v1598 = vsub.s32 2, %v1597
        %v1599 = vrot.slane %v1583, %v1598
        %v1602 = vpack.c.bf16 %v1595, %v1595
        %v1603 = vpack.c.bf16 %v1599, %v1599
        %s1604 = scalar_lea.vmem %s4, 128
        %v1605 = vld [vmem:[%s1604] sm:$0xf]
        %v1606 = vld [vmem:[%s1604 + $0x4] sm:$0xf]
        %v1607 = vld [vmem:[%s1604 + $0x8] sm:$0xf]
        %v1608 = vld [vmem:[%s1604 + $0xc] sm:$0xf]
        %v1609 = vld [vmem:[%s1604 + $0x10] sm:$0xf]
        %v1610 = vld [vmem:[%s1604 + $0x14] sm:$0xf]
        %v1611 = vld [vmem:[%s1604 + $0x18] sm:$0xf]
        %v1612 = vld [vmem:[%s1604 + $0x1c] sm:$0xf]
        %v1613 = vld [vmem:[%s1604 + $0x20] sm:$0xf]
        %v1614 = vld [vmem:[%s1604 + $0x24] sm:$0xf]
        %v1615 = vld [vmem:[%s1604 + $0x28] sm:$0xf]
        %v1616 = vld [vmem:[%s1604 + $0x2c] sm:$0xf]
        %v1617 = vld [vmem:[%s1604 + $0x30] sm:$0xf]
        %v1618 = vld [vmem:[%s1604 + $0x34] sm:$0xf]
        %v1619 = vld [vmem:[%s1604 + $0x38] sm:$0xf]
        %v1620 = vld [vmem:[%s1604 + $0x3c] sm:$0xf]
        %v1621 = vld [vmem:[%s1604 + $0x40] sm:$0xf]
        %v1622 = vld [vmem:[%s1604 + $0x44] sm:$0xf]
        %v1623 = vld [vmem:[%s1604 + $0x48] sm:$0xf]
        %v1624 = vld [vmem:[%s1604 + $0x4c] sm:$0xf]
        %v1625 = vld [vmem:[%s1604 + $0x50] sm:$0xf]
        %v1626 = vld [vmem:[%s1604 + $0x54] sm:$0xf]
        %v1627 = vld [vmem:[%s1604 + $0x58] sm:$0xf]
        %v1628 = vld [vmem:[%s1604 + $0x5c] sm:$0xf]
        %v1629 = vld [vmem:[%s1604 + $0x60] sm:$0xf]
        %v1630 = vld [vmem:[%s1604 + $0x64] sm:$0xf]
        %v1631 = vld [vmem:[%s1604 + $0x68] sm:$0xf]
        %v1632 = vld [vmem:[%s1604 + $0x6c] sm:$0xf]
        %v1633 = vld [vmem:[%s1604 + $0x70] sm:$0xf]
        %v1634 = vld [vmem:[%s1604 + $0x74] sm:$0xf]
        %v1635 = vld [vmem:[%s1604 + $0x78] sm:$0xf]
        %v1636 = vld [vmem:[%s1604 + $0x7c] sm:$0xf]
        %v1637 = vld [vmem:[%s3 + $0x5] ss:$0 sm:$0xff]
        %v1670 = vunpack.c.l.b16 %v1605
        %v1671 = vunpack.c.l.b16 %v1606
        %v1672 = vunpack.c.l.b16 %v1607
        %v1673 = vunpack.c.l.b16 %v1608
        %v1674 = vunpack.c.l.b16 %v1609
        %v1675 = vunpack.c.l.b16 %v1610
        %v1676 = vunpack.c.l.b16 %v1611
        %v1677 = vunpack.c.l.b16 %v1612
        %v1678 = vunpack.c.l.b16 %v1613
        %v1679 = vunpack.c.l.b16 %v1614
        %v1680 = vunpack.c.l.b16 %v1615
        %v1681 = vunpack.c.l.b16 %v1616
        %v1682 = vunpack.c.l.b16 %v1617
        %v1683 = vunpack.c.l.b16 %v1618
        %v1684 = vunpack.c.l.b16 %v1619
        %v1685 = vunpack.c.l.b16 %v1620
        %v1686 = vunpack.c.l.b16 %v1621
        %v1687 = vunpack.c.l.b16 %v1622
        %v1688 = vunpack.c.l.b16 %v1623
        %v1689 = vunpack.c.l.b16 %v1624
        %v1690 = vunpack.c.l.b16 %v1625
        %v1691 = vunpack.c.l.b16 %v1626
        %v1692 = vunpack.c.l.b16 %v1627
        %v1693 = vunpack.c.l.b16 %v1628
        %v1694 = vunpack.c.l.b16 %v1629
        %v1695 = vunpack.c.l.b16 %v1630
        %v1696 = vunpack.c.l.b16 %v1631
        %v1697 = vunpack.c.l.b16 %v1632
        %v1698 = vunpack.c.l.b16 %v1633
        %v1699 = vunpack.c.l.b16 %v1634
        %v1700 = vunpack.c.l.b16 %v1635
        %v1701 = vunpack.c.l.b16 %v1636
        %v1702 = vpack.c.b16 %v1671, %v1670
        %v1703 = vpack.c.b16 %v1673, %v1672
        %v1704 = vpack.c.b16 %v1675, %v1674
        %v1705 = vpack.c.b16 %v1677, %v1676
        %v1706 = vpack.c.b16 %v1679, %v1678
        %v1707 = vpack.c.b16 %v1681, %v1680
        %v1708 = vpack.c.b16 %v1683, %v1682
        %v1709 = vpack.c.b16 %v1685, %v1684
        %v1710 = vpack.c.b16 %v1687, %v1686
        %v1711 = vpack.c.b16 %v1689, %v1688
        %v1712 = vpack.c.b16 %v1691, %v1690
        %v1713 = vpack.c.b16 %v1693, %v1692
        %v1714 = vpack.c.b16 %v1695, %v1694
        %v1715 = vpack.c.b16 %v1697, %v1696
        %v1716 = vpack.c.b16 %v1699, %v1698
        %v1717 = vpack.c.b16 %v1701, %v1700
        %1734 = vmatprep.subr.bf16.mxu0 0
        %1735 = vmatpush1.bf16.msra.mxu0 %v1702
        %1736 = vmatprep.subr.bf16.mxu0 0
        %1737 = vmatpush1.bf16.msra.mxu0 %v1703
        %1738 = vmatprep.subr.bf16.mxu0 0
        %1739 = vmatpush1.bf16.msra.mxu0 %v1704
        %1740 = vmatprep.subr.bf16.mxu0 0
        %1741 = vmatpush1.bf16.msra.mxu0 %v1705
        %1742 = vmatprep.subr.bf16.mxu0 0
        %1743 = vmatpush1.bf16.msra.mxu0 %v1706
        %1744 = vmatprep.subr.bf16.mxu0 0
        %1745 = vmatpush1.bf16.msra.mxu0 %v1707
        %1746 = vmatprep.subr.bf16.mxu0 0
        %1747 = vmatpush1.bf16.msra.mxu0 %v1708
        %1748 = vmatprep.subr.bf16.mxu0 0
        %1749 = vmatpush1.bf16.msra.mxu0 %v1709
        %1750 = vmatprep.subr.bf16.mxu0 0
        %1751 = vmatpush1.bf16.msra.mxu0 %v1710
        %1752 = vmatprep.subr.bf16.mxu0 0
        %1753 = vmatpush1.bf16.msra.mxu0 %v1711
        %1754 = vmatprep.subr.bf16.mxu0 0
        %1755 = vmatpush1.bf16.msra.mxu0 %v1712
        %1756 = vmatprep.subr.bf16.mxu0 0
        %1757 = vmatpush1.bf16.msra.mxu0 %v1713
        %1758 = vmatprep.subr.bf16.mxu0 0
        %1759 = vmatpush1.bf16.msra.mxu0 %v1714
        %1760 = vmatprep.subr.bf16.mxu0 0
        %1761 = vmatpush1.bf16.msra.mxu0 %v1715
        %1762 = vmatprep.subr.bf16.mxu0 0
        %1763 = vmatpush1.bf16.msra.mxu0 %v1716
        %1764 = vmatprep.subr.bf16.mxu0 0
        %1765 = vmatpush1.bf16.msra.mxu0 %v1717
        %1766 = vmatprep.mubr.bf16.mxu0 %v1603
        %1767 = vmatmul.mubr.bf16.gmra.mrb[0].mxu0 %v1602
        %v1768 = vpop.f32.mrb[0].mxu0
        %v1769 = vadd.f32 %v1637, %v1768
        %v1770 = vpop.f32.mrb[0].mxu0
        %v1771 = vpop.f32.mrb[0].mxu0
        %v1772 = vpop.f32.mrb[0].mxu0
        %1773 = vdwg.mxu0
        %v1774 = vmax.f32 %v1769, 0.0
        %v1775 = vpack.c.bf16 %v1774, %v1774
        %s1776 = scalar_lea.vmem [#allocation4], 256
        %v1777 = vld [vmem:[%s1776] sm:$0xff]
        %v1778 = vld [vmem:[%s1776 + $0x8] sm:$0xff]
        %v1779 = vld [vmem:[%s1776 + $0x10] sm:$0xff]
        %v1780 = vld [vmem:[%s1776 + $0x18] sm:$0xff]
        %v1781 = vld [vmem:[%s1776 + $0x20] sm:$0xff]
        %v1782 = vld [vmem:[%s1776 + $0x28] sm:$0xff]
        %v1783 = vld [vmem:[%s1776 + $0x30] sm:$0xff]
        %v1784 = vld [vmem:[%s1776 + $0x38] sm:$0xff]
        %v1785 = vld [vmem:[%s1776 + $0x40] sm:$0xff]
        %v1786 = vld [vmem:[%s1776 + $0x48] sm:$0xff]
        %v1787 = vld [vmem:[%s1776 + $0x50] sm:$0xff]
        %v1788 = vld [vmem:[%s1776 + $0x58] sm:$0xff]
        %v1789 = vld [vmem:[%s1776 + $0x60] sm:$0xff]
        %v1790 = vld [vmem:[%s1776 + $0x68] sm:$0xff]
        %v1791 = vld [vmem:[%s1776 + $0x70] sm:$0xff]
        %v1792 = vld [vmem:[%s1776 + $0x78] sm:$0xff]
        %v1793 = vld [vmem:[%s1776 + $0x80] sm:$0xff]
        %v1794 = vld [vmem:[%s1776 + $0x88] sm:$0xff]
        %v1795 = vld [vmem:[%s1776 + $0x90] sm:$0xff]
        %v1796 = vld [vmem:[%s1776 + $0x98] sm:$0xff]
        %v1797 = vld [vmem:[%s1776 + $0xa0] sm:$0xff]
        %v1798 = vld [vmem:[%s1776 + $0xa8] sm:$0xff]
        %v1799 = vld [vmem:[%s1776 + $0xb0] sm:$0xff]
        %v1800 = vld [vmem:[%s1776 + $0xb8] sm:$0xff]
        %v1801 = vld [vmem:[%s1776 + $0xc0] sm:$0xff]
        %v1802 = vld [vmem:[%s1776 + $0xc8] sm:$0xff]
        %v1803 = vld [vmem:[%s1776 + $0xd0] sm:$0xff]
        %v1804 = vld [vmem:[%s1776 + $0xd8] sm:$0xff]
        %v1805 = vld [vmem:[%s1776 + $0xe0] sm:$0xff]
        %v1806 = vld [vmem:[%s1776 + $0xe8] sm:$0xff]
        %v1807 = vld [vmem:[%s1776 + $0xf0] sm:$0xff]
        %v1808 = vld [vmem:[%s1776 + $0xf8] sm:$0xff]
        %s1809 = scalar_lea.vmem %s3, 7
        %v1810 = vld [vmem:[%s1809] ss:$8 sm:$0xf]
        %v1843 = vunpack.c.l.b16 %v1777
        %v1844 = vunpack.c.h.b16 %v1777
        %v1845 = vunpack.c.l.b16 %v1778
        %v1846 = vunpack.c.h.b16 %v1778
        %v1847 = vunpack.c.l.b16 %v1779
        %v1848 = vunpack.c.h.b16 %v1779
        %v1849 = vunpack.c.l.b16 %v1780
        %v1850 = vunpack.c.h.b16 %v1780
        %v1851 = vunpack.c.l.b16 %v1781
        %v1852 = vunpack.c.h.b16 %v1781
        %v1853 = vunpack.c.l.b16 %v1782
        %v1854 = vunpack.c.h.b16 %v1782
        %v1855 = vunpack.c.l.b16 %v1783
        %v1856 = vunpack.c.h.b16 %v1783
        %v1857 = vunpack.c.l.b16 %v1784
        %v1858 = vunpack.c.h.b16 %v1784
        %v1859 = vunpack.c.l.b16 %v1785
        %v1860 = vunpack.c.h.b16 %v1785
        %v1861 = vunpack.c.l.b16 %v1786
        %v1862 = vunpack.c.h.b16 %v1786
        %v1863 = vunpack.c.l.b16 %v1787
        %v1864 = vunpack.c.h.b16 %v1787
        %v1865 = vunpack.c.l.b16 %v1788
        %v1866 = vunpack.c.h.b16 %v1788
        %v1867 = vunpack.c.l.b16 %v1789
        %v1868 = vunpack.c.h.b16 %v1789
        %v1869 = vunpack.c.l.b16 %v1790
        %v1870 = vunpack.c.h.b16 %v1790
        %v1871 = vunpack.c.l.b16 %v1791
        %v1872 = vunpack.c.h.b16 %v1791
        %v1873 = vunpack.c.l.b16 %v1792
        %v1874 = vunpack.c.h.b16 %v1792
        %v1875 = vunpack.c.l.b16 %v1793
        %v1876 = vunpack.c.h.b16 %v1793
        %v1877 = vunpack.c.l.b16 %v1794
        %v1878 = vunpack.c.h.b16 %v1794
        %v1879 = vunpack.c.l.b16 %v1795
        %v1880 = vunpack.c.h.b16 %v1795
        %v1881 = vunpack.c.l.b16 %v1796
        %v1882 = vunpack.c.h.b16 %v1796
        %v1883 = vunpack.c.l.b16 %v1797
        %v1884 = vunpack.c.h.b16 %v1797
        %v1885 = vunpack.c.l.b16 %v1798
        %v1886 = vunpack.c.h.b16 %v1798
        %v1887 = vunpack.c.l.b16 %v1799
        %v1888 = vunpack.c.h.b16 %v1799
        %v1889 = vunpack.c.l.b16 %v1800
        %v1890 = vunpack.c.h.b16 %v1800
        %v1891 = vunpack.c.l.b16 %v1801
        %v1892 = vunpack.c.h.b16 %v1801
        %v1893 = vunpack.c.l.b16 %v1802
        %v1894 = vunpack.c.h.b16 %v1802
        %v1895 = vunpack.c.l.b16 %v1803
        %v1896 = vunpack.c.h.b16 %v1803
        %v1897 = vunpack.c.l.b16 %v1804
        %v1898 = vunpack.c.h.b16 %v1804
        %v1899 = vunpack.c.l.b16 %v1805
        %v1900 = vunpack.c.h.b16 %v1805
        %v1901 = vunpack.c.l.b16 %v1806
        %v1902 = vunpack.c.h.b16 %v1806
        %v1903 = vunpack.c.l.b16 %v1807
        %v1904 = vunpack.c.h.b16 %v1807
        %v1905 = vunpack.c.l.b16 %v1808
        %v1906 = vunpack.c.h.b16 %v1808
        %v1907 = vpack.c.b16 %v1847, %v1843
        %v1908 = vpack.c.b16 %v1848, %v1844
        %v1909 = vpack.c.b16 %v1849, %v1845
        %v1910 = vpack.c.b16 %v1850, %v1846
        %v1911 = vpack.c.b16 %v1855, %v1851
        %v1912 = vpack.c.b16 %v1856, %v1852
        %v1913 = vpack.c.b16 %v1857, %v1853
        %v1914 = vpack.c.b16 %v1858, %v1854
        %v1915 = vpack.c.b16 %v1863, %v1859
        %v1916 = vpack.c.b16 %v1864, %v1860
        %v1917 = vpack.c.b16 %v1865, %v1861
        %v1918 = vpack.c.b16 %v1866, %v1862
        %v1919 = vpack.c.b16 %v1871, %v1867
        %v1920 = vpack.c.b16 %v1872, %v1868
        %v1921 = vpack.c.b16 %v1873, %v1869
        %v1922 = vpack.c.b16 %v1874, %v1870
        %v1923 = vpack.c.b16 %v1879, %v1875
        %v1924 = vpack.c.b16 %v1880, %v1876
        %v1925 = vpack.c.b16 %v1881, %v1877
        %v1926 = vpack.c.b16 %v1882, %v1878
        %v1927 = vpack.c.b16 %v1887, %v1883
        %v1928 = vpack.c.b16 %v1888, %v1884
        %v1929 = vpack.c.b16 %v1889, %v1885
        %v1930 = vpack.c.b16 %v1890, %v1886
        %v1931 = vpack.c.b16 %v1895, %v1891
        %v1932 = vpack.c.b16 %v1896, %v1892
        %v1933 = vpack.c.b16 %v1897, %v1893
        %v1934 = vpack.c.b16 %v1898, %v1894
        %v1935 = vpack.c.b16 %v1903, %v1899
        %v1936 = vpack.c.b16 %v1904, %v1900
        %v1937 = vpack.c.b16 %v1905, %v1901
        %v1938 = vpack.c.b16 %v1906, %v1902
        %v1972 = vlaneseq
        %v1973 = vshrl.u32 %v1972, 7
        %v1974 = vsub.s32 0, %v1973
        %v1975 = vrot.slane %v1810, %v1974
        %v1976 = vlaneseq
        %v1977 = vshrl.u32 %v1976, 7
        %v1978 = vsub.s32 1, %v1977
        %v1979 = vrot.slane %v1810, %v1978
        %v1980 = vlaneseq
        %v1981 = vshrl.u32 %v1980, 7
        %v1982 = vsub.s32 2, %v1981
        %v1983 = vrot.slane %v1810, %v1982
        %v1984 = vlaneseq
        %v1985 = vshrl.u32 %v1984, 7
        %v1986 = vsub.s32 3, %v1985
        %v1987 = vrot.slane %v1810, %v1986
        %1992 = vmatprep.subr.bf16.mxu0 %v1908
        %1993 = vmatpush1.bf16.msra.mxu0 %v1907
        %1994 = vmatprep.subr.bf16.mxu0 %v1912
        %1995 = vmatpush1.bf16.msra.mxu0 %v1911
        %1996 = vmatprep.subr.bf16.mxu0 %v1916
        %1997 = vmatpush1.bf16.msra.mxu0 %v1915
        %1998 = vmatprep.subr.bf16.mxu0 %v1920
        %1999 = vmatpush1.bf16.msra.mxu0 %v1919
        %2000 = vmatprep.subr.bf16.mxu0 %v1924
        %2001 = vmatpush1.bf16.msra.mxu0 %v1923
        %2002 = vmatprep.subr.bf16.mxu0 %v1928
        %2003 = vmatpush1.bf16.msra.mxu0 %v1927
        %2004 = vmatprep.subr.bf16.mxu0 %v1932
        %2005 = vmatpush1.bf16.msra.mxu0 %v1931
        %2006 = vmatprep.subr.bf16.mxu0 %v1936
        %2007 = vmatpush1.bf16.msra.mxu0 %v1935
        %2008 = vmatprep.subr.bf16.mxu0 0
        %2009 = vmatpush1.bf16.msra.mxu0 0
        %2010 = vmatprep.subr.bf16.mxu0 0
        %2011 = vmatpush1.bf16.msra.mxu0 0
        %2012 = vmatprep.subr.bf16.mxu0 0
        %2013 = vmatpush1.bf16.msra.mxu0 0
        %2014 = vmatprep.subr.bf16.mxu0 0
        %2015 = vmatpush1.bf16.msra.mxu0 0
        %2016 = vmatprep.subr.bf16.mxu0 0
        %2017 = vmatpush1.bf16.msra.mxu0 0
        %2018 = vmatprep.subr.bf16.mxu0 0
        %2019 = vmatpush1.bf16.msra.mxu0 0
        %2020 = vmatprep.subr.bf16.mxu0 0
        %2021 = vmatpush1.bf16.msra.mxu0 0
        %2022 = vmatprep.subr.bf16.mxu0 0
        %2023 = vmatpush1.bf16.msra.mxu0 0
        %2024 = vmatprep.mubr.bf16.mxu0 0
        %2025 = vmatmul.mubr.bf16.gmra.mrb[0].mxu0 %v1775
        %v2026 = vpop.f32.mrb[0].mxu0
        %v2027 = vadd.f32 %v1975, %v2026
        %v2028 = vpop.f32.mrb[0].mxu0
        %v2029 = vadd.f32 %v1979, %v2028
        %v2030 = vpop.f32.mrb[0].mxu0
        %v2031 = vpop.f32.mrb[0].mxu0
        %2032 = vdwg.mxu0
        %2033 = vmatprep.subr.bf16.mxu0 %v1910
        %2034 = vmatpush1.bf16.msra.mxu0 %v1909
        %2035 = vmatprep.subr.bf16.mxu0 %v1914
        %2036 = vmatpush1.bf16.msra.mxu0 %v1913
        %2037 = vmatprep.subr.bf16.mxu0 %v1918
        %2038 = vmatpush1.bf16.msra.mxu0 %v1917
        %2039 = vmatprep.subr.bf16.mxu0 %v1922
        %2040 = vmatpush1.bf16.msra.mxu0 %v1921
        %2041 = vmatprep.subr.bf16.mxu0 %v1926
        %2042 = vmatpush1.bf16.msra.mxu0 %v1925
        %2043 = vmatprep.subr.bf16.mxu0 %v1930
        %2044 = vmatpush1.bf16.msra.mxu0 %v1929
        %2045 = vmatprep.subr.bf16.mxu0 %v1934
        %2046 = vmatpush1.bf16.msra.mxu0 %v1933
        %2047 = vmatprep.subr.bf16.mxu0 %v1938
        %2048 = vmatpush1.bf16.msra.mxu0 %v1937
        %2049 = vmatprep.subr.bf16.mxu0 0
        %2050 = vmatpush1.bf16.msra.mxu0 0
        %2051 = vmatprep.subr.bf16.mxu0 0
        %2052 = vmatpush1.bf16.msra.mxu0 0
        %2053 = vmatprep.subr.bf16.mxu0 0
        %2054 = vmatpush1.bf16.msra.mxu0 0
        %2055 = vmatprep.subr.bf16.mxu0 0
        %2056 = vmatpush1.bf16.msra.mxu0 0
        %2057 = vmatprep.subr.bf16.mxu0 0
        %2058 = vmatpush1.bf16.msra.mxu0 0
        %2059 = vmatprep.subr.bf16.mxu0 0
        %2060 = vmatpush1.bf16.msra.mxu0 0
        %2061 = vmatprep.subr.bf16.mxu0 0
        %2062 = vmatpush1.bf16.msra.mxu0 0
        %2063 = vmatprep.subr.bf16.mxu0 0
        %2064 = vmatpush1.bf16.msra.mxu0 0
        %2065 = vmatprep.mubr.bf16.mxu0 0
        %2066 = vmatmul.mubr.bf16.gmra.mrb[0].mxu0 %v1775
        %v2067 = vpop.f32.mrb[0].mxu0
        %v2068 = vadd.f32 %v1983, %v2067
        %v2069 = vpop.f32.mrb[0].mxu0
        %v2070 = vadd.f32 %v1987, %v2069
        %v2071 = vpop.f32.mrb[0].mxu0
        %v2072 = vpop.f32.mrb[0].mxu0
        %2073 = vdwg.mxu0
        %v2074 = vtanh.pop %v2027
        %v2075 = vtanh.pop %v2029
        %v2076 = vmul.f32 %v2074, 1.442695
        %v2077 = vpow.pop %v2076
        %v2078 = vmul.f32 %v2075, 1.442695
        %v2079 = vpow.pop %v2078
        %v2082 = vcombine.low %v2077, %v2079
        %v2084 = vunpack.c.l.s4 1983009808
        %v2085 = vunpack.c.0.s8 %v2084
        %v2086 = vlaneseq
        %v2087 = vshrl.u32 %v2086, 7
        %v2088 = vsub.s32 %v2085, %v2087
        %v2089 = vrot.slane %v2082, %v2088
        %v2091 = vmul.f32 %v1070, %v2089
        %v2094 = vcombine.low %v2068, %v2070
        %v2096 = vunpack.c.l.s4 1983009808
        %v2097 = vunpack.c.0.s8 %v2096
        %v2098 = vlaneseq
        %v2099 = vshrl.u32 %v2098, 7
        %v2100 = vsub.s32 %v2097, %v2099
        %v2101 = vrot.slane %v2094, %v2100
        %v2103 = vadd.f32 %v2091, %v2101
        %v2104 = vsel %vm1584, %v2074, 0.0
        %v2105 = vsel %vm1584, %v2075, 0.0
        %v2106 = vadd.f32 %v2104, %v2105
        %2107 = vadd.xlane.f32.xlu0 %v2106
        %v2108 = vpop.xlane.xlu0 %2107
        %v2109 = vadd.f32 %v1590, %v2108
        %v2111 = vlaneseq
        %v2112 = vshrl.u32 %v2111, 7
        %v2113 = vsub.s32 0, %v2112
        %v2114 = vrot.slane %v2103, %v2113
        %v2115 = vlaneseq
        %v2116 = vshrl.u32 %v2115, 7
        %v2117 = vsub.s32 2, %v2116
        %v2118 = vrot.slane %v2103, %v2117
        %v2119 = vcombine.low %v2114, %v2118
        %v2120 = vcombine.low %v1595, %v1599
        %v2122 = vunpack.c.l.s4 1966171168
        %v2123 = vunpack.c.0.s8 %v2122
        %v2124 = vlaneseq
        %v2125 = vshrl.u32 %v2124, 7
        %v2126 = vsub.s32 %v2123, %v2125
        %v2127 = vrot.slane %v2119, %v2126
        %v2129 = vunpack.c.l.s4 1966171168
        %v2130 = vunpack.c.0.s8 %v2129
        %v2131 = vlaneseq
        %v2132 = vshrl.u32 %v2131, 7
        %v2133 = vsub.s32 %v2130, %v2132
        %v2134 = vrot.slane %v2120, %v2133
        %v2135 = vcombine.low %v2127, %v2134
        %v2137 = vunpack.c.l.s4 1966171168
        %v2138 = vunpack.c.0.s8 %v2137
        %v2139 = vlaneseq
        %v2140 = vshrl.u32 %v2139, 7
        %v2141 = vsub.s32 %v2138, %v2140
        %v2142 = vrot.slane %v2135, %v2141
        %v2144 = vlaneseq
        %vm2145 = vcmp.ge.s32.totalorder %v2144, 0
        %vm2146 = vcmp.lt.s32.totalorder %v2144, 512
        %vm2147 = vmand %vm2145, %vm2146
        %2148 = vst.msk [vmem:[%s351] sm:$0xf] %vm2147, %v2142
        %2149 = vst [vmem:[%s354] sm:$0x1] %v2109
        %v2151 = vunpack.c.l.s4 1983009808
        %v2152 = vunpack.c.0.s8 %v2151
        %v2153 = vlaneseq
        %v2154 = vshrl.u32 %v2153, 7
        %v2155 = vsub.s32 %v2152, %v2154
        %v2156 = vrot.slane %v2119, %v2155
        %v2158 = vunpack.c.l.s4 1983009808
        %v2159 = vunpack.c.0.s8 %v2158
        %v2160 = vlaneseq
        %v2161 = vshrl.u32 %v2160, 7
        %v2162 = vsub.s32 %v2159, %v2161
        %v2163 = vrot.slane %v2120, %v2162
        %v2164 = vcombine.low %v2156, %v2163
        %v2167 = vunpack.c.l.s4 1966171168
        %v2168 = vunpack.c.0.s8 %v2167
        %v2169 = vlaneseq
        %v2170 = vshrl.u32 %v2169, 7
        %v2171 = vsub.s32 %v2168, %v2170
        %v2172 = vrot.slane %v2164, %v2171
        %s2173 = scalar_lea.vmem [#allocation2], 384
        %v2174 = vld [vmem:[%s2173] sm:$0xff]
        %v2175 = vld [vmem:[%s2173 + $0x8] sm:$0xf]
        %v2176 = vld [vmem:[%s2173 + $0xc] sm:$0xff]
        %v2177 = vld [vmem:[%s2173 + $0x14] sm:$0xf]
        %v2178 = vld [vmem:[%s2173 + $0x18] sm:$0xff]
        %v2179 = vld [vmem:[%s2173 + $0x20] sm:$0xf]
        %v2180 = vld [vmem:[%s2173 + $0x24] sm:$0xff]
        %v2181 = vld [vmem:[%s2173 + $0x2c] sm:$0xf]
        %v2182 = vld [vmem:[%s2173 + $0x30] sm:$0xff]
        %v2183 = vld [vmem:[%s2173 + $0x38] sm:$0xf]
        %v2184 = vld [vmem:[%s2173 + $0x3c] sm:$0xff]
        %v2185 = vld [vmem:[%s2173 + $0x44] sm:$0xf]
        %v2186 = vld [vmem:[%s2173 + $0x48] sm:$0xff]
        %v2187 = vld [vmem:[%s2173 + $0x50] sm:$0xf]
        %v2188 = vld [vmem:[%s2173 + $0x54] sm:$0xff]
        %v2189 = vld [vmem:[%s2173 + $0x5c] sm:$0xf]
        %v2190 = vld [vmem:[%s2173 + $0x60] sm:$0xff]
        %v2191 = vld [vmem:[%s2173 + $0x68] sm:$0xf]
        %v2192 = vld [vmem:[%s2173 + $0x6c] sm:$0xff]
        %v2193 = vld [vmem:[%s2173 + $0x74] sm:$0xf]
        %v2194 = vld [vmem:[%s2173 + $0x78] sm:$0xff]
        %v2195 = vld [vmem:[%s2173 + $0x80] sm:$0xf]
        %v2196 = vld [vmem:[%s2173 + $0x84] sm:$0xff]
        %v2197 = vld [vmem:[%s2173 + $0x8c] sm:$0xf]
        %v2198 = vld [vmem:[%s2173 + $0x90] sm:$0xff]
        %v2199 = vld [vmem:[%s2173 + $0x98] sm:$0xf]
        %v2200 = vld [vmem:[%s2173 + $0x9c] sm:$0xff]
        %v2201 = vld [vmem:[%s2173 + $0xa4] sm:$0xf]
        %v2202 = vld [vmem:[%s2173 + $0xa8] sm:$0xff]
        %v2203 = vld [vmem:[%s2173 + $0xb0] sm:$0xf]
        %v2204 = vld [vmem:[%s2173 + $0xb4] sm:$0xff]
        %v2205 = vld [vmem:[%s2173 + $0xbc] sm:$0xf]
        %v2206 = vpack.c.bf16 %v2172, %v2172
        %v2239 = vunpack.c.l.b16 %v2174
        %v2240 = vunpack.c.h.b16 %v2174
        %v2241 = vunpack.c.l.b16 %v2175
        %v2242 = vunpack.c.l.b16 %v2176
        %v2243 = vunpack.c.h.b16 %v2176
        %v2244 = vunpack.c.l.b16 %v2177
        %v2245 = vunpack.c.l.b16 %v2178
        %v2246 = vunpack.c.h.b16 %v2178
        %v2247 = vunpack.c.l.b16 %v2179
        %v2248 = vunpack.c.l.b16 %v2180
        %v2249 = vunpack.c.h.b16 %v2180
        %v2250 = vunpack.c.l.b16 %v2181
        %v2251 = vunpack.c.l.b16 %v2182
        %v2252 = vunpack.c.h.b16 %v2182
        %v2253 = vunpack.c.l.b16 %v2183
        %v2254 = vunpack.c.l.b16 %v2184
        %v2255 = vunpack.c.h.b16 %v2184
        %v2256 = vunpack.c.l.b16 %v2185
        %v2257 = vunpack.c.l.b16 %v2186
        %v2258 = vunpack.c.h.b16 %v2186
        %v2259 = vunpack.c.l.b16 %v2187
        %v2260 = vunpack.c.l.b16 %v2188
        %v2261 = vunpack.c.h.b16 %v2188
        %v2262 = vunpack.c.l.b16 %v2189
        %v2263 = vunpack.c.l.b16 %v2190
        %v2264 = vunpack.c.h.b16 %v2190
        %v2265 = vunpack.c.l.b16 %v2191
        %v2266 = vunpack.c.l.b16 %v2192
        %v2267 = vunpack.c.h.b16 %v2192
        %v2268 = vunpack.c.l.b16 %v2193
        %v2269 = vunpack.c.l.b16 %v2194
        %v2270 = vunpack.c.h.b16 %v2194
        %v2271 = vunpack.c.l.b16 %v2195
        %v2272 = vunpack.c.l.b16 %v2196
        %v2273 = vunpack.c.h.b16 %v2196
        %v2274 = vunpack.c.l.b16 %v2197
        %v2275 = vunpack.c.l.b16 %v2198
        %v2276 = vunpack.c.h.b16 %v2198
        %v2277 = vunpack.c.l.b16 %v2199
        %v2278 = vunpack.c.l.b16 %v2200
        %v2279 = vunpack.c.h.b16 %v2200
        %v2280 = vunpack.c.l.b16 %v2201
        %v2281 = vunpack.c.l.b16 %v2202
        %v2282 = vunpack.c.h.b16 %v2202
        %v2283 = vunpack.c.l.b16 %v2203
        %v2284 = vunpack.c.l.b16 %v2204
        %v2285 = vunpack.c.h.b16 %v2204
        %v2286 = vunpack.c.l.b16 %v2205
        %v2287 = vpack.c.b16 %v2242, %v2239
        %v2288 = vpack.c.b16 %v2243, %v2240
        %v2289 = vpack.c.b16 %v2244, %v2241
        %v2290 = vpack.c.b16 %v2248, %v2245
        %v2291 = vpack.c.b16 %v2249, %v2246
        %v2292 = vpack.c.b16 %v2250, %v2247
        %v2293 = vpack.c.b16 %v2254, %v2251
        %v2294 = vpack.c.b16 %v2255, %v2252
        %v2295 = vpack.c.b16 %v2256, %v2253
        %v2296 = vpack.c.b16 %v2260, %v2257
        %v2297 = vpack.c.b16 %v2261, %v2258
        %v2298 = vpack.c.b16 %v2262, %v2259
        %v2299 = vpack.c.b16 %v2266, %v2263
        %v2300 = vpack.c.b16 %v2267, %v2264
        %v2301 = vpack.c.b16 %v2268, %v2265
        %v2302 = vpack.c.b16 %v2272, %v2269
        %v2303 = vpack.c.b16 %v2273, %v2270
        %v2304 = vpack.c.b16 %v2274, %v2271
        %v2305 = vpack.c.b16 %v2278, %v2275
        %v2306 = vpack.c.b16 %v2279, %v2276
        %v2307 = vpack.c.b16 %v2280, %v2277
        %v2308 = vpack.c.b16 %v2284, %v2281
        %v2309 = vpack.c.b16 %v2285, %v2282
        %v2310 = vpack.c.b16 %v2286, %v2283
        %2335 = vmatprep.subr.bf16.mxu0 %v2288
        %2336 = vmatpush1.bf16.msra.mxu0 %v2287
        %2337 = vmatprep.subr.bf16.mxu0 %v2291
        %2338 = vmatpush1.bf16.msra.mxu0 %v2290
        %2339 = vmatprep.subr.bf16.mxu0 %v2294
        %2340 = vmatpush1.bf16.msra.mxu0 %v2293
        %2341 = vmatprep.subr.bf16.mxu0 %v2297
        %2342 = vmatpush1.bf16.msra.mxu0 %v2296
        %2343 = vmatprep.subr.bf16.mxu0 %v2300
        %2344 = vmatpush1.bf16.msra.mxu0 %v2299
        %2345 = vmatprep.subr.bf16.mxu0 %v2303
        %2346 = vmatpush1.bf16.msra.mxu0 %v2302
        %2347 = vmatprep.subr.bf16.mxu0 %v2306
        %2348 = vmatpush1.bf16.msra.mxu0 %v2305
        %2349 = vmatprep.subr.bf16.mxu0 %v2309
        %2350 = vmatpush1.bf16.msra.mxu0 %v2308
        %2351 = vmatprep.subr.bf16.mxu0 0
        %2352 = vmatpush1.bf16.msra.mxu0 0
        %2353 = vmatprep.subr.bf16.mxu0 0
        %2354 = vmatpush1.bf16.msra.mxu0 0
        %2355 = vmatprep.subr.bf16.mxu0 0
        %2356 = vmatpush1.bf16.msra.mxu0 0
        %2357 = vmatprep.subr.bf16.mxu0 0
        %2358 = vmatpush1.bf16.msra.mxu0 0
        %2359 = vmatprep.subr.bf16.mxu0 0
        %2360 = vmatpush1.bf16.msra.mxu0 0
        %2361 = vmatprep.subr.bf16.mxu0 0
        %2362 = vmatpush1.bf16.msra.mxu0 0
        %2363 = vmatprep.subr.bf16.mxu0 0
        %2364 = vmatpush1.bf16.msra.mxu0 0
        %2365 = vmatprep.subr.bf16.mxu0 0
        %2366 = vmatpush1.bf16.msra.mxu0 0
        %2367 = vmatprep.mubr.bf16.mxu0 0
        %2368 = vmatmul.mubr.bf16.gmra.mrb[0].mxu0 %v2206
        %v2369 = vpop.f32.mrb[0].mxu0
        %v2370 = vadd.f32 0.0, %v2369
        %v2371 = vpop.f32.mrb[0].mxu0
        %v2372 = vadd.f32 0.0, %v2371
        %v2373 = vpop.f32.mrb[0].mxu0
        %v2374 = vpop.f32.mrb[0].mxu0
        %2375 = vdwg.mxu0
        %2376 = vmatprep.subr.bf16.mxu0 0
        %2377 = vmatpush1.bf16.msra.mxu0 %v2289
        %2378 = vmatprep.subr.bf16.mxu0 0
        %2379 = vmatpush1.bf16.msra.mxu0 %v2292
        %2380 = vmatprep.subr.bf16.mxu0 0
        %2381 = vmatpush1.bf16.msra.mxu0 %v2295
        %2382 = vmatprep.subr.bf16.mxu0 0
        %2383 = vmatpush1.bf16.msra.mxu0 %v2298
        %2384 = vmatprep.subr.bf16.mxu0 0
        %2385 = vmatpush1.bf16.msra.mxu0 %v2301
        %2386 = vmatprep.subr.bf16.mxu0 0
        %2387 = vmatpush1.bf16.msra.mxu0 %v2304
        %2388 = vmatprep.subr.bf16.mxu0 0
        %2389 = vmatpush1.bf16.msra.mxu0 %v2307
        %2390 = vmatprep.subr.bf16.mxu0 0
        %2391 = vmatpush1.bf16.msra.mxu0 %v2310
        %2392 = vmatprep.subr.bf16.mxu0 0
        %2393 = vmatpush1.bf16.msra.mxu0 0
        %2394 = vmatprep.subr.bf16.mxu0 0
        %2395 = vmatpush1.bf16.msra.mxu0 0
        %2396 = vmatprep.subr.bf16.mxu0 0
        %2397 = vmatpush1.bf16.msra.mxu0 0
        %2398 = vmatprep.subr.bf16.mxu0 0
        %2399 = vmatpush1.bf16.msra.mxu0 0
        %2400 = vmatprep.subr.bf16.mxu0 0
        %2401 = vmatpush1.bf16.msra.mxu0 0
        %2402 = vmatprep.subr.bf16.mxu0 0
        %2403 = vmatpush1.bf16.msra.mxu0 0
        %2404 = vmatprep.subr.bf16.mxu0 0
        %2405 = vmatpush1.bf16.msra.mxu0 0
        %2406 = vmatprep.subr.bf16.mxu0 0
        %2407 = vmatpush1.bf16.msra.mxu0 0
        %2408 = vmatprep.mubr.bf16.mxu0 0
        %2409 = vmatmul.mubr.bf16.gmra.mrb[0].mxu0 %v2206
        %v2410 = vpop.f32.mrb[0].mxu0
        %v2411 = vadd.f32 0.0, %v2410
        %v2412 = vpop.f32.mrb[0].mxu0
        %v2413 = vpop.f32.mrb[0].mxu0
        %v2414 = vpop.f32.mrb[0].mxu0
        %2415 = vdwg.mxu0
        %v2416 = vpack.c.bf16 %v2370, %v2370
        %v2417 = vpack.c.bf16 %v2372, %v2372
        %v2418 = vpack.c.bf16 %v2411, %v2411
        %s2419 = scalar_lea.vmem %s1, 48
        %v2420 = vld [vmem:[%s2419] sm:$0xf]
        %s2421 = scalar_lea.vmem %s1, 56
        %v2422 = vld [vmem:[%s2421] sm:$0xf]
        %vm2423 = vcmask 31744
        %v2425 = vsel %vm2423, %v2422, 0
        %vm2427 = vcmask 1041408
        %v2429 = vsel %vm2427, %v2417, 0
        %2431 = vmatprep.subr.bf16.mxu0 0
        %2432 = vmatpush1.bf16.msra.mxu0 %v2429
        %2433 = vmatprep.subr.bf16.mxu0 0
        %2434 = vmatpush1.bf16.msra.mxu0 0
        %2435 = vmatprep.subr.bf16.mxu0 0
        %2436 = vmatpush1.bf16.msra.mxu0 0
        %2437 = vmatprep.subr.bf16.mxu0 0
        %2438 = vmatpush1.bf16.msra.mxu0 0
        %2439 = vmatprep.subr.bf16.mxu0 0
        %2440 = vmatpush1.bf16.msra.mxu0 0
        %2441 = vmatprep.subr.bf16.mxu0 0
        %2442 = vmatpush1.bf16.msra.mxu0 0
        %2443 = vmatprep.subr.bf16.mxu0 0
        %2444 = vmatpush1.bf16.msra.mxu0 0
        %2445 = vmatprep.subr.bf16.mxu0 0
        %2446 = vmatpush1.bf16.msra.mxu0 0
        %2447 = vmatprep.subr.bf16.mxu0 0
        %2448 = vmatpush1.bf16.msra.mxu0 0
        %2449 = vmatprep.subr.bf16.mxu0 0
        %2450 = vmatpush1.bf16.msra.mxu0 0
        %2451 = vmatprep.subr.bf16.mxu0 0
        %2452 = vmatpush1.bf16.msra.mxu0 0
        %2453 = vmatprep.subr.bf16.mxu0 0
        %2454 = vmatpush1.bf16.msra.mxu0 0
        %2455 = vmatprep.subr.bf16.mxu0 0
        %2456 = vmatpush1.bf16.msra.mxu0 0
        %2457 = vmatprep.subr.bf16.mxu0 0
        %2458 = vmatpush1.bf16.msra.mxu0 0
        %2459 = vmatprep.subr.bf16.mxu0 0
        %2460 = vmatpush1.bf16.msra.mxu0 0
        %2461 = vmatprep.subr.bf16.mxu0 0
        %2462 = vmatpush1.bf16.msra.mxu0 0
        %2463 = vmatprep.mubr.bf16.mxu0 0
        %2464 = vmatmul.mubr.bf16.gmra.mrb[0].mxu0 %v2425
        %v2465 = vpop.f32.mrb[0].mxu0
        %v2466 = vadd.f32 0.0, %v2465
        %v2467 = vpop.f32.mrb[0].mxu0
        %v2468 = vpop.f32.mrb[0].mxu0
        %v2469 = vpop.f32.mrb[0].mxu0
        %2470 = vdwg.mxu0
        %v2472 = vsel %vm2423, %v2420, 0
        %v2475 = vsel %vm2427, %v2416, 0
        %2477 = vmatprep.subr.bf16.mxu0 0
        %2478 = vmatpush1.bf16.msra.mxu0 %v2475
        %2479 = vmatprep.subr.bf16.mxu0 0
        %2480 = vmatpush1.bf16.msra.mxu0 0
        %2481 = vmatprep.subr.bf16.mxu0 0
        %2482 = vmatpush1.bf16.msra.mxu0 0
        %2483 = vmatprep.subr.bf16.mxu0 0
        %2484 = vmatpush1.bf16.msra.mxu0 0
        %2485 = vmatprep.subr.bf16.mxu0 0
        %2486 = vmatpush1.bf16.msra.mxu0 0
        %2487 = vmatprep.subr.bf16.mxu0 0
        %2488 = vmatpush1.bf16.msra.mxu0 0
        %2489 = vmatprep.subr.bf16.mxu0 0
        %2490 = vmatpush1.bf16.msra.mxu0 0
        %2491 = vmatprep.subr.bf16.mxu0 0
        %2492 = vmatpush1.bf16.msra.mxu0 0
        %2493 = vmatprep.subr.bf16.mxu0 0
        %2494 = vmatpush1.bf16.msra.mxu0 0
        %2495 = vmatprep.subr.bf16.mxu0 0
        %2496 = vmatpush1.bf16.msra.mxu0 0
        %2497 = vmatprep.subr.bf16.mxu0 0
        %2498 = vmatpush1.bf16.msra.mxu0 0
        %2499 = vmatprep.subr.bf16.mxu0 0
        %2500 = vmatpush1.bf16.msra.mxu0 0
        %2501 = vmatprep.subr.bf16.mxu0 0
        %2502 = vmatpush1.bf16.msra.mxu0 0
        %2503 = vmatprep.subr.bf16.mxu0 0
        %2504 = vmatpush1.bf16.msra.mxu0 0
        %2505 = vmatprep.subr.bf16.mxu0 0
        %2506 = vmatpush1.bf16.msra.mxu0 0
        %2507 = vmatprep.subr.bf16.mxu0 0
        %2508 = vmatpush1.bf16.msra.mxu0 0
        %2509 = vmatprep.mubr.bf16.mxu0 0
        %2510 = vmatmul.mubr.bf16.gmra.mrb[0].mxu0 %v2472
        %v2511 = vpop.f32.mrb[0].mxu0
        %v2512 = vadd.f32 %v2466, %v2511
        %v2513 = vpop.f32.mrb[0].mxu0
        %v2514 = vpop.f32.mrb[0].mxu0
        %v2515 = vpop.f32.mrb[0].mxu0
        %2516 = vdwg.mxu0
        %s2517 = scalar_lea.vmem %s1, 64
        %v2518 = vld [vmem:[%s2517] sm:$0xf]
        %v2520 = vsel %vm2423, %v2518, 0
        %v2523 = vsel %vm2427, %v2418, 0
        %2525 = vmatprep.subr.bf16.mxu0 0
        %2526 = vmatpush1.bf16.msra.mxu0 %v2523
        %2527 = vmatprep.subr.bf16.mxu0 0
        %2528 = vmatpush1.bf16.msra.mxu0 0
        %2529 = vmatprep.subr.bf16.mxu0 0
        %2530 = vmatpush1.bf16.msra.mxu0 0
        %2531 = vmatprep.subr.bf16.mxu0 0
        %2532 = vmatpush1.bf16.msra.mxu0 0
        %2533 = vmatprep.subr.bf16.mxu0 0
        %2534 = vmatpush1.bf16.msra.mxu0 0
        %2535 = vmatprep.subr.bf16.mxu0 0
        %2536 = vmatpush1.bf16.msra.mxu0 0
        %2537 = vmatprep.subr.bf16.mxu0 0
        %2538 = vmatpush1.bf16.msra.mxu0 0
        %2539 = vmatprep.subr.bf16.mxu0 0
        %2540 = vmatpush1.bf16.msra.mxu0 0
        %2541 = vmatprep.subr.bf16.mxu0 0
        %2542 = vmatpush1.bf16.msra.mxu0 0
        %2543 = vmatprep.subr.bf16.mxu0 0
        %2544 = vmatpush1.bf16.msra.mxu0 0
        %2545 = vmatprep.subr.bf16.mxu0 0
        %2546 = vmatpush1.bf16.msra.mxu0 0
        %2547 = vmatprep.subr.bf16.mxu0 0
        %2548 = vmatpush1.bf16.msra.mxu0 0
        %2549 = vmatprep.subr.bf16.mxu0 0
        %2550 = vmatpush1.bf16.msra.mxu0 0
        %2551 = vmatprep.subr.bf16.mxu0 0
        %2552 = vmatpush1.bf16.msra.mxu0 0
        %2553 = vmatprep.subr.bf16.mxu0 0
        %2554 = vmatpush1.bf16.msra.mxu0 0
        %2555 = vmatprep.subr.bf16.mxu0 0
        %2556 = vmatpush1.bf16.msra.mxu0 0
        %2557 = vmatprep.mubr.bf16.mxu0 0
        %2558 = vmatmul.mubr.bf16.gmra.mrb[0].mxu0 %v2520
        %v2559 = vpop.f32.mrb[0].mxu0
        %v2560 = vadd.f32 0.0, %v2559
        %v2561 = vpop.f32.mrb[0].mxu0
        %v2562 = vpop.f32.mrb[0].mxu0
        %v2563 = vpop.f32.mrb[0].mxu0
        %2564 = vdwg.mxu0
        %v2565 = vadd.f32 %v2512, %v2560
        %v2566 = vld [vmem:[%s3 + $0x2] ss:$0 sm:$0xff]
        %v2567 = vadd.f32 %v2565, %v2566
        %v2568 = vmax.f32 %v2567, 0.0
        %s2569 = scalar_lea.vmem [#allocation2], 576
        %v2570 = vld [vmem:[%s2569] sm:$0xff]
        %v2571 = vld [vmem:[%s2569 + $0x8] sm:$0xf]
        %v2572 = vld [vmem:[%s2569 + $0xc] sm:$0xff]
        %v2573 = vld [vmem:[%s2569 + $0x14] sm:$0xf]
        %v2574 = vld [vmem:[%s2569 + $0x18] sm:$0xff]
        %v2575 = vld [vmem:[%s2569 + $0x20] sm:$0xf]
        %v2576 = vld [vmem:[%s2569 + $0x24] sm:$0xff]
        %v2577 = vld [vmem:[%s2569 + $0x2c] sm:$0xf]
        %v2578 = vld [vmem:[%s2569 + $0x30] sm:$0xff]
        %v2579 = vld [vmem:[%s2569 + $0x38] sm:$0xf]
        %v2580 = vld [vmem:[%s2569 + $0x3c] sm:$0xff]
        %v2581 = vld [vmem:[%s2569 + $0x44] sm:$0xf]
        %v2582 = vld [vmem:[%s2569 + $0x48] sm:$0xff]
        %v2583 = vld [vmem:[%s2569 + $0x50] sm:$0xf]
        %v2584 = vld [vmem:[%s2569 + $0x54] sm:$0xff]
        %v2585 = vld [vmem:[%s2569 + $0x5c] sm:$0xf]
        %v2586 = vld [vmem:[%s2569 + $0x60] sm:$0xff]
        %v2587 = vld [vmem:[%s2569 + $0x68] sm:$0xf]
        %v2588 = vld [vmem:[%s2569 + $0x6c] sm:$0xff]
        %v2589 = vld [vmem:[%s2569 + $0x74] sm:$0xf]
        %v2590 = vld [vmem:[%s2569 + $0x78] sm:$0xff]
        %v2591 = vld [vmem:[%s2569 + $0x80] sm:$0xf]
        %v2592 = vld [vmem:[%s2569 + $0x84] sm:$0xff]
        %v2593 = vld [vmem:[%s2569 + $0x8c] sm:$0xf]
        %v2594 = vld [vmem:[%s2569 + $0x90] sm:$0xff]
        %v2595 = vld [vmem:[%s2569 + $0x98] sm:$0xf]
        %v2596 = vld [vmem:[%s2569 + $0x9c] sm:$0xff]
        %v2597 = vld [vmem:[%s2569 + $0xa4] sm:$0xf]
        %v2598 = vld [vmem:[%s2569 + $0xa8] sm:$0xff]
        %v2599 = vld [vmem:[%s2569 + $0xb0] sm:$0xf]
        %v2600 = vld [vmem:[%s2569 + $0xb4] sm:$0xff]
        %v2601 = vld [vmem:[%s2569 + $0xbc] sm:$0xf]
        %v2602 = vpack.c.bf16 %v2568, %v2568
        %v2635 = vunpack.c.l.b16 %v2570
        %v2636 = vunpack.c.h.b16 %v2570
        %v2637 = vunpack.c.l.b16 %v2571
        %v2638 = vunpack.c.l.b16 %v2572
        %v2639 = vunpack.c.h.b16 %v2572
        %v2640 = vunpack.c.l.b16 %v2573
        %v2641 = vunpack.c.l.b16 %v2574
        %v2642 = vunpack.c.h.b16 %v2574
        %v2643 = vunpack.c.l.b16 %v2575
        %v2644 = vunpack.c.l.b16 %v2576
        %v2645 = vunpack.c.h.b16 %v2576
        %v2646 = vunpack.c.l.b16 %v2577
        %v2647 = vunpack.c.l.b16 %v2578
        %v2648 = vunpack.c.h.b16 %v2578
        %v2649 = vunpack.c.l.b16 %v2579
        %v2650 = vunpack.c.l.b16 %v2580
        %v2651 = vunpack.c.h.b16 %v2580
        %v2652 = vunpack.c.l.b16 %v2581
        %v2653 = vunpack.c.l.b16 %v2582
        %v2654 = vunpack.c.h.b16 %v2582
        %v2655 = vunpack.c.l.b16 %v2583
        %v2656 = vunpack.c.l.b16 %v2584
        %v2657 = vunpack.c.h.b16 %v2584
        %v2658 = vunpack.c.l.b16 %v2585
        %v2659 = vunpack.c.l.b16 %v2586
        %v2660 = vunpack.c.h.b16 %v2586
        %v2661 = vunpack.c.l.b16 %v2587
        %v2662 = vunpack.c.l.b16 %v2588
        %v2663 = vunpack.c.h.b16 %v2588
        %v2664 = vunpack.c.l.b16 %v2589
        %v2665 = vunpack.c.l.b16 %v2590
        %v2666 = vunpack.c.h.b16 %v2590
        %v2667 = vunpack.c.l.b16 %v2591
        %v2668 = vunpack.c.l.b16 %v2592
        %v2669 = vunpack.c.h.b16 %v2592
        %v2670 = vunpack.c.l.b16 %v2593
        %v2671 = vunpack.c.l.b16 %v2594
        %v2672 = vunpack.c.h.b16 %v2594
        %v2673 = vunpack.c.l.b16 %v2595
        %v2674 = vunpack.c.l.b16 %v2596
        %v2675 = vunpack.c.h.b16 %v2596
        %v2676 = vunpack.c.l.b16 %v2597
        %v2677 = vunpack.c.l.b16 %v2598
        %v2678 = vunpack.c.h.b16 %v2598
        %v2679 = vunpack.c.l.b16 %v2599
        %v2680 = vunpack.c.l.b16 %v2600
        %v2681 = vunpack.c.h.b16 %v2600
        %v2682 = vunpack.c.l.b16 %v2601
        %v2683 = vpack.c.b16 %v2638, %v2635
        %v2684 = vpack.c.b16 %v2639, %v2636
        %v2685 = vpack.c.b16 %v2640, %v2637
        %v2686 = vpack.c.b16 %v2644, %v2641
        %v2687 = vpack.c.b16 %v2645, %v2642
        %v2688 = vpack.c.b16 %v2646, %v2643
        %v2689 = vpack.c.b16 %v2650, %v2647
        %v2690 = vpack.c.b16 %v2651, %v2648
        %v2691 = vpack.c.b16 %v2652, %v2649
        %v2692 = vpack.c.b16 %v2656, %v2653
        %v2693 = vpack.c.b16 %v2657, %v2654
        %v2694 = vpack.c.b16 %v2658, %v2655
        %v2695 = vpack.c.b16 %v2662, %v2659
        %v2696 = vpack.c.b16 %v2663, %v2660
        %v2697 = vpack.c.b16 %v2664, %v2661
        %v2698 = vpack.c.b16 %v2668, %v2665
        %v2699 = vpack.c.b16 %v2669, %v2666
        %v2700 = vpack.c.b16 %v2670, %v2667
        %v2701 = vpack.c.b16 %v2674, %v2671
        %v2702 = vpack.c.b16 %v2675, %v2672
        %v2703 = vpack.c.b16 %v2676, %v2673
        %v2704 = vpack.c.b16 %v2680, %v2677
        %v2705 = vpack.c.b16 %v2681, %v2678
        %v2706 = vpack.c.b16 %v2682, %v2679
        %2731 = vmatprep.subr.bf16.mxu0 %v2684
        %2732 = vmatpush1.bf16.msra.mxu0 %v2683
        %2733 = vmatprep.subr.bf16.mxu0 %v2687
        %2734 = vmatpush1.bf16.msra.mxu0 %v2686
        %2735 = vmatprep.subr.bf16.mxu0 %v2690
        %2736 = vmatpush1.bf16.msra.mxu0 %v2689
        %2737 = vmatprep.subr.bf16.mxu0 %v2693
        %2738 = vmatpush1.bf16.msra.mxu0 %v2692
        %2739 = vmatprep.subr.bf16.mxu0 %v2696
        %2740 = vmatpush1.bf16.msra.mxu0 %v2695
        %2741 = vmatprep.subr.bf16.mxu0 %v2699
        %2742 = vmatpush1.bf16.msra.mxu0 %v2698
        %2743 = vmatprep.subr.bf16.mxu0 %v2702
        %2744 = vmatpush1.bf16.msra.mxu0 %v2701
        %2745 = vmatprep.subr.bf16.mxu0 %v2705
        %2746 = vmatpush1.bf16.msra.mxu0 %v2704
        %2747 = vmatprep.subr.bf16.mxu0 0
        %2748 = vmatpush1.bf16.msra.mxu0 0
        %2749 = vmatprep.subr.bf16.mxu0 0
        %2750 = vmatpush1.bf16.msra.mxu0 0
        %2751 = vmatprep.subr.bf16.mxu0 0
        %2752 = vmatpush1.bf16.msra.mxu0 0
        %2753 = vmatprep.subr.bf16.mxu0 0
        %2754 = vmatpush1.bf16.msra.mxu0 0
        %2755 = vmatprep.subr.bf16.mxu0 0
        %2756 = vmatpush1.bf16.msra.mxu0 0
        %2757 = vmatprep.subr.bf16.mxu0 0
        %2758 = vmatpush1.bf16.msra.mxu0 0
        %2759 = vmatprep.subr.bf16.mxu0 0
        %2760 = vmatpush1.bf16.msra.mxu0 0
        %2761 = vmatprep.subr.bf16.mxu0 0
        %2762 = vmatpush1.bf16.msra.mxu0 0
        %2763 = vmatprep.mubr.bf16.mxu0 0
        %2764 = vmatmul.mubr.bf16.gmra.mrb[0].mxu0 %v2602
        %v2765 = vpop.f32.mrb[0].mxu0
        %v2766 = vadd.f32 0.0, %v2765
        %v2767 = vpop.f32.mrb[0].mxu0
        %v2768 = vadd.f32 0.0, %v2767
        %v2769 = vpop.f32.mrb[0].mxu0
        %v2770 = vpop.f32.mrb[0].mxu0
        %2771 = vdwg.mxu0
        %2772 = vmatprep.subr.bf16.mxu0 0
        %2773 = vmatpush1.bf16.msra.mxu0 %v2685
        %2774 = vmatprep.subr.bf16.mxu0 0
        %2775 = vmatpush1.bf16.msra.mxu0 %v2688
        %2776 = vmatprep.subr.bf16.mxu0 0
        %2777 = vmatpush1.bf16.msra.mxu0 %v2691
        %2778 = vmatprep.subr.bf16.mxu0 0
        %2779 = vmatpush1.bf16.msra.mxu0 %v2694
        %2780 = vmatprep.subr.bf16.mxu0 0
        %2781 = vmatpush1.bf16.msra.mxu0 %v2697
        %2782 = vmatprep.subr.bf16.mxu0 0
        %2783 = vmatpush1.bf16.msra.mxu0 %v2700
        %2784 = vmatprep.subr.bf16.mxu0 0
        %2785 = vmatpush1.bf16.msra.mxu0 %v2703
        %2786 = vmatprep.subr.bf16.mxu0 0
        %2787 = vmatpush1.bf16.msra.mxu0 %v2706
        %2788 = vmatprep.subr.bf16.mxu0 0
        %2789 = vmatpush1.bf16.msra.mxu0 0
        %2790 = vmatprep.subr.bf16.mxu0 0
        %2791 = vmatpush1.bf16.msra.mxu0 0
        %2792 = vmatprep.subr.bf16.mxu0 0
        %2793 = vmatpush1.bf16.msra.mxu0 0
        %2794 = vmatprep.subr.bf16.mxu0 0
        %2795 = vmatpush1.bf16.msra.mxu0 0
        %2796 = vmatprep.subr.bf16.mxu0 0
        %2797 = vmatpush1.bf16.msra.mxu0 0
        %2798 = vmatprep.subr.bf16.mxu0 0
        %2799 = vmatpush1.bf16.msra.mxu0 0
        %2800 = vmatprep.subr.bf16.mxu0 0
        %2801 = vmatpush1.bf16.msra.mxu0 0
        %2802 = vmatprep.subr.bf16.mxu0 0
        %2803 = vmatpush1.bf16.msra.mxu0 0
        %2804 = vmatprep.mubr.bf16.mxu0 0
        %2805 = vmatmul.mubr.bf16.gmra.mrb[0].mxu0 %v2602
        %v2806 = vpop.f32.mrb[0].mxu0
        %v2807 = vadd.f32 0.0, %v2806
        %v2808 = vpop.f32.mrb[0].mxu0
        %v2809 = vpop.f32.mrb[0].mxu0
        %v2810 = vpop.f32.mrb[0].mxu0
        %2811 = vdwg.mxu0
        %v2812 = vpack.c.bf16 %v2766, %v2766
        %v2813 = vpack.c.bf16 %v2768, %v2768
        %v2814 = vpack.c.bf16 %v2807, %v2807
        %s2815 = scalar_lea.vmem %s1, 72
        %v2816 = vld [vmem:[%s2815] sm:$0xf]
        %v2817 = vld [vmem:[%s2815 + $0x4] sm:$0xf]
        %s2818 = scalar_lea.vmem %s1, 80
        %v2819 = vld [vmem:[%s2818] sm:$0xf]
        %v2820 = vld [vmem:[%s2818 + $0x4] sm:$0xf]
        %v2823 = vunpack.c.l.b16 %v2819
        %v2824 = vunpack.c.l.b16 %v2820
        %v2825 = vpack.c.b16 %v2824, %v2823
        %v2827 = vsel %vm919, %v2825, 0
        %v2830 = vsel %vm923, %v2813, 0
        %2832 = vmatprep.subr.bf16.mxu0 0
        %2833 = vmatpush1.bf16.msra.mxu0 %v2830
        %2834 = vmatprep.subr.bf16.mxu0 0
        %2835 = vmatpush1.bf16.msra.mxu0 0
        %2836 = vmatprep.subr.bf16.mxu0 0
        %2837 = vmatpush1.bf16.msra.mxu0 0
        %2838 = vmatprep.subr.bf16.mxu0 0
        %2839 = vmatpush1.bf16.msra.mxu0 0
        %2840 = vmatprep.subr.bf16.mxu0 0
        %2841 = vmatpush1.bf16.msra.mxu0 0
        %2842 = vmatprep.subr.bf16.mxu0 0
        %2843 = vmatpush1.bf16.msra.mxu0 0
        %2844 = vmatprep.subr.bf16.mxu0 0
        %2845 = vmatpush1.bf16.msra.mxu0 0
        %2846 = vmatprep.subr.bf16.mxu0 0
        %2847 = vmatpush1.bf16.msra.mxu0 0
        %2848 = vmatprep.subr.bf16.mxu0 0
        %2849 = vmatpush1.bf16.msra.mxu0 0
        %2850 = vmatprep.subr.bf16.mxu0 0
        %2851 = vmatpush1.bf16.msra.mxu0 0
        %2852 = vmatprep.subr.bf16.mxu0 0
        %2853 = vmatpush1.bf16.msra.mxu0 0
        %2854 = vmatprep.subr.bf16.mxu0 0
        %2855 = vmatpush1.bf16.msra.mxu0 0
        %2856 = vmatprep.subr.bf16.mxu0 0
        %2857 = vmatpush1.bf16.msra.mxu0 0
        %2858 = vmatprep.subr.bf16.mxu0 0
        %2859 = vmatpush1.bf16.msra.mxu0 0
        %2860 = vmatprep.subr.bf16.mxu0 0
        %2861 = vmatpush1.bf16.msra.mxu0 0
        %2862 = vmatprep.subr.bf16.mxu0 0
        %2863 = vmatpush1.bf16.msra.mxu0 0
        %2864 = vmatprep.mubr.bf16.mxu0 0
        %2865 = vmatmul.mubr.bf16.gmra.mrb[0].mxu0 %v2827
        %v2866 = vpop.f32.mrb[0].mxu0
        %v2867 = vadd.f32 0.0, %v2866
        %v2868 = vpop.f32.mrb[0].mxu0
        %v2869 = vpop.f32.mrb[0].mxu0
        %v2870 = vadd.f32 0.0, %v2869
        %v2871 = vpop.f32.mrb[0].mxu0
        %2872 = vdwg.mxu0
        %v2875 = vunpack.c.l.b16 %v2816
        %v2876 = vunpack.c.l.b16 %v2817
        %v2877 = vpack.c.b16 %v2876, %v2875
        %v2879 = vsel %vm919, %v2877, 0
        %v2882 = vsel %vm923, %v2812, 0
        %2884 = vmatprep.subr.bf16.mxu0 0
        %2885 = vmatpush1.bf16.msra.mxu0 %v2882
        %2886 = vmatprep.subr.bf16.mxu0 0
        %2887 = vmatpush1.bf16.msra.mxu0 0
        %2888 = vmatprep.subr.bf16.mxu0 0
        %2889 = vmatpush1.bf16.msra.mxu0 0
        %2890 = vmatprep.subr.bf16.mxu0 0
        %2891 = vmatpush1.bf16.msra.mxu0 0
        %2892 = vmatprep.subr.bf16.mxu0 0
        %2893 = vmatpush1.bf16.msra.mxu0 0
        %2894 = vmatprep.subr.bf16.mxu0 0
        %2895 = vmatpush1.bf16.msra.mxu0 0
        %2896 = vmatprep.subr.bf16.mxu0 0
        %2897 = vmatpush1.bf16.msra.mxu0 0
        %2898 = vmatprep.subr.bf16.mxu0 0
        %2899 = vmatpush1.bf16.msra.mxu0 0
        %2900 = vmatprep.subr.bf16.mxu0 0
        %2901 = vmatpush1.bf16.msra.mxu0 0
        %2902 = vmatprep.subr.bf16.mxu0 0
        %2903 = vmatpush1.bf16.msra.mxu0 0
        %2904 = vmatprep.subr.bf16.mxu0 0
        %2905 = vmatpush1.bf16.msra.mxu0 0
        %2906 = vmatprep.subr.bf16.mxu0 0
        %2907 = vmatpush1.bf16.msra.mxu0 0
        %2908 = vmatprep.subr.bf16.mxu0 0
        %2909 = vmatpush1.bf16.msra.mxu0 0
        %2910 = vmatprep.subr.bf16.mxu0 0
        %2911 = vmatpush1.bf16.msra.mxu0 0
        %2912 = vmatprep.subr.bf16.mxu0 0
        %2913 = vmatpush1.bf16.msra.mxu0 0
        %2914 = vmatprep.subr.bf16.mxu0 0
        %2915 = vmatpush1.bf16.msra.mxu0 0
        %2916 = vmatprep.mubr.bf16.mxu0 0
        %2917 = vmatmul.mubr.bf16.gmra.mrb[0].mxu0 %v2879
        %v2918 = vpop.f32.mrb[0].mxu0
        %v2919 = vadd.f32 %v2867, %v2918
        %v2920 = vpop.f32.mrb[0].mxu0
        %v2921 = vpop.f32.mrb[0].mxu0
        %v2922 = vadd.f32 %v2870, %v2921
        %v2923 = vpop.f32.mrb[0].mxu0
        %2924 = vdwg.mxu0
        %s2925 = scalar_lea.vmem %s1, 88
        %v2926 = vld [vmem:[%s2925] sm:$0xf]
        %v2927 = vld [vmem:[%s2925 + $0x4] sm:$0xf]
        %v2930 = vunpack.c.l.b16 %v2926
        %v2931 = vunpack.c.l.b16 %v2927
        %v2932 = vpack.c.b16 %v2931, %v2930
        %v2934 = vsel %vm919, %v2932, 0
        %v2937 = vsel %vm923, %v2814, 0
        %2939 = vmatprep.subr.bf16.mxu0 0
        %2940 = vmatpush1.bf16.msra.mxu0 %v2937
        %2941 = vmatprep.subr.bf16.mxu0 0
        %2942 = vmatpush1.bf16.msra.mxu0 0
        %2943 = vmatprep.subr.bf16.mxu0 0
        %2944 = vmatpush1.bf16.msra.mxu0 0
        %2945 = vmatprep.subr.bf16.mxu0 0
        %2946 = vmatpush1.bf16.msra.mxu0 0
        %2947 = vmatprep.subr.bf16.mxu0 0
        %2948 = vmatpush1.bf16.msra.mxu0 0
        %2949 = vmatprep.subr.bf16.mxu0 0
        %2950 = vmatpush1.bf16.msra.mxu0 0
        %2951 = vmatprep.subr.bf16.mxu0 0
        %2952 = vmatpush1.bf16.msra.mxu0 0
        %2953 = vmatprep.subr.bf16.mxu0 0
        %2954 = vmatpush1.bf16.msra.mxu0 0
        %2955 = vmatprep.subr.bf16.mxu0 0
        %2956 = vmatpush1.bf16.msra.mxu0 0
        %2957 = vmatprep.subr.bf16.mxu0 0
        %2958 = vmatpush1.bf16.msra.mxu0 0
        %2959 = vmatprep.subr.bf16.mxu0 0
        %2960 = vmatpush1.bf16.msra.mxu0 0
        %2961 = vmatprep.subr.bf16.mxu0 0
        %2962 = vmatpush1.bf16.msra.mxu0 0
        %2963 = vmatprep.subr.bf16.mxu0 0
        %2964 = vmatpush1.bf16.msra.mxu0 0
        %2965 = vmatprep.subr.bf16.mxu0 0
        %2966 = vmatpush1.bf16.msra.mxu0 0
        %2967 = vmatprep.subr.bf16.mxu0 0
        %2968 = vmatpush1.bf16.msra.mxu0 0
        %2969 = vmatprep.subr.bf16.mxu0 0
        %2970 = vmatpush1.bf16.msra.mxu0 0
        %2971 = vmatprep.mubr.bf16.mxu0 0
        %2972 = vmatmul.mubr.bf16.gmra.mrb[0].mxu0 %v2934
        %v2973 = vpop.f32.mrb[0].mxu0
        %v2974 = vadd.f32 0.0, %v2973
        %v2975 = vpop.f32.mrb[0].mxu0
        %v2976 = vpop.f32.mrb[0].mxu0
        %v2977 = vadd.f32 0.0, %v2976
        %v2978 = vpop.f32.mrb[0].mxu0
        %2979 = vdwg.mxu0
        %v2980 = vadd.f32 %v2919, %v2974
        %v2981 = vadd.f32 %v2922, %v2977
        %v2982 = vld [vmem:[%s3 + $0x3] ss:$0 sm:$0xff]
        %v2983 = vadd.f32 %v2980, %v2982
        %v2984 = vadd.f32 %v2981, %v2982
        %v2985 = vmul.f32 %v2983, 0.5
        %v2986 = vmul.f32 %v2984, 0.5
        %v2987 = vtanh.pop %v2985
        %v2988 = vtanh.pop %v2986
        %v2989 = vadd.f32 %v2987, 1.0
        %v2990 = vadd.f32 %v2988, 1.0
        %v2991 = vmul.f32 %v2989, 0.5
        %v2992 = vmul.f32 %v2990, 0.5
        %2993 = vst.msk [vmem:[%s347] sm:$0xff] %vm439, %v2991
        %2994 = vst.msk [vmem:[%s347 + $0x8] sm:$0xff] %vm439, %v2992
        %p2995 = scmp.lt.s32.totalorder %s22, 1
        %s2996 = scalar_select %p2995, %s22, 1
        %s2997 = smul.addr %s2996, 2
        %s2998 = smul.addr %s2997, 8
        %s2999 = scalar_lea.vmem %s6, %s2998
        %p3000 = scmp.lt.s32.totalorder %s22, 1
        %s3001 = scalar_select %p3000, %s22, 1
        %s3002 = smul.addr %s3001, 4
        %s3003 = scalar_lea.vmem %s7, %s3002
        %p3004 = scmp.lt.s32.totalorder %s22, 1
        %s3005 = scalar_select %p3004, %s22, 1
        %s3006 = scalar_lea.vmem %s8, %s3005
        // Predicated region
        $region53: #{ae_flow_forward.1} parent=43 // pred_check
          %p3007 = pneg %p171
        $region54: #{ae_flow_forward.1} parent=43 // pred_check_branch
          %3009 = sbr.rel (%p3007) target = $region56
        $region55: #{ae_flow_forward.1} parent=43 // pred_region
          _
        $region56: #{ae_flow_forward.1} parent=43 // pred_fallthru
          _
        // Predicated region
        $region57: #{ae_flow_forward.1} parent=43 // pred_check
          %p3010 = pneg %p197
        $region58: #{ae_flow_forward.1} parent=43 // pred_check_branch
          %3012 = sbr.rel (%p3010) target = $region60
        $region59: #{ae_flow_forward.1} parent=43 // pred_region
          _
        $region60: #{ae_flow_forward.1} parent=43 // pred_fallthru
          _
        // Predicated region
        $region61: #{ae_flow_forward.1} parent=43 // pred_check
          %p3013 = pneg %p223
        $region62: #{ae_flow_forward.1} parent=43 // pred_check_branch
          %3015 = sbr.rel (%p3013) target = $region64
        $region63: #{ae_flow_forward.1} parent=43 // pred_region
          _
        $region64: #{ae_flow_forward.1} parent=43 // pred_fallthru
          _
      $region44: #{ae_flow_forward.1} parent=5 // pred_fallthru
        _
      %p3016 = scmp.le.s32.totalorder 2, %s17
      // Predicated region
      $region65: #{ae_flow_forward.1} parent=5 // pred_check
        %p3017 = pneg %p3016
      $region66: #{ae_flow_forward.1} parent=5 // pred_check_branch
        %3019 = sbr.rel (%p3017) target = $region68
      $region67: #{ae_flow_forward.1} parent=5 // pred_region
        %s3020 = ssub.s32 %s17, 2
        // Predicated region
        $region69: #{ae_flow_forward.1} parent=67 // pred_check
          %p3021 = pneg %p177
        $region70: #{ae_flow_forward.1} parent=67 // pred_check_branch
          %3023 = sbr.rel (%p3021) target = $region72
        $region71: #{ae_flow_forward.1} parent=67 // pred_region
          %p3024 = scmp.lt.s32.totalorder %s23, 1
          %s3025 = scalar_select %p3024, %s23, 1
          %s3026 = smul.addr %s3025, 2
          %s3027 = smul.addr %s3026, 8
          %s3028 = scalar_lea.vmem %s6, %s3027
        $region72: #{ae_flow_forward.1} parent=67 // pred_fallthru
          _
        // Predicated region
        $region73: #{ae_flow_forward.1} parent=67 // pred_check
          %p3029 = pneg %p203
        $region74: #{ae_flow_forward.1} parent=67 // pred_check_branch
          %3031 = sbr.rel (%p3029) target = $region76
        $region75: #{ae_flow_forward.1} parent=67 // pred_region
          %p3032 = scmp.lt.s32.totalorder %s23, 1
          %s3033 = scalar_select %p3032, %s23, 1
          %s3034 = smul.addr %s3033, 4
          %s3035 = scalar_lea.vmem %s7, %s3034
        $region76: #{ae_flow_forward.1} parent=67 // pred_fallthru
          _
        // Predicated region
        $region77: #{ae_flow_forward.1} parent=67 // pred_check
          %p3036 = pneg %p229
        $region78: #{ae_flow_forward.1} parent=67 // pred_check_branch
          %3038 = sbr.rel (%p3036) target = $region80
        $region79: #{ae_flow_forward.1} parent=67 // pred_region
          %p3039 = scmp.lt.s32.totalorder %s23, 1
          %s3040 = scalar_select %p3039, %s23, 1
          %s3041 = scalar_lea.vmem %s8, %s3040
        $region80: #{ae_flow_forward.1} parent=67 // pred_fallthru
          _
      $region68: #{ae_flow_forward.1} parent=5 // pred_fallthru
        _
    $region6: #{ae_flow_forward.1} parent=1 // loop_footer
      %s21 = sadd.s32 1, %s17
    $region7: #{ae_flow_forward.1} parent=1 // loop_footer_branch
      %16 = sbr.rel target = $region3
    $region8: #{ae_flow_forward.1} parent=1 // loop_exit
      _
    %3042 = vsyncpa [#allocation3], 1
    %s3043 = scalar_lea.sflag [#allocation3], 1
    %3044 = vsyncpa %s3043, 1
    %3045 = vsyncpa [#allocation5], 1

</llo_original>
